<compile_context>
chip_gen: v7x
topology: tpu7x:2x2x1
jax: 0.10.0
libtpu: 0.0.40
codegen_flags: <defaults>
</compile_context>

<pallas_src>
import jax
import jax.numpy as jnp
import numpy as np
from jax.experimental import pallas as pl
from jax.experimental.pallas import tpu as pltpu

LANE = 128


# ----------------------------- Pallas kernel ------------------------------- #
def make_convgru_kernel(seq_len, batch, hidden_sizes, offsets, lane=LANE):
    n_layers = len(hidden_sizes)

    def kernel(x_ref, slab_ref, out_ref):
        # Static slab reads (row offsets are 8-aligned by construction).
        def rd(name):
            off, r, _ = offsets[name]
            return slab_ref[pl.ds(off, r), :]          # full 128-lane read

        # Hoist all weight loads / bias broadcasts out of the unrolled loop.
        Wx = [rd(f"wx{l}") for l in range(n_layers)]                 # (in,128)
        Wh = [rd(f"wh{l}") for l in range(n_layers)]                 # (H, 128)
        Woh = [rd(f"woh{l}")[:, :hidden_sizes[l]]                    # (H, H)
               for l in range(n_layers)]
        b3 = [rd(f"b{l}") for l in range(n_layers)]                  # (1, 128)
        b3b = [jnp.broadcast_to(b3[l], (batch, lane))
               for l in range(n_layers)]
        Wfc = rd("wfc")                                              # (H, 128)
        bfc = rd("bfc")                                              # (1, 128)

        # Layer-0 input projection hoisted out of the recurrence:
        # one (S*B, I) x (I, 128) matmul + bias, done once.
        gx0_all = (jnp.dot(x_ref[...], Wx[0],
                           preferred_element_type=jnp.float32)
                   + jnp.broadcast_to(b3[0], (seq_len * batch, lane)))

        def cell(l, gx, h_prev):
            H = hidden_sizes[l]
            g = gx + jnp.dot(h_prev, Wh[l],
                             preferred_element_type=jnp.float32)
            # Fused sigmoid over the contiguous [reset | update] lanes.
            s = jax.nn.sigmoid(g[:, 0:2 * H])
            r = s[:, 0:H]            # lanes 0:H -> no rotate before h_prev*r
            z = s[:, H:2 * H]        # rotate off the critical path
            n = jnp.tanh(g[:, 2 * H:3 * H]
                         + jnp.dot(h_prev * r, Woh[l],
                                   preferred_element_type=jnp.float32))
            # new_state = h*(1 - update) + out_inputs*update
            return h_prev * (1.0 - z) + n * z

        # Wavefront schedule (1-step software pipeline across layers).
        # Descending layer order per wave => layer l reads layer l-1's output
        # from the previous wave; same dataflow as the sequential loop.
        hs = [jnp.zeros((batch, hidden_sizes[l]), jnp.float32)
              for l in range(n_layers)]
        for wave in range(seq_len + n_layers - 1):
            for l in reversed(range(n_layers)):
                t = wave - l
                if 0 <= t < seq_len:
                    if l == 0:
                        gx = gx0_all[t * batch:(t + 1) * batch, :]
                    else:
                        gx = (jnp.dot(hs[l - 1], Wx[l],
                                      preferred_element_type=jnp.float32)
                              + b3b[l])
                    hs[l] = cell(l, gx, hs[l])

        # fc(final hidden of last layer); 128-lane-dense output store.
        out_ref[...] = (jnp.dot(hs[-1], Wfc,
                                preferred_element_type=jnp.float32)
                        + jnp.broadcast_to(bfc, (batch, lane)))

    return kernel


def convgru_classifier_pallas(x, slab, offsets, hidden_sizes, output_size):
    """x: (B, S, I) float32. Returns (B, output_size) float32."""
    B, S, I = x.shape
    R = slab.shape[0]

    # Time-major, flattened to (S*B, I) so the layer-0 projection is one dot.
    x2d = jnp.transpose(x, (1, 0, 2)).reshape(S * B, I)

    kernel = make_convgru_kernel(S, B, hidden_sizes, offsets)
    out_pad = pl.pallas_call(
        kernel,
        out_shape=jax.ShapeDtypeStruct((B, LANE), jnp.float32),
        grid_spec=pltpu.PrefetchScalarGridSpec(
            num_scalar_prefetch=0,
            grid=(1,),  # single invocation; recurrence runs in-kernel
            in_specs=[pl.BlockSpec((S * B, I), lambda i: (0, 0)),
                      pl.BlockSpec((R, LANE), lambda i: (0, 0))],
            out_specs=pl.BlockSpec((B, LANE), lambda i: (0, 0)),
        ),
        compiler_params=pltpu.CompilerParams(
            dimension_semantics=("arbitrary",)),
    )(x2d, slab)
    return out_pad[:, :output_size]


# -------------------------- pure-JAX reference ----------------------------- #
def convgru_classifier_ref(x, layer_params_torch, Wfc, bfc, hidden_sizes):
    B, S, I = x.shape
    n_layers = len(hidden_sizes)
    hs = [jnp.zeros((B, h), jnp.float32) for h in hidden_sizes]
    for t in range(S):
        inp = x[:, t, :]
        for l in range(n_layers):
            Wr, Wu, Wo, br, bu, bo = layer_params_torch[l]
            stacked = jnp.concatenate([inp, hs[l]], axis=1)
            z = jax.nn.sigmoid(stacked @ Wu.T + bu)
            r = jax.nn.sigmoid(stacked @ Wr.T + br)
            stacked2 = jnp.concatenate([inp, hs[l] * r], axis=1)
            n = jnp.tanh(stacked2 @ Wo.T + bo)
            hs[l] = hs[l] * (1.0 - z) + n * z
            inp = hs[l]
    return hs[-1] @ Wfc.T + bfc


# ------------------------------ param setup -------------------------------- #
def init_params(key, input_size, hidden_sizes, output_size):
    """Deterministic synthetic init mirroring the module's parameter shapes.

    Returns torch-convention params (for the reference), a single packed
    weight slab (rows, 128) for the kernel, and its static offset table.
    """
    n_layers = len(hidden_sizes)
    layer_params_torch = []
    blocks = []     # list of np arrays, each (rows_padded_to_8, LANE)
    offsets = {}    # name -> (row_offset, rows, cols); offsets are 8-aligned

    def add(name, a):
        a = np.asarray(a, np.float32)
        r, c = a.shape
        rp = ((r + 7) // 8) * 8
        blk = np.zeros((rp, LANE), np.float32)
        blk[:r, :c] = a
        off = sum(b.shape[0] for b in blocks)
        blocks.append(blk)
        offsets[name] = (off, r, c)

    for l in range(n_layers):
        in_dim = input_size if l == 0 else hidden_sizes[l - 1]
        H = hidden_sizes[l]
        k = jax.random.fold_in(key, l)
        kr, ku, ko = jax.random.split(k, 3)
        Wr = 0.2 * jax.random.normal(kr, (H, in_dim + H), jnp.float32)
        Wu = 0.2 * jax.random.normal(ku, (H, in_dim + H), jnp.float32)
        Wo = 0.2 * jax.random.normal(ko, (H, in_dim + H), jnp.float32)
        br = jnp.zeros((H,), jnp.float32)  # init.constant_(bias, 0.)
        bu = jnp.zeros((H,), jnp.float32)
        bo = jnp.zeros((H,), jnp.float32)
        layer_params_torch.append((Wr, Wu, Wo, br, bu, bo))

        # Fused gate layout [reset | update | out_x]: reset in lanes 0:H.
        w_x3 = jnp.concatenate([Wr[:, :in_dim].T, Wu[:, :in_dim].T,
                                Wo[:, :in_dim].T], axis=1)          # (in, 3H)
        w_h3 = jnp.concatenate([Wr[:, in_dim:].T, Wu[:, in_dim:].T,
                                jnp.zeros((H, H), jnp.float32)], axis=1)
        b3 = jnp.concatenate([br, bu, bo]).reshape(1, 3 * H)
        w_oh = Wo[:, in_dim:].T                                     # (H, H)

        add(f"wx{l}", w_x3)
        add(f"wh{l}", w_h3)
        add(f"b{l}", b3)
        add(f"woh{l}", w_oh)

    kfc_w, kfc_b = jax.random.split(jax.random.fold_in(key, 1000))
    Wfc = 0.2 * jax.random.normal(kfc_w, (output_size, hidden_sizes[-1]),
                                  jnp.float32)
    bfc = 0.1 * jax.random.normal(kfc_b, (output_size,), jnp.float32)
    add("wfc", Wfc.T)                       # (H_last, O) padded to 128 lanes
    add("bfc", bfc.reshape(1, output_size))

    slab = jnp.asarray(np.concatenate(blocks, axis=0))
    return layer_params_torch, slab, offsets, Wfc, bfc


# ---------------------------------- main ----------------------------------- #
if __name__ == "__main__":
    B, S, I = 2, 8, 4
    hidden_sizes = [32, 32]
    O = 4

    key = jax.random.PRNGKey(0)
    kx, kp = jax.random.split(key)
    x = jax.random.normal(kx, (B, S, I), jnp.float32)

    lp_torch, slab, offsets, Wfc, bfc = init_params(kp, I, hidden_sizes, O)

    out = convgru_classifier_pallas(x, slab, offsets, hidden_sizes, O)
    out = jax.block_until_ready(out)

    ref = convgru_classifier_ref(x, lp_torch, Wfc, bfc, hidden_sizes)
    np.testing.assert_allclose(np.asarray(out), np.asarray(ref),
                               rtol=1e-5, atol=1e-5)

    print("KERNEL_OK")
</pallas_src>

<mosaic_0001>
module attributes {stable_mosaic.version = 11 : i64} {
  func.func @kernel(%arg0: i32, %arg1: memref<16x4xf32, #tpu.memory_space<vmem>>, %arg2: memref<224x128xf32, #tpu.memory_space<vmem>>, %arg3: memref<2x128xf32, #tpu.memory_space<vmem>>) attributes {dimension_semantics = [#tpu.dimension_semantics<arbitrary>], iteration_bounds = array<i64: 1>, scalar_prefetch = 0 : i64, scratch_operands = 0 : i64, tpu.core_type = #tpu.core_type<tc>, window_params = [{pipeline_mode = #tpu.pipeline_mode<synchronous>, transform_indices = @transform_0, window_bounds = array<i64: 16, 4>}, {pipeline_mode = #tpu.pipeline_mode<synchronous>, transform_indices = @transform_1, window_bounds = array<i64: 224, 128>}, {pipeline_mode = #tpu.pipeline_mode<synchronous>, transform_indices = @transform_2, window_bounds = array<i64: 2, 128>}]} {
    %c0 = arith.constant 0 : index
    %c0_0 = arith.constant 0 : index
    %0 = vector.load %arg2[%c0, %c0_0] : memref<224x128xf32, #tpu.memory_space<vmem>>, vector<4x128xf32>
    %c80 = arith.constant 80 : index
    %c0_1 = arith.constant 0 : index
    %1 = vector.load %arg2[%c80, %c0_1] : memref<224x128xf32, #tpu.memory_space<vmem>>, vector<32x128xf32>
    %c8 = arith.constant 8 : index
    %c0_2 = arith.constant 0 : index
    %2 = vector.load %arg2[%c8, %c0_2] : memref<224x128xf32, #tpu.memory_space<vmem>>, vector<32x128xf32>
    %c112 = arith.constant 112 : index
    %c0_3 = arith.constant 0 : index
    %3 = vector.load %arg2[%c112, %c0_3] : memref<224x128xf32, #tpu.memory_space<vmem>>, vector<32x128xf32>
    %c48 = arith.constant 48 : index
    %c0_4 = arith.constant 0 : index
    %4 = vector.load %arg2[%c48, %c0_4] : memref<224x128xf32, #tpu.memory_space<vmem>>, vector<32x128xf32>
    %5 = vector.extract_strided_slice %4 {offsets = [0, 0], sizes = [32, 32], strides = [1, 1]} : vector<32x128xf32> to vector<32x32xf32>
    %c152 = arith.constant 152 : index
    %c0_5 = arith.constant 0 : index
    %6 = vector.load %arg2[%c152, %c0_5] : memref<224x128xf32, #tpu.memory_space<vmem>>, vector<32x128xf32>
    %7 = vector.extract_strided_slice %6 {offsets = [0, 0], sizes = [32, 32], strides = [1, 1]} : vector<32x128xf32> to vector<32x32xf32>
    %c40 = arith.constant 40 : index
    %c0_6 = arith.constant 0 : index
    %8 = vector.load %arg2[%c40, %c0_6] : memref<224x128xf32, #tpu.memory_space<vmem>>, vector<1x128xf32>
    %c144 = arith.constant 144 : index
    %c0_7 = arith.constant 0 : index
    %9 = vector.load %arg2[%c144, %c0_7] : memref<224x128xf32, #tpu.memory_space<vmem>>, vector<1x128xf32>
    %10 = vector.shape_cast %9 : vector<1x128xf32> to vector<1x128xf32>
    %11 = vector.broadcast %10 : vector<1x128xf32> to vector<2x128xf32>
    %c184 = arith.constant 184 : index
    %c0_8 = arith.constant 0 : index
    %12 = vector.load %arg2[%c184, %c0_8] : memref<224x128xf32, #tpu.memory_space<vmem>>, vector<32x128xf32>
    %c216 = arith.constant 216 : index
    %c0_9 = arith.constant 0 : index
    %13 = vector.load %arg2[%c216, %c0_9] : memref<224x128xf32, #tpu.memory_space<vmem>>, vector<1x128xf32>
    %c0_10 = arith.constant 0 : index
    %c0_11 = arith.constant 0 : index
    %14 = vector.load %arg1[%c0_10, %c0_11] : memref<16x4xf32, #tpu.memory_space<vmem>>, vector<16x4xf32>
    %cst = arith.constant dense<0.000000e+00> : vector<16x128xf32>
    %15 = tpu.matmul %14, %0, %cst {dimension_numbers = #tpu.dot_dimension_numbers<[1], [0], [0], [1], [0, 0, 1, 1], [], []>} : vector<16x4xf32>, vector<4x128xf32>, vector<16x128xf32> -> vector<16x128xf32>
    %16 = vector.shape_cast %8 : vector<1x128xf32> to vector<1x128xf32>
    %17 = vector.broadcast %16 : vector<1x128xf32> to vector<16x128xf32>
    %18 = arith.addf %15, %17 : vector<16x128xf32>
    %cst_12 = arith.constant 0.000000e+00 : f32
    %19 = vector.broadcast %cst_12 : f32 to vector<2x32xf32>
    %cst_13 = arith.constant 0.000000e+00 : f32
    %20 = vector.broadcast %cst_13 : f32 to vector<2x32xf32>
    %21 = vector.extract_strided_slice %18 {offsets = [0, 0], sizes = [2, 128], strides = [1, 1]} : vector<16x128xf32> to vector<2x128xf32>
    %cst_14 = arith.constant dense<0.000000e+00> : vector<2x128xf32>
    %22 = tpu.matmul %19, %2, %cst_14 {dimension_numbers = #tpu.dot_dimension_numbers<[1], [0], [0], [1], [0, 0, 1, 1], [], []>} : vector<2x32xf32>, vector<32x128xf32>, vector<2x128xf32> -> vector<2x128xf32>
    %23 = arith.addf %21, %22 : vector<2x128xf32>
    %24 = vector.extract_strided_slice %23 {offsets = [0, 0], sizes = [2, 64], strides = [1, 1]} : vector<2x128xf32> to vector<2x64xf32>
    %25 = arith.negf %24 : vector<2x64xf32>
    %26 = math.exp %25 : vector<2x64xf32>
    %cst_15 = arith.constant 1.000000e+00 : f32
    %27 = vector.broadcast %cst_15 : f32 to vector<2x64xf32>
    %28 = arith.addf %27, %26 : vector<2x64xf32>
    %29 = arith.divf %27, %28 : vector<2x64xf32>
    %30 = vector.extract_strided_slice %29 {offsets = [0, 0], sizes = [2, 32], strides = [1, 1]} : vector<2x64xf32> to vector<2x32xf32>
    %31 = vector.extract_strided_slice %29 {offsets = [0, 32], sizes = [2, 32], strides = [1, 1]} : vector<2x64xf32> to vector<2x32xf32>
    %32 = vector.extract_strided_slice %23 {offsets = [0, 64], sizes = [2, 32], strides = [1, 1]} : vector<2x128xf32> to vector<2x32xf32>
    %33 = arith.mulf %19, %30 : vector<2x32xf32>
    %cst_16 = arith.constant dense<0.000000e+00> : vector<2x32xf32>
    %34 = tpu.matmul %33, %5, %cst_16 {dimension_numbers = #tpu.dot_dimension_numbers<[1], [0], [0], [1], [0, 0, 1, 1], [], []>} : vector<2x32xf32>, vector<32x32xf32>, vector<2x32xf32> -> vector<2x32xf32>
    %35 = arith.addf %32, %34 : vector<2x32xf32>
    %36 = math.tanh %35 : vector<2x32xf32>
    %cst_17 = arith.constant 1.000000e+00 : f32
    %37 = vector.broadcast %cst_17 : f32 to vector<2x32xf32>
    %38 = arith.subf %37, %31 : vector<2x32xf32>
    %39 = arith.mulf %19, %38 : vector<2x32xf32>
    %40 = arith.mulf %36, %31 : vector<2x32xf32>
    %41 = arith.addf %39, %40 : vector<2x32xf32>
    %cst_18 = arith.constant dense<0.000000e+00> : vector<2x128xf32>
    %42 = tpu.matmul %41, %1, %cst_18 {dimension_numbers = #tpu.dot_dimension_numbers<[1], [0], [0], [1], [0, 0, 1, 1], [], []>} : vector<2x32xf32>, vector<32x128xf32>, vector<2x128xf32> -> vector<2x128xf32>
    %43 = arith.addf %42, %11 : vector<2x128xf32>
    %cst_19 = arith.constant dense<0.000000e+00> : vector<2x128xf32>
    %44 = tpu.matmul %20, %3, %cst_19 {dimension_numbers = #tpu.dot_dimension_numbers<[1], [0], [0], [1], [0, 0, 1, 1], [], []>} : vector<2x32xf32>, vector<32x128xf32>, vector<2x128xf32> -> vector<2x128xf32>
    %45 = arith.addf %43, %44 : vector<2x128xf32>
    %46 = vector.extract_strided_slice %45 {offsets = [0, 0], sizes = [2, 64], strides = [1, 1]} : vector<2x128xf32> to vector<2x64xf32>
    %47 = arith.negf %46 : vector<2x64xf32>
    %48 = math.exp %47 : vector<2x64xf32>
    %cst_20 = arith.constant 1.000000e+00 : f32
    %49 = vector.broadcast %cst_20 : f32 to vector<2x64xf32>
    %50 = arith.addf %49, %48 : vector<2x64xf32>
    %51 = arith.divf %49, %50 : vector<2x64xf32>
    %52 = vector.extract_strided_slice %51 {offsets = [0, 0], sizes = [2, 32], strides = [1, 1]} : vector<2x64xf32> to vector<2x32xf32>
    %53 = vector.extract_strided_slice %51 {offsets = [0, 32], sizes = [2, 32], strides = [1, 1]} : vector<2x64xf32> to vector<2x32xf32>
    %54 = vector.extract_strided_slice %45 {offsets = [0, 64], sizes = [2, 32], strides = [1, 1]} : vector<2x128xf32> to vector<2x32xf32>
    %55 = arith.mulf %20, %52 : vector<2x32xf32>
    %cst_21 = arith.constant dense<0.000000e+00> : vector<2x32xf32>
    %56 = tpu.matmul %55, %7, %cst_21 {dimension_numbers = #tpu.dot_dimension_numbers<[1], [0], [0], [1], [0, 0, 1, 1], [], []>} : vector<2x32xf32>, vector<32x32xf32>, vector<2x32xf32> -> vector<2x32xf32>
    %57 = arith.addf %54, %56 : vector<2x32xf32>
    %58 = math.tanh %57 : vector<2x32xf32>
    %cst_22 = arith.constant 1.000000e+00 : f32
    %59 = vector.broadcast %cst_22 : f32 to vector<2x32xf32>
    %60 = arith.subf %59, %53 : vector<2x32xf32>
    %61 = arith.mulf %20, %60 : vector<2x32xf32>
    %62 = arith.mulf %58, %53 : vector<2x32xf32>
    %63 = arith.addf %61, %62 : vector<2x32xf32>
    %64 = vector.extract_strided_slice %18 {offsets = [2, 0], sizes = [2, 128], strides = [1, 1]} : vector<16x128xf32> to vector<2x128xf32>
    %cst_23 = arith.constant dense<0.000000e+00> : vector<2x128xf32>
    %65 = tpu.matmul %41, %2, %cst_23 {dimension_numbers = #tpu.dot_dimension_numbers<[1], [0], [0], [1], [0, 0, 1, 1], [], []>} : vector<2x32xf32>, vector<32x128xf32>, vector<2x128xf32> -> vector<2x128xf32>
    %66 = arith.addf %64, %65 : vector<2x128xf32>
    %67 = vector.extract_strided_slice %66 {offsets = [0, 0], sizes = [2, 64], strides = [1, 1]} : vector<2x128xf32> to vector<2x64xf32>
    %68 = arith.negf %67 : vector<2x64xf32>
    %69 = math.exp %68 : vector<2x64xf32>
    %cst_24 = arith.constant 1.000000e+00 : f32
    %70 = vector.broadcast %cst_24 : f32 to vector<2x64xf32>
    %71 = arith.addf %70, %69 : vector<2x64xf32>
    %72 = arith.divf %70, %71 : vector<2x64xf32>
    %73 = vector.extract_strided_slice %72 {offsets = [0, 0], sizes = [2, 32], strides = [1, 1]} : vector<2x64xf32> to vector<2x32xf32>
    %74 = vector.extract_strided_slice %72 {offsets = [0, 32], sizes = [2, 32], strides = [1, 1]} : vector<2x64xf32> to vector<2x32xf32>
    %75 = vector.extract_strided_slice %66 {offsets = [0, 64], sizes = [2, 32], strides = [1, 1]} : vector<2x128xf32> to vector<2x32xf32>
    %76 = arith.mulf %41, %73 : vector<2x32xf32>
    %cst_25 = arith.constant dense<0.000000e+00> : vector<2x32xf32>
    %77 = tpu.matmul %76, %5, %cst_25 {dimension_numbers = #tpu.dot_dimension_numbers<[1], [0], [0], [1], [0, 0, 1, 1], [], []>} : vector<2x32xf32>, vector<32x32xf32>, vector<2x32xf32> -> vector<2x32xf32>
    %78 = arith.addf %75, %77 : vector<2x32xf32>
    %79 = math.tanh %78 : vector<2x32xf32>
    %cst_26 = arith.constant 1.000000e+00 : f32
    %80 = vector.broadcast %cst_26 : f32 to vector<2x32xf32>
    %81 = arith.subf %80, %74 : vector<2x32xf32>
    %82 = arith.mulf %41, %81 : vector<2x32xf32>
    %83 = arith.mulf %79, %74 : vector<2x32xf32>
    %84 = arith.addf %82, %83 : vector<2x32xf32>
    %cst_27 = arith.constant dense<0.000000e+00> : vector<2x128xf32>
    %85 = tpu.matmul %84, %1, %cst_27 {dimension_numbers = #tpu.dot_dimension_numbers<[1], [0], [0], [1], [0, 0, 1, 1], [], []>} : vector<2x32xf32>, vector<32x128xf32>, vector<2x128xf32> -> vector<2x128xf32>
    %86 = arith.addf %85, %11 : vector<2x128xf32>
    %cst_28 = arith.constant dense<0.000000e+00> : vector<2x128xf32>
    %87 = tpu.matmul %63, %3, %cst_28 {dimension_numbers = #tpu.dot_dimension_numbers<[1], [0], [0], [1], [0, 0, 1, 1], [], []>} : vector<2x32xf32>, vector<32x128xf32>, vector<2x128xf32> -> vector<2x128xf32>
    %88 = arith.addf %86, %87 : vector<2x128xf32>
    %89 = vector.extract_strided_slice %88 {offsets = [0, 0], sizes = [2, 64], strides = [1, 1]} : vector<2x128xf32> to vector<2x64xf32>
    %90 = arith.negf %89 : vector<2x64xf32>
    %91 = math.exp %90 : vector<2x64xf32>
    %cst_29 = arith.constant 1.000000e+00 : f32
    %92 = vector.broadcast %cst_29 : f32 to vector<2x64xf32>
    %93 = arith.addf %92, %91 : vector<2x64xf32>
    %94 = arith.divf %92, %93 : vector<2x64xf32>
    %95 = vector.extract_strided_slice %94 {offsets = [0, 0], sizes = [2, 32], strides = [1, 1]} : vector<2x64xf32> to vector<2x32xf32>
    %96 = vector.extract_strided_slice %94 {offsets = [0, 32], sizes = [2, 32], strides = [1, 1]} : vector<2x64xf32> to vector<2x32xf32>
    %97 = vector.extract_strided_slice %88 {offsets = [0, 64], sizes = [2, 32], strides = [1, 1]} : vector<2x128xf32> to vector<2x32xf32>
    %98 = arith.mulf %63, %95 : vector<2x32xf32>
    %cst_30 = arith.constant dense<0.000000e+00> : vector<2x32xf32>
    %99 = tpu.matmul %98, %7, %cst_30 {dimension_numbers = #tpu.dot_dimension_numbers<[1], [0], [0], [1], [0, 0, 1, 1], [], []>} : vector<2x32xf32>, vector<32x32xf32>, vector<2x32xf32> -> vector<2x32xf32>
    %100 = arith.addf %97, %99 : vector<2x32xf32>
    %101 = math.tanh %100 : vector<2x32xf32>
    %cst_31 = arith.constant 1.000000e+00 : f32
    %102 = vector.broadcast %cst_31 : f32 to vector<2x32xf32>
    %103 = arith.subf %102, %96 : vector<2x32xf32>
    %104 = arith.mulf %63, %103 : vector<2x32xf32>
    %105 = arith.mulf %101, %96 : vector<2x32xf32>
    %106 = arith.addf %104, %105 : vector<2x32xf32>
    %107 = vector.extract_strided_slice %18 {offsets = [4, 0], sizes = [2, 128], strides = [1, 1]} : vector<16x128xf32> to vector<2x128xf32>
    %cst_32 = arith.constant dense<0.000000e+00> : vector<2x128xf32>
    %108 = tpu.matmul %84, %2, %cst_32 {dimension_numbers = #tpu.dot_dimension_numbers<[1], [0], [0], [1], [0, 0, 1, 1], [], []>} : vector<2x32xf32>, vector<32x128xf32>, vector<2x128xf32> -> vector<2x128xf32>
    %109 = arith.addf %107, %108 : vector<2x128xf32>
    %110 = vector.extract_strided_slice %109 {offsets = [0, 0], sizes = [2, 64], strides = [1, 1]} : vector<2x128xf32> to vector<2x64xf32>
    %111 = arith.negf %110 : vector<2x64xf32>
    %112 = math.exp %111 : vector<2x64xf32>
    %cst_33 = arith.constant 1.000000e+00 : f32
    %113 = vector.broadcast %cst_33 : f32 to vector<2x64xf32>
    %114 = arith.addf %113, %112 : vector<2x64xf32>
    %115 = arith.divf %113, %114 : vector<2x64xf32>
    %116 = vector.extract_strided_slice %115 {offsets = [0, 0], sizes = [2, 32], strides = [1, 1]} : vector<2x64xf32> to vector<2x32xf32>
    %117 = vector.extract_strided_slice %115 {offsets = [0, 32], sizes = [2, 32], strides = [1, 1]} : vector<2x64xf32> to vector<2x32xf32>
    %118 = vector.extract_strided_slice %109 {offsets = [0, 64], sizes = [2, 32], strides = [1, 1]} : vector<2x128xf32> to vector<2x32xf32>
    %119 = arith.mulf %84, %116 : vector<2x32xf32>
    %cst_34 = arith.constant dense<0.000000e+00> : vector<2x32xf32>
    %120 = tpu.matmul %119, %5, %cst_34 {dimension_numbers = #tpu.dot_dimension_numbers<[1], [0], [0], [1], [0, 0, 1, 1], [], []>} : vector<2x32xf32>, vector<32x32xf32>, vector<2x32xf32> -> vector<2x32xf32>
    %121 = arith.addf %118, %120 : vector<2x32xf32>
    %122 = math.tanh %121 : vector<2x32xf32>
    %cst_35 = arith.constant 1.000000e+00 : f32
    %123 = vector.broadcast %cst_35 : f32 to vector<2x32xf32>
    %124 = arith.subf %123, %117 : vector<2x32xf32>
    %125 = arith.mulf %84, %124 : vector<2x32xf32>
    %126 = arith.mulf %122, %117 : vector<2x32xf32>
    %127 = arith.addf %125, %126 : vector<2x32xf32>
    %cst_36 = arith.constant dense<0.000000e+00> : vector<2x128xf32>
    %128 = tpu.matmul %127, %1, %cst_36 {dimension_numbers = #tpu.dot_dimension_numbers<[1], [0], [0], [1], [0, 0, 1, 1], [], []>} : vector<2x32xf32>, vector<32x128xf32>, vector<2x128xf32> -> vector<2x128xf32>
    %129 = arith.addf %128, %11 : vector<2x128xf32>
    %cst_37 = arith.constant dense<0.000000e+00> : vector<2x128xf32>
    %130 = tpu.matmul %106, %3, %cst_37 {dimension_numbers = #tpu.dot_dimension_numbers<[1], [0], [0], [1], [0, 0, 1, 1], [], []>} : vector<2x32xf32>, vector<32x128xf32>, vector<2x128xf32> -> vector<2x128xf32>
    %131 = arith.addf %129, %130 : vector<2x128xf32>
    %132 = vector.extract_strided_slice %131 {offsets = [0, 0], sizes = [2, 64], strides = [1, 1]} : vector<2x128xf32> to vector<2x64xf32>
    %133 = arith.negf %132 : vector<2x64xf32>
    %134 = math.exp %133 : vector<2x64xf32>
    %cst_38 = arith.constant 1.000000e+00 : f32
    %135 = vector.broadcast %cst_38 : f32 to vector<2x64xf32>
    %136 = arith.addf %135, %134 : vector<2x64xf32>
    %137 = arith.divf %135, %136 : vector<2x64xf32>
    %138 = vector.extract_strided_slice %137 {offsets = [0, 0], sizes = [2, 32], strides = [1, 1]} : vector<2x64xf32> to vector<2x32xf32>
    %139 = vector.extract_strided_slice %137 {offsets = [0, 32], sizes = [2, 32], strides = [1, 1]} : vector<2x64xf32> to vector<2x32xf32>
    %140 = vector.extract_strided_slice %131 {offsets = [0, 64], sizes = [2, 32], strides = [1, 1]} : vector<2x128xf32> to vector<2x32xf32>
    %141 = arith.mulf %106, %138 : vector<2x32xf32>
    %cst_39 = arith.constant dense<0.000000e+00> : vector<2x32xf32>
    %142 = tpu.matmul %141, %7, %cst_39 {dimension_numbers = #tpu.dot_dimension_numbers<[1], [0], [0], [1], [0, 0, 1, 1], [], []>} : vector<2x32xf32>, vector<32x32xf32>, vector<2x32xf32> -> vector<2x32xf32>
    %143 = arith.addf %140, %142 : vector<2x32xf32>
    %144 = math.tanh %143 : vector<2x32xf32>
    %cst_40 = arith.constant 1.000000e+00 : f32
    %145 = vector.broadcast %cst_40 : f32 to vector<2x32xf32>
    %146 = arith.subf %145, %139 : vector<2x32xf32>
    %147 = arith.mulf %106, %146 : vector<2x32xf32>
    %148 = arith.mulf %144, %139 : vector<2x32xf32>
    %149 = arith.addf %147, %148 : vector<2x32xf32>
    %150 = vector.extract_strided_slice %18 {offsets = [6, 0], sizes = [2, 128], strides = [1, 1]} : vector<16x128xf32> to vector<2x128xf32>
    %cst_41 = arith.constant dense<0.000000e+00> : vector<2x128xf32>
    %151 = tpu.matmul %127, %2, %cst_41 {dimension_numbers = #tpu.dot_dimension_numbers<[1], [0], [0], [1], [0, 0, 1, 1], [], []>} : vector<2x32xf32>, vector<32x128xf32>, vector<2x128xf32> -> vector<2x128xf32>
    %152 = arith.addf %150, %151 : vector<2x128xf32>
    %153 = vector.extract_strided_slice %152 {offsets = [0, 0], sizes = [2, 64], strides = [1, 1]} : vector<2x128xf32> to vector<2x64xf32>
    %154 = arith.negf %153 : vector<2x64xf32>
    %155 = math.exp %154 : vector<2x64xf32>
    %cst_42 = arith.constant 1.000000e+00 : f32
    %156 = vector.broadcast %cst_42 : f32 to vector<2x64xf32>
    %157 = arith.addf %156, %155 : vector<2x64xf32>
    %158 = arith.divf %156, %157 : vector<2x64xf32>
    %159 = vector.extract_strided_slice %158 {offsets = [0, 0], sizes = [2, 32], strides = [1, 1]} : vector<2x64xf32> to vector<2x32xf32>
    %160 = vector.extract_strided_slice %158 {offsets = [0, 32], sizes = [2, 32], strides = [1, 1]} : vector<2x64xf32> to vector<2x32xf32>
    %161 = vector.extract_strided_slice %152 {offsets = [0, 64], sizes = [2, 32], strides = [1, 1]} : vector<2x128xf32> to vector<2x32xf32>
    %162 = arith.mulf %127, %159 : vector<2x32xf32>
    %cst_43 = arith.constant dense<0.000000e+00> : vector<2x32xf32>
    %163 = tpu.matmul %162, %5, %cst_43 {dimension_numbers = #tpu.dot_dimension_numbers<[1], [0], [0], [1], [0, 0, 1, 1], [], []>} : vector<2x32xf32>, vector<32x32xf32>, vector<2x32xf32> -> vector<2x32xf32>
    %164 = arith.addf %161, %163 : vector<2x32xf32>
    %165 = math.tanh %164 : vector<2x32xf32>
    %cst_44 = arith.constant 1.000000e+00 : f32
    %166 = vector.broadcast %cst_44 : f32 to vector<2x32xf32>
    %167 = arith.subf %166, %160 : vector<2x32xf32>
    %168 = arith.mulf %127, %167 : vector<2x32xf32>
    %169 = arith.mulf %165, %160 : vector<2x32xf32>
    %170 = arith.addf %168, %169 : vector<2x32xf32>
    %cst_45 = arith.constant dense<0.000000e+00> : vector<2x128xf32>
    %171 = tpu.matmul %170, %1, %cst_45 {dimension_numbers = #tpu.dot_dimension_numbers<[1], [0], [0], [1], [0, 0, 1, 1], [], []>} : vector<2x32xf32>, vector<32x128xf32>, vector<2x128xf32> -> vector<2x128xf32>
    %172 = arith.addf %171, %11 : vector<2x128xf32>
    %cst_46 = arith.constant dense<0.000000e+00> : vector<2x128xf32>
    %173 = tpu.matmul %149, %3, %cst_46 {dimension_numbers = #tpu.dot_dimension_numbers<[1], [0], [0], [1], [0, 0, 1, 1], [], []>} : vector<2x32xf32>, vector<32x128xf32>, vector<2x128xf32> -> vector<2x128xf32>
    %174 = arith.addf %172, %173 : vector<2x128xf32>
    %175 = vector.extract_strided_slice %174 {offsets = [0, 0], sizes = [2, 64], strides = [1, 1]} : vector<2x128xf32> to vector<2x64xf32>
    %176 = arith.negf %175 : vector<2x64xf32>
    %177 = math.exp %176 : vector<2x64xf32>
    %cst_47 = arith.constant 1.000000e+00 : f32
    %178 = vector.broadcast %cst_47 : f32 to vector<2x64xf32>
    %179 = arith.addf %178, %177 : vector<2x64xf32>
    %180 = arith.divf %178, %179 : vector<2x64xf32>
    %181 = vector.extract_strided_slice %180 {offsets = [0, 0], sizes = [2, 32], strides = [1, 1]} : vector<2x64xf32> to vector<2x32xf32>
    %182 = vector.extract_strided_slice %180 {offsets = [0, 32], sizes = [2, 32], strides = [1, 1]} : vector<2x64xf32> to vector<2x32xf32>
    %183 = vector.extract_strided_slice %174 {offsets = [0, 64], sizes = [2, 32], strides = [1, 1]} : vector<2x128xf32> to vector<2x32xf32>
    %184 = arith.mulf %149, %181 : vector<2x32xf32>
    %cst_48 = arith.constant dense<0.000000e+00> : vector<2x32xf32>
    %185 = tpu.matmul %184, %7, %cst_48 {dimension_numbers = #tpu.dot_dimension_numbers<[1], [0], [0], [1], [0, 0, 1, 1], [], []>} : vector<2x32xf32>, vector<32x32xf32>, vector<2x32xf32> -> vector<2x32xf32>
    %186 = arith.addf %183, %185 : vector<2x32xf32>
    %187 = math.tanh %186 : vector<2x32xf32>
    %cst_49 = arith.constant 1.000000e+00 : f32
    %188 = vector.broadcast %cst_49 : f32 to vector<2x32xf32>
    %189 = arith.subf %188, %182 : vector<2x32xf32>
    %190 = arith.mulf %149, %189 : vector<2x32xf32>
    %191 = arith.mulf %187, %182 : vector<2x32xf32>
    %192 = arith.addf %190, %191 : vector<2x32xf32>
    %193 = vector.extract_strided_slice %18 {offsets = [8, 0], sizes = [2, 128], strides = [1, 1]} : vector<16x128xf32> to vector<2x128xf32>
    %cst_50 = arith.constant dense<0.000000e+00> : vector<2x128xf32>
    %194 = tpu.matmul %170, %2, %cst_50 {dimension_numbers = #tpu.dot_dimension_numbers<[1], [0], [0], [1], [0, 0, 1, 1], [], []>} : vector<2x32xf32>, vector<32x128xf32>, vector<2x128xf32> -> vector<2x128xf32>
    %195 = arith.addf %193, %194 : vector<2x128xf32>
    %196 = vector.extract_strided_slice %195 {offsets = [0, 0], sizes = [2, 64], strides = [1, 1]} : vector<2x128xf32> to vector<2x64xf32>
    %197 = arith.negf %196 : vector<2x64xf32>
    %198 = math.exp %197 : vector<2x64xf32>
    %cst_51 = arith.constant 1.000000e+00 : f32
    %199 = vector.broadcast %cst_51 : f32 to vector<2x64xf32>
    %200 = arith.addf %199, %198 : vector<2x64xf32>
    %201 = arith.divf %199, %200 : vector<2x64xf32>
    %202 = vector.extract_strided_slice %201 {offsets = [0, 0], sizes = [2, 32], strides = [1, 1]} : vector<2x64xf32> to vector<2x32xf32>
    %203 = vector.extract_strided_slice %201 {offsets = [0, 32], sizes = [2, 32], strides = [1, 1]} : vector<2x64xf32> to vector<2x32xf32>
    %204 = vector.extract_strided_slice %195 {offsets = [0, 64], sizes = [2, 32], strides = [1, 1]} : vector<2x128xf32> to vector<2x32xf32>
    %205 = arith.mulf %170, %202 : vector<2x32xf32>
    %cst_52 = arith.constant dense<0.000000e+00> : vector<2x32xf32>
    %206 = tpu.matmul %205, %5, %cst_52 {dimension_numbers = #tpu.dot_dimension_numbers<[1], [0], [0], [1], [0, 0, 1, 1], [], []>} : vector<2x32xf32>, vector<32x32xf32>, vector<2x32xf32> -> vector<2x32xf32>
    %207 = arith.addf %204, %206 : vector<2x32xf32>
    %208 = math.tanh %207 : vector<2x32xf32>
    %cst_53 = arith.constant 1.000000e+00 : f32
    %209 = vector.broadcast %cst_53 : f32 to vector<2x32xf32>
    %210 = arith.subf %209, %203 : vector<2x32xf32>
    %211 = arith.mulf %170, %210 : vector<2x32xf32>
    %212 = arith.mulf %208, %203 : vector<2x32xf32>
    %213 = arith.addf %211, %212 : vector<2x32xf32>
    %cst_54 = arith.constant dense<0.000000e+00> : vector<2x128xf32>
    %214 = tpu.matmul %213, %1, %cst_54 {dimension_numbers = #tpu.dot_dimension_numbers<[1], [0], [0], [1], [0, 0, 1, 1], [], []>} : vector<2x32xf32>, vector<32x128xf32>, vector<2x128xf32> -> vector<2x128xf32>
    %215 = arith.addf %214, %11 : vector<2x128xf32>
    %cst_55 = arith.constant dense<0.000000e+00> : vector<2x128xf32>
    %216 = tpu.matmul %192, %3, %cst_55 {dimension_numbers = #tpu.dot_dimension_numbers<[1], [0], [0], [1], [0, 0, 1, 1], [], []>} : vector<2x32xf32>, vector<32x128xf32>, vector<2x128xf32> -> vector<2x128xf32>
    %217 = arith.addf %215, %216 : vector<2x128xf32>
    %218 = vector.extract_strided_slice %217 {offsets = [0, 0], sizes = [2, 64], strides = [1, 1]} : vector<2x128xf32> to vector<2x64xf32>
    %219 = arith.negf %218 : vector<2x64xf32>
    %220 = math.exp %219 : vector<2x64xf32>
    %cst_56 = arith.constant 1.000000e+00 : f32
    %221 = vector.broadcast %cst_56 : f32 to vector<2x64xf32>
    %222 = arith.addf %221, %220 : vector<2x64xf32>
    %223 = arith.divf %221, %222 : vector<2x64xf32>
    %224 = vector.extract_strided_slice %223 {offsets = [0, 0], sizes = [2, 32], strides = [1, 1]} : vector<2x64xf32> to vector<2x32xf32>
    %225 = vector.extract_strided_slice %223 {offsets = [0, 32], sizes = [2, 32], strides = [1, 1]} : vector<2x64xf32> to vector<2x32xf32>
    %226 = vector.extract_strided_slice %217 {offsets = [0, 64], sizes = [2, 32], strides = [1, 1]} : vector<2x128xf32> to vector<2x32xf32>
    %227 = arith.mulf %192, %224 : vector<2x32xf32>
    %cst_57 = arith.constant dense<0.000000e+00> : vector<2x32xf32>
    %228 = tpu.matmul %227, %7, %cst_57 {dimension_numbers = #tpu.dot_dimension_numbers<[1], [0], [0], [1], [0, 0, 1, 1], [], []>} : vector<2x32xf32>, vector<32x32xf32>, vector<2x32xf32> -> vector<2x32xf32>
    %229 = arith.addf %226, %228 : vector<2x32xf32>
    %230 = math.tanh %229 : vector<2x32xf32>
    %cst_58 = arith.constant 1.000000e+00 : f32
    %231 = vector.broadcast %cst_58 : f32 to vector<2x32xf32>
    %232 = arith.subf %231, %225 : vector<2x32xf32>
    %233 = arith.mulf %192, %232 : vector<2x32xf32>
    %234 = arith.mulf %230, %225 : vector<2x32xf32>
    %235 = arith.addf %233, %234 : vector<2x32xf32>
    %236 = vector.extract_strided_slice %18 {offsets = [10, 0], sizes = [2, 128], strides = [1, 1]} : vector<16x128xf32> to vector<2x128xf32>
    %cst_59 = arith.constant dense<0.000000e+00> : vector<2x128xf32>
    %237 = tpu.matmul %213, %2, %cst_59 {dimension_numbers = #tpu.dot_dimension_numbers<[1], [0], [0], [1], [0, 0, 1, 1], [], []>} : vector<2x32xf32>, vector<32x128xf32>, vector<2x128xf32> -> vector<2x128xf32>
    %238 = arith.addf %236, %237 : vector<2x128xf32>
    %239 = vector.extract_strided_slice %238 {offsets = [0, 0], sizes = [2, 64], strides = [1, 1]} : vector<2x128xf32> to vector<2x64xf32>
    %240 = arith.negf %239 : vector<2x64xf32>
    %241 = math.exp %240 : vector<2x64xf32>
    %cst_60 = arith.constant 1.000000e+00 : f32
    %242 = vector.broadcast %cst_60 : f32 to vector<2x64xf32>
    %243 = arith.addf %242, %241 : vector<2x64xf32>
    %244 = arith.divf %242, %243 : vector<2x64xf32>
    %245 = vector.extract_strided_slice %244 {offsets = [0, 0], sizes = [2, 32], strides = [1, 1]} : vector<2x64xf32> to vector<2x32xf32>
    %246 = vector.extract_strided_slice %244 {offsets = [0, 32], sizes = [2, 32], strides = [1, 1]} : vector<2x64xf32> to vector<2x32xf32>
    %247 = vector.extract_strided_slice %238 {offsets = [0, 64], sizes = [2, 32], strides = [1, 1]} : vector<2x128xf32> to vector<2x32xf32>
    %248 = arith.mulf %213, %245 : vector<2x32xf32>
    %cst_61 = arith.constant dense<0.000000e+00> : vector<2x32xf32>
    %249 = tpu.matmul %248, %5, %cst_61 {dimension_numbers = #tpu.dot_dimension_numbers<[1], [0], [0], [1], [0, 0, 1, 1], [], []>} : vector<2x32xf32>, vector<32x32xf32>, vector<2x32xf32> -> vector<2x32xf32>
    %250 = arith.addf %247, %249 : vector<2x32xf32>
    %251 = math.tanh %250 : vector<2x32xf32>
    %cst_62 = arith.constant 1.000000e+00 : f32
    %252 = vector.broadcast %cst_62 : f32 to vector<2x32xf32>
    %253 = arith.subf %252, %246 : vector<2x32xf32>
    %254 = arith.mulf %213, %253 : vector<2x32xf32>
    %255 = arith.mulf %251, %246 : vector<2x32xf32>
    %256 = arith.addf %254, %255 : vector<2x32xf32>
    %cst_63 = arith.constant dense<0.000000e+00> : vector<2x128xf32>
    %257 = tpu.matmul %256, %1, %cst_63 {dimension_numbers = #tpu.dot_dimension_numbers<[1], [0], [0], [1], [0, 0, 1, 1], [], []>} : vector<2x32xf32>, vector<32x128xf32>, vector<2x128xf32> -> vector<2x128xf32>
    %258 = arith.addf %257, %11 : vector<2x128xf32>
    %cst_64 = arith.constant dense<0.000000e+00> : vector<2x128xf32>
    %259 = tpu.matmul %235, %3, %cst_64 {dimension_numbers = #tpu.dot_dimension_numbers<[1], [0], [0], [1], [0, 0, 1, 1], [], []>} : vector<2x32xf32>, vector<32x128xf32>, vector<2x128xf32> -> vector<2x128xf32>
    %260 = arith.addf %258, %259 : vector<2x128xf32>
    %261 = vector.extract_strided_slice %260 {offsets = [0, 0], sizes = [2, 64], strides = [1, 1]} : vector<2x128xf32> to vector<2x64xf32>
    %262 = arith.negf %261 : vector<2x64xf32>
    %263 = math.exp %262 : vector<2x64xf32>
    %cst_65 = arith.constant 1.000000e+00 : f32
    %264 = vector.broadcast %cst_65 : f32 to vector<2x64xf32>
    %265 = arith.addf %264, %263 : vector<2x64xf32>
    %266 = arith.divf %264, %265 : vector<2x64xf32>
    %267 = vector.extract_strided_slice %266 {offsets = [0, 0], sizes = [2, 32], strides = [1, 1]} : vector<2x64xf32> to vector<2x32xf32>
    %268 = vector.extract_strided_slice %266 {offsets = [0, 32], sizes = [2, 32], strides = [1, 1]} : vector<2x64xf32> to vector<2x32xf32>
    %269 = vector.extract_strided_slice %260 {offsets = [0, 64], sizes = [2, 32], strides = [1, 1]} : vector<2x128xf32> to vector<2x32xf32>
    %270 = arith.mulf %235, %267 : vector<2x32xf32>
    %cst_66 = arith.constant dense<0.000000e+00> : vector<2x32xf32>
    %271 = tpu.matmul %270, %7, %cst_66 {dimension_numbers = #tpu.dot_dimension_numbers<[1], [0], [0], [1], [0, 0, 1, 1], [], []>} : vector<2x32xf32>, vector<32x32xf32>, vector<2x32xf32> -> vector<2x32xf32>
    %272 = arith.addf %269, %271 : vector<2x32xf32>
    %273 = math.tanh %272 : vector<2x32xf32>
    %cst_67 = arith.constant 1.000000e+00 : f32
    %274 = vector.broadcast %cst_67 : f32 to vector<2x32xf32>
    %275 = arith.subf %274, %268 : vector<2x32xf32>
    %276 = arith.mulf %235, %275 : vector<2x32xf32>
    %277 = arith.mulf %273, %268 : vector<2x32xf32>
    %278 = arith.addf %276, %277 : vector<2x32xf32>
    %279 = vector.extract_strided_slice %18 {offsets = [12, 0], sizes = [2, 128], strides = [1, 1]} : vector<16x128xf32> to vector<2x128xf32>
    %cst_68 = arith.constant dense<0.000000e+00> : vector<2x128xf32>
    %280 = tpu.matmul %256, %2, %cst_68 {dimension_numbers = #tpu.dot_dimension_numbers<[1], [0], [0], [1], [0, 0, 1, 1], [], []>} : vector<2x32xf32>, vector<32x128xf32>, vector<2x128xf32> -> vector<2x128xf32>
    %281 = arith.addf %279, %280 : vector<2x128xf32>
    %282 = vector.extract_strided_slice %281 {offsets = [0, 0], sizes = [2, 64], strides = [1, 1]} : vector<2x128xf32> to vector<2x64xf32>
    %283 = arith.negf %282 : vector<2x64xf32>
    %284 = math.exp %283 : vector<2x64xf32>
    %cst_69 = arith.constant 1.000000e+00 : f32
    %285 = vector.broadcast %cst_69 : f32 to vector<2x64xf32>
    %286 = arith.addf %285, %284 : vector<2x64xf32>
    %287 = arith.divf %285, %286 : vector<2x64xf32>
    %288 = vector.extract_strided_slice %287 {offsets = [0, 0], sizes = [2, 32], strides = [1, 1]} : vector<2x64xf32> to vector<2x32xf32>
    %289 = vector.extract_strided_slice %287 {offsets = [0, 32], sizes = [2, 32], strides = [1, 1]} : vector<2x64xf32> to vector<2x32xf32>
    %290 = vector.extract_strided_slice %281 {offsets = [0, 64], sizes = [2, 32], strides = [1, 1]} : vector<2x128xf32> to vector<2x32xf32>
    %291 = arith.mulf %256, %288 : vector<2x32xf32>
    %cst_70 = arith.constant dense<0.000000e+00> : vector<2x32xf32>
    %292 = tpu.matmul %291, %5, %cst_70 {dimension_numbers = #tpu.dot_dimension_numbers<[1], [0], [0], [1], [0, 0, 1, 1], [], []>} : vector<2x32xf32>, vector<32x32xf32>, vector<2x32xf32> -> vector<2x32xf32>
    %293 = arith.addf %290, %292 : vector<2x32xf32>
    %294 = math.tanh %293 : vector<2x32xf32>
    %cst_71 = arith.constant 1.000000e+00 : f32
    %295 = vector.broadcast %cst_71 : f32 to vector<2x32xf32>
    %296 = arith.subf %295, %289 : vector<2x32xf32>
    %297 = arith.mulf %256, %296 : vector<2x32xf32>
    %298 = arith.mulf %294, %289 : vector<2x32xf32>
    %299 = arith.addf %297, %298 : vector<2x32xf32>
    %cst_72 = arith.constant dense<0.000000e+00> : vector<2x128xf32>
    %300 = tpu.matmul %299, %1, %cst_72 {dimension_numbers = #tpu.dot_dimension_numbers<[1], [0], [0], [1], [0, 0, 1, 1], [], []>} : vector<2x32xf32>, vector<32x128xf32>, vector<2x128xf32> -> vector<2x128xf32>
    %301 = arith.addf %300, %11 : vector<2x128xf32>
    %cst_73 = arith.constant dense<0.000000e+00> : vector<2x128xf32>
    %302 = tpu.matmul %278, %3, %cst_73 {dimension_numbers = #tpu.dot_dimension_numbers<[1], [0], [0], [1], [0, 0, 1, 1], [], []>} : vector<2x32xf32>, vector<32x128xf32>, vector<2x128xf32> -> vector<2x128xf32>
    %303 = arith.addf %301, %302 : vector<2x128xf32>
    %304 = vector.extract_strided_slice %303 {offsets = [0, 0], sizes = [2, 64], strides = [1, 1]} : vector<2x128xf32> to vector<2x64xf32>
    %305 = arith.negf %304 : vector<2x64xf32>
    %306 = math.exp %305 : vector<2x64xf32>
    %cst_74 = arith.constant 1.000000e+00 : f32
    %307 = vector.broadcast %cst_74 : f32 to vector<2x64xf32>
    %308 = arith.addf %307, %306 : vector<2x64xf32>
    %309 = arith.divf %307, %308 : vector<2x64xf32>
    %310 = vector.extract_strided_slice %309 {offsets = [0, 0], sizes = [2, 32], strides = [1, 1]} : vector<2x64xf32> to vector<2x32xf32>
    %311 = vector.extract_strided_slice %309 {offsets = [0, 32], sizes = [2, 32], strides = [1, 1]} : vector<2x64xf32> to vector<2x32xf32>
    %312 = vector.extract_strided_slice %303 {offsets = [0, 64], sizes = [2, 32], strides = [1, 1]} : vector<2x128xf32> to vector<2x32xf32>
    %313 = arith.mulf %278, %310 : vector<2x32xf32>
    %cst_75 = arith.constant dense<0.000000e+00> : vector<2x32xf32>
    %314 = tpu.matmul %313, %7, %cst_75 {dimension_numbers = #tpu.dot_dimension_numbers<[1], [0], [0], [1], [0, 0, 1, 1], [], []>} : vector<2x32xf32>, vector<32x32xf32>, vector<2x32xf32> -> vector<2x32xf32>
    %315 = arith.addf %312, %314 : vector<2x32xf32>
    %316 = math.tanh %315 : vector<2x32xf32>
    %cst_76 = arith.constant 1.000000e+00 : f32
    %317 = vector.broadcast %cst_76 : f32 to vector<2x32xf32>
    %318 = arith.subf %317, %311 : vector<2x32xf32>
    %319 = arith.mulf %278, %318 : vector<2x32xf32>
    %320 = arith.mulf %316, %311 : vector<2x32xf32>
    %321 = arith.addf %319, %320 : vector<2x32xf32>
    %322 = vector.extract_strided_slice %18 {offsets = [14, 0], sizes = [2, 128], strides = [1, 1]} : vector<16x128xf32> to vector<2x128xf32>
    %cst_77 = arith.constant dense<0.000000e+00> : vector<2x128xf32>
    %323 = tpu.matmul %299, %2, %cst_77 {dimension_numbers = #tpu.dot_dimension_numbers<[1], [0], [0], [1], [0, 0, 1, 1], [], []>} : vector<2x32xf32>, vector<32x128xf32>, vector<2x128xf32> -> vector<2x128xf32>
    %324 = arith.addf %322, %323 : vector<2x128xf32>
    %325 = vector.extract_strided_slice %324 {offsets = [0, 0], sizes = [2, 64], strides = [1, 1]} : vector<2x128xf32> to vector<2x64xf32>
    %326 = arith.negf %325 : vector<2x64xf32>
    %327 = math.exp %326 : vector<2x64xf32>
    %cst_78 = arith.constant 1.000000e+00 : f32
    %328 = vector.broadcast %cst_78 : f32 to vector<2x64xf32>
    %329 = arith.addf %328, %327 : vector<2x64xf32>
    %330 = arith.divf %328, %329 : vector<2x64xf32>
    %331 = vector.extract_strided_slice %330 {offsets = [0, 0], sizes = [2, 32], strides = [1, 1]} : vector<2x64xf32> to vector<2x32xf32>
    %332 = vector.extract_strided_slice %330 {offsets = [0, 32], sizes = [2, 32], strides = [1, 1]} : vector<2x64xf32> to vector<2x32xf32>
    %333 = vector.extract_strided_slice %324 {offsets = [0, 64], sizes = [2, 32], strides = [1, 1]} : vector<2x128xf32> to vector<2x32xf32>
    %334 = arith.mulf %299, %331 : vector<2x32xf32>
    %cst_79 = arith.constant dense<0.000000e+00> : vector<2x32xf32>
    %335 = tpu.matmul %334, %5, %cst_79 {dimension_numbers = #tpu.dot_dimension_numbers<[1], [0], [0], [1], [0, 0, 1, 1], [], []>} : vector<2x32xf32>, vector<32x32xf32>, vector<2x32xf32> -> vector<2x32xf32>
    %336 = arith.addf %333, %335 : vector<2x32xf32>
    %337 = math.tanh %336 : vector<2x32xf32>
    %cst_80 = arith.constant 1.000000e+00 : f32
    %338 = vector.broadcast %cst_80 : f32 to vector<2x32xf32>
    %339 = arith.subf %338, %332 : vector<2x32xf32>
    %340 = arith.mulf %299, %339 : vector<2x32xf32>
    %341 = arith.mulf %337, %332 : vector<2x32xf32>
    %342 = arith.addf %340, %341 : vector<2x32xf32>
    %cst_81 = arith.constant dense<0.000000e+00> : vector<2x128xf32>
    %343 = tpu.matmul %342, %1, %cst_81 {dimension_numbers = #tpu.dot_dimension_numbers<[1], [0], [0], [1], [0, 0, 1, 1], [], []>} : vector<2x32xf32>, vector<32x128xf32>, vector<2x128xf32> -> vector<2x128xf32>
    %344 = arith.addf %343, %11 : vector<2x128xf32>
    %cst_82 = arith.constant dense<0.000000e+00> : vector<2x128xf32>
    %345 = tpu.matmul %321, %3, %cst_82 {dimension_numbers = #tpu.dot_dimension_numbers<[1], [0], [0], [1], [0, 0, 1, 1], [], []>} : vector<2x32xf32>, vector<32x128xf32>, vector<2x128xf32> -> vector<2x128xf32>
    %346 = arith.addf %344, %345 : vector<2x128xf32>
    %347 = vector.extract_strided_slice %346 {offsets = [0, 0], sizes = [2, 64], strides = [1, 1]} : vector<2x128xf32> to vector<2x64xf32>
    %348 = arith.negf %347 : vector<2x64xf32>
    %349 = math.exp %348 : vector<2x64xf32>
    %cst_83 = arith.constant 1.000000e+00 : f32
    %350 = vector.broadcast %cst_83 : f32 to vector<2x64xf32>
    %351 = arith.addf %350, %349 : vector<2x64xf32>
    %352 = arith.divf %350, %351 : vector<2x64xf32>
    %353 = vector.extract_strided_slice %352 {offsets = [0, 0], sizes = [2, 32], strides = [1, 1]} : vector<2x64xf32> to vector<2x32xf32>
    %354 = vector.extract_strided_slice %352 {offsets = [0, 32], sizes = [2, 32], strides = [1, 1]} : vector<2x64xf32> to vector<2x32xf32>
    %355 = vector.extract_strided_slice %346 {offsets = [0, 64], sizes = [2, 32], strides = [1, 1]} : vector<2x128xf32> to vector<2x32xf32>
    %356 = arith.mulf %321, %353 : vector<2x32xf32>
    %cst_84 = arith.constant dense<0.000000e+00> : vector<2x32xf32>
    %357 = tpu.matmul %356, %7, %cst_84 {dimension_numbers = #tpu.dot_dimension_numbers<[1], [0], [0], [1], [0, 0, 1, 1], [], []>} : vector<2x32xf32>, vector<32x32xf32>, vector<2x32xf32> -> vector<2x32xf32>
    %358 = arith.addf %355, %357 : vector<2x32xf32>
    %359 = math.tanh %358 : vector<2x32xf32>
    %cst_85 = arith.constant 1.000000e+00 : f32
    %360 = vector.broadcast %cst_85 : f32 to vector<2x32xf32>
    %361 = arith.subf %360, %354 : vector<2x32xf32>
    %362 = arith.mulf %321, %361 : vector<2x32xf32>
    %363 = arith.mulf %359, %354 : vector<2x32xf32>
    %364 = arith.addf %362, %363 : vector<2x32xf32>
    %cst_86 = arith.constant dense<0.000000e+00> : vector<2x128xf32>
    %365 = tpu.matmul %364, %12, %cst_86 {dimension_numbers = #tpu.dot_dimension_numbers<[1], [0], [0], [1], [0, 0, 1, 1], [], []>} : vector<2x32xf32>, vector<32x128xf32>, vector<2x128xf32> -> vector<2x128xf32>
    %366 = vector.shape_cast %13 : vector<1x128xf32> to vector<1x128xf32>
    %367 = vector.broadcast %366 : vector<1x128xf32> to vector<2x128xf32>
    %368 = arith.addf %365, %367 : vector<2x128xf32>
    %c0_87 = arith.constant 0 : index
    %c0_88 = arith.constant 0 : index
    %369 = vector.load %arg3[%c0_87, %c0_88] : memref<2x128xf32, #tpu.memory_space<vmem>>, vector<2x128xf32>
    tpu.vector_store %arg3[%c0_87, %c0_88], %368 {strides = array<i32>} : memref<2x128xf32, #tpu.memory_space<vmem>>, vector<2x128xf32>,
    return
  }
  func.func @transform_0(%arg0: i32) -> (i32, i32) {
    %c0_i32 = arith.constant 0 : i32
    %c0_i32_0 = arith.constant 0 : i32
    %c0_i32_1 = arith.constant 0 : i32
    return %c0_i32, %c0_i32_0 : i32, i32
  }
  func.func @transform_1(%arg0: i32) -> (i32, i32) {
    %c0_i32 = arith.constant 0 : i32
    %c0_i32_0 = arith.constant 0 : i32
    %c0_i32_1 = arith.constant 0 : i32
    return %c0_i32, %c0_i32_0 : i32, i32
  }
  func.func @transform_2(%arg0: i32) -> (i32, i32) {
    %c0_i32 = arith.constant 0 : i32
    %c0_i32_0 = arith.constant 0 : i32
    %c0_i32_1 = arith.constant 0 : i32
    return %c0_i32, %c0_i32_0 : i32, i32
  }
}

</mosaic_0001>

<llo_original>
// kernel: tpu_custom_call.1
$region0: #{tpu_custom_call.1}
  #allocation0 [shape = 'u32[]', space=smem, size = 0x4, offset = 0x4, fixed_abs, tag = 'smem constant byte address 0x4 - core index']
  #allocation1 [shape = 'u32[144,128]{1,0:T(1,128)}', space=vmem, size = 0x12000, scoped, tag = 'internal scratch']
  %s0 = inlined_call_operand.vmem [shape: f32[16,4], index: 0, kind: input, shape index: {}]
  %s1 = inlined_call_operand.hbm [shape: f32[224,128], index: 1, kind: input, shape index: {}]
  %s2 = inlined_call_operand.hbm [shape: f32[2,128], index: 2, kind: output, shape index: {}]
  %s3 = sld [smem:[#allocation0]]
  $region22: #{tpu_custom_call.1} parent=0
    _
  %s5 = ssub.s32 1, %s3
  %s6 = scalar_select 0, %s5, %s3
  $region1: #{tpu_custom_call.1} parent=0
    #allocation2 [shape = 'u8[114688]{0}', space=vmem, size = 0x1c000, scoped, tag = 'input window, operand 1, single buffered']
    #allocation3 [shape = 's32[1]{0}', space=sflag, size = 0x4, scoped, tag = 'scoped memory for tpu_custom_call.1']
    #allocation4 [shape = 's32[1]{0}', space=sflag, size = 0x4, scoped, tag = 'scoped memory for tpu_custom_call.1']
    #allocation5 [shape = 'u8[1024]{0}', space=vmem, size = 0x400, scoped, tag = 'output window, operand 0, single buffered']
    %7 = vsyncpa [#allocation3], 0
    %8 = vsyncpa [#allocation4], 0
    // Predicated region
    $region2: #{tpu_custom_call.1} parent=1 // pred_check
      _
    $region3: #{tpu_custom_call.1} parent=1 // pred_check_branch
      %10 = sbr.rel (0) target = $region5
    $region4: #{tpu_custom_call.1} parent=1 // pred_region
      _
    $region5: #{tpu_custom_call.1} parent=1 // pred_fallthru
      _
    // Predicated region
    $region6: #{tpu_custom_call.1} parent=1 // pred_check
      _
    $region7: #{tpu_custom_call.1} parent=1 // pred_check_branch
      %12 = sbr.rel (0) target = $region9
    $region8: #{tpu_custom_call.1} parent=1 // pred_region
      %s14 = ssub.s32 3584, 3584
      %15 = vsyncadd [#allocation3], %s14
      %s16 = sshll.u32 [#allocation2], 4
      %s17 = int_to_ptr.vmem [resolvable:$true] %s16
      %22 = dma.hbm_to_vmem [thread:$0]  %s1, 3584, %s17, [#allocation3], 128, 128, 8
    $region9: #{tpu_custom_call.1} parent=1 // pred_fallthru
      _
    // Predicated region
    $region10: #{tpu_custom_call.1} parent=1 // pred_check
      _
    $region11: #{tpu_custom_call.1} parent=1 // pred_check_branch
      %24 = sbr.rel (0) target = $region13
    $region12: #{tpu_custom_call.1} parent=1 // pred_region
      %25 = dma.done [#allocation3], 3584
    $region13: #{tpu_custom_call.1} parent=1 // pred_fallthru
      _
    %v26 = vld [vmem:[#allocation2] sm:$0xf]
    %v27 = vld [vmem:[#allocation2 + $0x50] sm:$0xff]
    %v28 = vld [vmem:[#allocation2 + $0x58] sm:$0xff]
    %v29 = vld [vmem:[#allocation2 + $0x60] sm:$0xff]
    %v30 = vld [vmem:[#allocation2 + $0x68] sm:$0xff]
    %v31 = vld [vmem:[#allocation2 + $0x8] sm:$0xff]
    %v32 = vld [vmem:[#allocation2 + $0x10] sm:$0xff]
    %v33 = vld [vmem:[#allocation2 + $0x18] sm:$0xff]
    %v34 = vld [vmem:[#allocation2 + $0x20] sm:$0xff]
    %v35 = vld [vmem:[#allocation2 + $0x70] sm:$0xff]
    %v36 = vld [vmem:[#allocation2 + $0x78] sm:$0xff]
    %v37 = vld [vmem:[#allocation2 + $0x80] sm:$0xff]
    %v38 = vld [vmem:[#allocation2 + $0x88] sm:$0xff]
    %v39 = vld [vmem:[#allocation2 + $0x30] sm:$0xff]
    %v40 = vld [vmem:[#allocation2 + $0x38] sm:$0xff]
    %v41 = vld [vmem:[#allocation2 + $0x40] sm:$0xff]
    %v42 = vld [vmem:[#allocation2 + $0x48] sm:$0xff]
    %v43 = vld [vmem:[#allocation2 + $0x98] sm:$0xff]
    %v44 = vld [vmem:[#allocation2 + $0xa0] sm:$0xff]
    %v45 = vld [vmem:[#allocation2 + $0xa8] sm:$0xff]
    %v46 = vld [vmem:[#allocation2 + $0xb0] sm:$0xff]
    %v47 = vld [vmem:[#allocation2 + $0x28] sm:$0x1]
    %v48 = vld [vmem:[#allocation2 + $0x90] sm:$0x1]
    %v49 = vlaneseq
    %v50 = vshrl.u32 %v49, 7
    %v51 = vsub.s32 0, %v50
    %v52 = vrot.slane %v48, %v51
    %v53 = vld [vmem:[#allocation2 + $0xb8] sm:$0xff]
    %v54 = vld [vmem:[#allocation2 + $0xc0] sm:$0xff]
    %v55 = vld [vmem:[#allocation2 + $0xc8] sm:$0xff]
    %v56 = vld [vmem:[#allocation2 + $0xd0] sm:$0xff]
    %v57 = vld [vmem:[#allocation2 + $0xd8] sm:$0x1]
    %v58 = vld [vmem:[%s0] sm:$0xff]
    %v59 = vld [vmem:[%s0 + $0x8] sm:$0xff]
    %v60 = vlaneseq
    %v61 = vshrl.u32 %v60, 7
    %v62 = vsub.s32 0, %v61
    %v63 = vrot.slane %v47, %v62
    %vm64 = vcmask 31744
    %v66 = vsel %vm64, %v58, 0
    %v69 = vsel %vm64, %v59, 0
    %vm71 = vcmask 1043456
    %v73 = vsel %vm71, %v26, 0
    %75 = vmatprep.subr.mxu0 0.0
    %76 = vmatpush1.msra.mxu0 %v73
    %77 = vmatprep.subr.mxu0 0.0
    %78 = vmatpush1.msra.mxu0 0.0
    %79 = vmatprep.subr.mxu0 0.0
    %80 = vmatpush1.msra.mxu0 0.0
    %81 = vmatprep.subr.mxu0 0.0
    %82 = vmatpush1.msra.mxu0 0.0
    %83 = vmatprep.subr.mxu0 0.0
    %84 = vmatpush1.msra.mxu0 0.0
    %85 = vmatprep.subr.mxu0 0.0
    %86 = vmatpush1.msra.mxu0 0.0
    %87 = vmatprep.subr.mxu0 0.0
    %88 = vmatpush1.msra.mxu0 0.0
    %89 = vmatprep.subr.mxu0 0.0
    %90 = vmatpush1.msra.mxu0 0.0
    %91 = vmatprep.subr.mxu0 0.0
    %92 = vmatpush1.msra.mxu0 0.0
    %93 = vmatprep.subr.mxu0 0.0
    %94 = vmatpush1.msra.mxu0 0.0
    %95 = vmatprep.subr.mxu0 0.0
    %96 = vmatpush1.msra.mxu0 0.0
    %97 = vmatprep.subr.mxu0 0.0
    %98 = vmatpush1.msra.mxu0 0.0
    %99 = vmatprep.subr.mxu0 0.0
    %100 = vmatpush1.msra.mxu0 0.0
    %101 = vmatprep.subr.mxu0 0.0
    %102 = vmatpush1.msra.mxu0 0.0
    %103 = vmatprep.subr.mxu0 0.0
    %104 = vmatpush1.msra.mxu0 0.0
    %105 = vmatprep.subr.mxu0 0.0
    %106 = vmatpush1.msra.mxu0 0.0
    %107 = vmatprep.subr.mxu0 0.0
    %108 = vmatpush1.msra.mxu0 0.0
    %109 = vmatprep.subr.mxu0 0.0
    %110 = vmatpush1.msra.mxu0 0.0
    %111 = vmatprep.subr.mxu0 0.0
    %112 = vmatpush1.msra.mxu0 0.0
    %113 = vmatprep.subr.mxu0 0.0
    %114 = vmatpush1.msra.mxu0 0.0
    %115 = vmatprep.subr.mxu0 0.0
    %116 = vmatpush1.msra.mxu0 0.0
    %117 = vmatprep.subr.mxu0 0.0
    %118 = vmatpush1.msra.mxu0 0.0
    %119 = vmatprep.subr.mxu0 0.0
    %120 = vmatpush1.msra.mxu0 0.0
    %121 = vmatprep.subr.mxu0 0.0
    %122 = vmatpush1.msra.mxu0 0.0
    %123 = vmatprep.subr.mxu0 0.0
    %124 = vmatpush1.msra.mxu0 0.0
    %125 = vmatprep.subr.mxu0 0.0
    %126 = vmatpush1.msra.mxu0 0.0
    %127 = vmatprep.subr.mxu0 0.0
    %128 = vmatpush1.msra.mxu0 0.0
    %129 = vmatprep.subr.mxu0 0.0
    %130 = vmatpush1.msra.mxu0 0.0
    %131 = vmatprep.subr.mxu0 0.0
    %132 = vmatpush1.msra.mxu0 0.0
    %133 = vmatprep.subr.mxu0 0.0
    %134 = vmatpush1.msra.mxu0 0.0
    %135 = vmatprep.subr.mxu0 0.0
    %136 = vmatpush1.msra.mxu0 0.0
    %137 = vmatprep.subr.mxu0 0.0
    %138 = vmatpush1.msra.mxu0 0.0
    %139 = vmatprep.mubr.f32.mxu0 0.0
    %140 = vmatmul.mubr.f32.gmra.mrb[0].mxu0 %v66
    %v141 = vpop.f32.mrb[0].mxu0
    %v142 = vadd.f32 %v63, %v141
    %v143 = vpop.f32.mrb[0].mxu0
    %144 = vmatprep.mubr.f32.mxu0 0.0
    %145 = vmatmul.mubr.f32.gmra.mrb[0].mxu0 %v69
    %v146 = vpop.f32.mrb[0].mxu0
    %v147 = vadd.f32 %v63, %v146
    %v148 = vpop.f32.mrb[0].mxu0
    %149 = vdwg.mxu0
    %vm150 = vcmask 261120
    %v152 = vsel %vm150, 0.0, 0
    %154 = vmatprep.subr.mxu0 0.0
    %155 = vmatpush1.msra.mxu0 %v31
    %156 = vmatprep.subr.mxu0 0.0
    %157 = vmatpush1.msra.mxu0 %v32
    %158 = vmatprep.subr.mxu0 0.0
    %159 = vmatpush1.msra.mxu0 %v33
    %160 = vmatprep.subr.mxu0 0.0
    %161 = vmatpush1.msra.mxu0 %v34
    %162 = vmatprep.subr.mxu0 0.0
    %163 = vmatpush1.msra.mxu0 0.0
    %164 = vmatprep.subr.mxu0 0.0
    %165 = vmatpush1.msra.mxu0 0.0
    %166 = vmatprep.subr.mxu0 0.0
    %167 = vmatpush1.msra.mxu0 0.0
    %168 = vmatprep.subr.mxu0 0.0
    %169 = vmatpush1.msra.mxu0 0.0
    %170 = vmatprep.subr.mxu0 0.0
    %171 = vmatpush1.msra.mxu0 0.0
    %172 = vmatprep.subr.mxu0 0.0
    %173 = vmatpush1.msra.mxu0 0.0
    %174 = vmatprep.subr.mxu0 0.0
    %175 = vmatpush1.msra.mxu0 0.0
    %176 = vmatprep.subr.mxu0 0.0
    %177 = vmatpush1.msra.mxu0 0.0
    %178 = vmatprep.subr.mxu0 0.0
    %179 = vmatpush1.msra.mxu0 0.0
    %180 = vmatprep.subr.mxu0 0.0
    %181 = vmatpush1.msra.mxu0 0.0
    %182 = vmatprep.subr.mxu0 0.0
    %183 = vmatpush1.msra.mxu0 0.0
    %184 = vmatprep.subr.mxu0 0.0
    %185 = vmatpush1.msra.mxu0 0.0
    %186 = vmatprep.subr.mxu0 0.0
    %187 = vmatpush1.msra.mxu0 0.0
    %188 = vmatprep.subr.mxu0 0.0
    %189 = vmatpush1.msra.mxu0 0.0
    %190 = vmatprep.subr.mxu0 0.0
    %191 = vmatpush1.msra.mxu0 0.0
    %192 = vmatprep.subr.mxu0 0.0
    %193 = vmatpush1.msra.mxu0 0.0
    %194 = vmatprep.subr.mxu0 0.0
    %195 = vmatpush1.msra.mxu0 0.0
    %196 = vmatprep.subr.mxu0 0.0
    %197 = vmatpush1.msra.mxu0 0.0
    %198 = vmatprep.subr.mxu0 0.0
    %199 = vmatpush1.msra.mxu0 0.0
    %200 = vmatprep.subr.mxu0 0.0
    %201 = vmatpush1.msra.mxu0 0.0
    %202 = vmatprep.subr.mxu0 0.0
    %203 = vmatpush1.msra.mxu0 0.0
    %204 = vmatprep.subr.mxu0 0.0
    %205 = vmatpush1.msra.mxu0 0.0
    %206 = vmatprep.subr.mxu0 0.0
    %207 = vmatpush1.msra.mxu0 0.0
    %208 = vmatprep.subr.mxu0 0.0
    %209 = vmatpush1.msra.mxu0 0.0
    %210 = vmatprep.subr.mxu0 0.0
    %211 = vmatpush1.msra.mxu0 0.0
    %212 = vmatprep.subr.mxu0 0.0
    %213 = vmatpush1.msra.mxu0 0.0
    %214 = vmatprep.subr.mxu0 0.0
    %215 = vmatpush1.msra.mxu0 0.0
    %216 = vmatprep.subr.mxu0 0.0
    %217 = vmatpush1.msra.mxu0 0.0
    %218 = vmatprep.mubr.f32.mxu0 0.0
    %219 = vmatmul.mubr.f32.gmra.mrb[0].mxu0 %v152
    %v220 = vpop.f32.mrb[0].mxu0
    %v221 = vadd.f32 0.0, %v220
    %v222 = vpop.f32.mrb[0].mxu0
    %223 = vdwg.mxu0
    %v224 = vadd.f32 %v142, %v221
    %v225 = vxor.u32 %v224, 2147483648
    %v226 = vmul.f32 %v225, 1.442695
    %v227 = vpow.pop %v226
    %v228 = vadd.f32 %v227, 1.0
    %v229 = vrcp.pop %v228
    %v230 = vmul.f32 1.0, %v229
    %v231 = vmul.f32 %v230, 0.0
    %v233 = vsel %vm150, %v231, 0
    %235 = vmatprep.subr.mxu0 0.0
    %236 = vmatpush1.msra.mxu0 %v39
    %237 = vmatprep.subr.mxu0 0.0
    %238 = vmatpush1.msra.mxu0 %v40
    %239 = vmatprep.subr.mxu0 0.0
    %240 = vmatpush1.msra.mxu0 %v41
    %241 = vmatprep.subr.mxu0 0.0
    %242 = vmatpush1.msra.mxu0 %v42
    %243 = vmatprep.subr.mxu0 0.0
    %244 = vmatpush1.msra.mxu0 0.0
    %245 = vmatprep.subr.mxu0 0.0
    %246 = vmatpush1.msra.mxu0 0.0
    %247 = vmatprep.subr.mxu0 0.0
    %248 = vmatpush1.msra.mxu0 0.0
    %249 = vmatprep.subr.mxu0 0.0
    %250 = vmatpush1.msra.mxu0 0.0
    %251 = vmatprep.subr.mxu0 0.0
    %252 = vmatpush1.msra.mxu0 0.0
    %253 = vmatprep.subr.mxu0 0.0
    %254 = vmatpush1.msra.mxu0 0.0
    %255 = vmatprep.subr.mxu0 0.0
    %256 = vmatpush1.msra.mxu0 0.0
    %257 = vmatprep.subr.mxu0 0.0
    %258 = vmatpush1.msra.mxu0 0.0
    %259 = vmatprep.subr.mxu0 0.0
    %260 = vmatpush1.msra.mxu0 0.0
    %261 = vmatprep.subr.mxu0 0.0
    %262 = vmatpush1.msra.mxu0 0.0
    %263 = vmatprep.subr.mxu0 0.0
    %264 = vmatpush1.msra.mxu0 0.0
    %265 = vmatprep.subr.mxu0 0.0
    %266 = vmatpush1.msra.mxu0 0.0
    %267 = vmatprep.subr.mxu0 0.0
    %268 = vmatpush1.msra.mxu0 0.0
    %269 = vmatprep.subr.mxu0 0.0
    %270 = vmatpush1.msra.mxu0 0.0
    %271 = vmatprep.subr.mxu0 0.0
    %272 = vmatpush1.msra.mxu0 0.0
    %273 = vmatprep.subr.mxu0 0.0
    %274 = vmatpush1.msra.mxu0 0.0
    %275 = vmatprep.subr.mxu0 0.0
    %276 = vmatpush1.msra.mxu0 0.0
    %277 = vmatprep.subr.mxu0 0.0
    %278 = vmatpush1.msra.mxu0 0.0
    %279 = vmatprep.subr.mxu0 0.0
    %280 = vmatpush1.msra.mxu0 0.0
    %281 = vmatprep.subr.mxu0 0.0
    %282 = vmatpush1.msra.mxu0 0.0
    %283 = vmatprep.subr.mxu0 0.0
    %284 = vmatpush1.msra.mxu0 0.0
    %285 = vmatprep.subr.mxu0 0.0
    %286 = vmatpush1.msra.mxu0 0.0
    %287 = vmatprep.subr.mxu0 0.0
    %288 = vmatpush1.msra.mxu0 0.0
    %289 = vmatprep.subr.mxu0 0.0
    %290 = vmatpush1.msra.mxu0 0.0
    %291 = vmatprep.subr.mxu0 0.0
    %292 = vmatpush1.msra.mxu0 0.0
    %293 = vmatprep.subr.mxu0 0.0
    %294 = vmatpush1.msra.mxu0 0.0
    %295 = vmatprep.subr.mxu0 0.0
    %296 = vmatpush1.msra.mxu0 0.0
    %297 = vmatprep.subr.mxu0 0.0
    %298 = vmatpush1.msra.mxu0 0.0
    %299 = vmatprep.mubr.f32.mxu0 0.0
    %300 = vmatmul.mubr.f32.gmra.mrb[0].mxu0 %v233
    %v301 = vpop.f32.mrb[0].mxu0
    %v302 = vadd.f32 0.0, %v301
    %v303 = vpop.f32.mrb[0].mxu0
    %304 = vdwg.mxu0
    %306 = vrot.lane.b32.xlu0 %v302, 64
    %v307 = vpop.permute.xlu0 %306
    %v309 = vadd.f32 %v224, %v307
    %v310 = vtanh.pop %v309
    %v311 = vsub.f32 1.0, %v230
    %v312 = vmul.f32 %v311, 0.0
    %314 = vrot.lane.b32.xlu0 %v230, 32
    %v315 = vpop.permute.xlu0 %314
    %v317 = vmul.f32 %v310, %v315
    %319 = vrot.lane.b32.xlu0 %v317, 96
    %v320 = vpop.permute.xlu0 %319
    %v322 = vadd.f32 %v312, %v320
    %324 = vrot.lane.b32.xlu0 %v322, 96
    %v325 = vpop.permute.xlu0 %324
    %v326 = vsel %vm150, %v325, 0
    %328 = vmatprep.subr.mxu0 0.0
    %329 = vmatpush1.msra.mxu0 %v27
    %330 = vmatprep.subr.mxu0 0.0
    %331 = vmatpush1.msra.mxu0 %v28
    %332 = vmatprep.subr.mxu0 0.0
    %333 = vmatpush1.msra.mxu0 %v29
    %334 = vmatprep.subr.mxu0 0.0
    %335 = vmatpush1.msra.mxu0 %v30
    %336 = vmatprep.subr.mxu0 0.0
    %337 = vmatpush1.msra.mxu0 0.0
    %338 = vmatprep.subr.mxu0 0.0
    %339 = vmatpush1.msra.mxu0 0.0
    %340 = vmatprep.subr.mxu0 0.0
    %341 = vmatpush1.msra.mxu0 0.0
    %342 = vmatprep.subr.mxu0 0.0
    %343 = vmatpush1.msra.mxu0 0.0
    %344 = vmatprep.subr.mxu0 0.0
    %345 = vmatpush1.msra.mxu0 0.0
    %346 = vmatprep.subr.mxu0 0.0
    %347 = vmatpush1.msra.mxu0 0.0
    %348 = vmatprep.subr.mxu0 0.0
    %349 = vmatpush1.msra.mxu0 0.0
    %350 = vmatprep.subr.mxu0 0.0
    %351 = vmatpush1.msra.mxu0 0.0
    %352 = vmatprep.subr.mxu0 0.0
    %353 = vmatpush1.msra.mxu0 0.0
    %354 = vmatprep.subr.mxu0 0.0
    %355 = vmatpush1.msra.mxu0 0.0
    %356 = vmatprep.subr.mxu0 0.0
    %357 = vmatpush1.msra.mxu0 0.0
    %358 = vmatprep.subr.mxu0 0.0
    %359 = vmatpush1.msra.mxu0 0.0
    %360 = vmatprep.subr.mxu0 0.0
    %361 = vmatpush1.msra.mxu0 0.0
    %362 = vmatprep.subr.mxu0 0.0
    %363 = vmatpush1.msra.mxu0 0.0
    %364 = vmatprep.subr.mxu0 0.0
    %365 = vmatpush1.msra.mxu0 0.0
    %366 = vmatprep.subr.mxu0 0.0
    %367 = vmatpush1.msra.mxu0 0.0
    %368 = vmatprep.subr.mxu0 0.0
    %369 = vmatpush1.msra.mxu0 0.0
    %370 = vmatprep.subr.mxu0 0.0
    %371 = vmatpush1.msra.mxu0 0.0
    %372 = vmatprep.subr.mxu0 0.0
    %373 = vmatpush1.msra.mxu0 0.0
    %374 = vmatprep.subr.mxu0 0.0
    %375 = vmatpush1.msra.mxu0 0.0
    %376 = vmatprep.subr.mxu0 0.0
    %377 = vmatpush1.msra.mxu0 0.0
    %378 = vmatprep.subr.mxu0 0.0
    %379 = vmatpush1.msra.mxu0 0.0
    %380 = vmatprep.subr.mxu0 0.0
    %381 = vmatpush1.msra.mxu0 0.0
    %382 = vmatprep.subr.mxu0 0.0
    %383 = vmatpush1.msra.mxu0 0.0
    %384 = vmatprep.subr.mxu0 0.0
    %385 = vmatpush1.msra.mxu0 0.0
    %386 = vmatprep.subr.mxu0 0.0
    %387 = vmatpush1.msra.mxu0 0.0
    %388 = vmatprep.subr.mxu0 0.0
    %389 = vmatpush1.msra.mxu0 0.0
    %390 = vmatprep.subr.mxu0 0.0
    %391 = vmatpush1.msra.mxu0 0.0
    %392 = vmatprep.mubr.f32.mxu0 0.0
    %393 = vmatmul.mubr.f32.gmra.mrb[0].mxu0 %v326
    %v394 = vpop.f32.mrb[0].mxu0
    %v395 = vadd.f32 %v52, %v394
    %v396 = vpop.f32.mrb[0].mxu0
    %397 = vdwg.mxu0
    %398 = vmatprep.subr.mxu0 0.0
    %399 = vmatpush1.msra.mxu0 %v35
    %400 = vmatprep.subr.mxu0 0.0
    %401 = vmatpush1.msra.mxu0 %v36
    %402 = vmatprep.subr.mxu0 0.0
    %403 = vmatpush1.msra.mxu0 %v37
    %404 = vmatprep.subr.mxu0 0.0
    %405 = vmatpush1.msra.mxu0 %v38
    %406 = vmatprep.subr.mxu0 0.0
    %407 = vmatpush1.msra.mxu0 0.0
    %408 = vmatprep.subr.mxu0 0.0
    %409 = vmatpush1.msra.mxu0 0.0
    %410 = vmatprep.subr.mxu0 0.0
    %411 = vmatpush1.msra.mxu0 0.0
    %412 = vmatprep.subr.mxu0 0.0
    %413 = vmatpush1.msra.mxu0 0.0
    %414 = vmatprep.subr.mxu0 0.0
    %415 = vmatpush1.msra.mxu0 0.0
    %416 = vmatprep.subr.mxu0 0.0
    %417 = vmatpush1.msra.mxu0 0.0
    %418 = vmatprep.subr.mxu0 0.0
    %419 = vmatpush1.msra.mxu0 0.0
    %420 = vmatprep.subr.mxu0 0.0
    %421 = vmatpush1.msra.mxu0 0.0
    %422 = vmatprep.subr.mxu0 0.0
    %423 = vmatpush1.msra.mxu0 0.0
    %424 = vmatprep.subr.mxu0 0.0
    %425 = vmatpush1.msra.mxu0 0.0
    %426 = vmatprep.subr.mxu0 0.0
    %427 = vmatpush1.msra.mxu0 0.0
    %428 = vmatprep.subr.mxu0 0.0
    %429 = vmatpush1.msra.mxu0 0.0
    %430 = vmatprep.subr.mxu0 0.0
    %431 = vmatpush1.msra.mxu0 0.0
    %432 = vmatprep.subr.mxu0 0.0
    %433 = vmatpush1.msra.mxu0 0.0
    %434 = vmatprep.subr.mxu0 0.0
    %435 = vmatpush1.msra.mxu0 0.0
    %436 = vmatprep.subr.mxu0 0.0
    %437 = vmatpush1.msra.mxu0 0.0
    %438 = vmatprep.subr.mxu0 0.0
    %439 = vmatpush1.msra.mxu0 0.0
    %440 = vmatprep.subr.mxu0 0.0
    %441 = vmatpush1.msra.mxu0 0.0
    %442 = vmatprep.subr.mxu0 0.0
    %443 = vmatpush1.msra.mxu0 0.0
    %444 = vmatprep.subr.mxu0 0.0
    %445 = vmatpush1.msra.mxu0 0.0
    %446 = vmatprep.subr.mxu0 0.0
    %447 = vmatpush1.msra.mxu0 0.0
    %448 = vmatprep.subr.mxu0 0.0
    %449 = vmatpush1.msra.mxu0 0.0
    %450 = vmatprep.subr.mxu0 0.0
    %451 = vmatpush1.msra.mxu0 0.0
    %452 = vmatprep.subr.mxu0 0.0
    %453 = vmatpush1.msra.mxu0 0.0
    %454 = vmatprep.subr.mxu0 0.0
    %455 = vmatpush1.msra.mxu0 0.0
    %456 = vmatprep.subr.mxu0 0.0
    %457 = vmatpush1.msra.mxu0 0.0
    %458 = vmatprep.subr.mxu0 0.0
    %459 = vmatpush1.msra.mxu0 0.0
    %460 = vmatprep.subr.mxu0 0.0
    %461 = vmatpush1.msra.mxu0 0.0
    %462 = vmatprep.mubr.f32.mxu0 0.0
    %463 = vmatmul.mubr.f32.gmra.mrb[0].mxu0 %v152
    %v464 = vpop.f32.mrb[0].mxu0
    %v465 = vadd.f32 0.0, %v464
    %v466 = vpop.f32.mrb[0].mxu0
    %467 = vdwg.mxu0
    %v468 = vadd.f32 %v395, %v465
    %v469 = vxor.u32 %v468, 2147483648
    %v470 = vmul.f32 %v469, 1.442695
    %v471 = vpow.pop %v470
    %v472 = vadd.f32 %v471, 1.0
    %v473 = vrcp.pop %v472
    %v474 = vmul.f32 1.0, %v473
    %v475 = vmul.f32 %v474, 0.0
    %v477 = vsel %vm150, %v475, 0
    %479 = vmatprep.subr.mxu0 0.0
    %480 = vmatpush1.msra.mxu0 %v43
    %481 = vmatprep.subr.mxu0 0.0
    %482 = vmatpush1.msra.mxu0 %v44
    %483 = vmatprep.subr.mxu0 0.0
    %484 = vmatpush1.msra.mxu0 %v45
    %485 = vmatprep.subr.mxu0 0.0
    %486 = vmatpush1.msra.mxu0 %v46
    %487 = vmatprep.subr.mxu0 0.0
    %488 = vmatpush1.msra.mxu0 0.0
    %489 = vmatprep.subr.mxu0 0.0
    %490 = vmatpush1.msra.mxu0 0.0
    %491 = vmatprep.subr.mxu0 0.0
    %492 = vmatpush1.msra.mxu0 0.0
    %493 = vmatprep.subr.mxu0 0.0
    %494 = vmatpush1.msra.mxu0 0.0
    %495 = vmatprep.subr.mxu0 0.0
    %496 = vmatpush1.msra.mxu0 0.0
    %497 = vmatprep.subr.mxu0 0.0
    %498 = vmatpush1.msra.mxu0 0.0
    %499 = vmatprep.subr.mxu0 0.0
    %500 = vmatpush1.msra.mxu0 0.0
    %501 = vmatprep.subr.mxu0 0.0
    %502 = vmatpush1.msra.mxu0 0.0
    %503 = vmatprep.subr.mxu0 0.0
    %504 = vmatpush1.msra.mxu0 0.0
    %505 = vmatprep.subr.mxu0 0.0
    %506 = vmatpush1.msra.mxu0 0.0
    %507 = vmatprep.subr.mxu0 0.0
    %508 = vmatpush1.msra.mxu0 0.0
    %509 = vmatprep.subr.mxu0 0.0
    %510 = vmatpush1.msra.mxu0 0.0
    %511 = vmatprep.subr.mxu0 0.0
    %512 = vmatpush1.msra.mxu0 0.0
    %513 = vmatprep.subr.mxu0 0.0
    %514 = vmatpush1.msra.mxu0 0.0
    %515 = vmatprep.subr.mxu0 0.0
    %516 = vmatpush1.msra.mxu0 0.0
    %517 = vmatprep.subr.mxu0 0.0
    %518 = vmatpush1.msra.mxu0 0.0
    %519 = vmatprep.subr.mxu0 0.0
    %520 = vmatpush1.msra.mxu0 0.0
    %521 = vmatprep.subr.mxu0 0.0
    %522 = vmatpush1.msra.mxu0 0.0
    %523 = vmatprep.subr.mxu0 0.0
    %524 = vmatpush1.msra.mxu0 0.0
    %525 = vmatprep.subr.mxu0 0.0
    %526 = vmatpush1.msra.mxu0 0.0
    %527 = vmatprep.subr.mxu0 0.0
    %528 = vmatpush1.msra.mxu0 0.0
    %529 = vmatprep.subr.mxu0 0.0
    %530 = vmatpush1.msra.mxu0 0.0
    %531 = vmatprep.subr.mxu0 0.0
    %532 = vmatpush1.msra.mxu0 0.0
    %533 = vmatprep.subr.mxu0 0.0
    %534 = vmatpush1.msra.mxu0 0.0
    %535 = vmatprep.subr.mxu0 0.0
    %536 = vmatpush1.msra.mxu0 0.0
    %537 = vmatprep.subr.mxu0 0.0
    %538 = vmatpush1.msra.mxu0 0.0
    %539 = vmatprep.subr.mxu0 0.0
    %540 = vmatpush1.msra.mxu0 0.0
    %541 = vmatprep.subr.mxu0 0.0
    %542 = vmatpush1.msra.mxu0 0.0
    %543 = vmatprep.mubr.f32.mxu0 0.0
    %544 = vmatmul.mubr.f32.gmra.mrb[0].mxu0 %v477
    %v545 = vpop.f32.mrb[0].mxu0
    %v546 = vadd.f32 0.0, %v545
    %v547 = vpop.f32.mrb[0].mxu0
    %548 = vdwg.mxu0
    %550 = vrot.lane.b32.xlu0 %v546, 64
    %v551 = vpop.permute.xlu0 %550
    %v553 = vadd.f32 %v468, %v551
    %v554 = vtanh.pop %v553
    %v555 = vsub.f32 1.0, %v474
    %v556 = vmul.f32 %v555, 0.0
    %558 = vrot.lane.b32.xlu0 %v474, 32
    %v559 = vpop.permute.xlu0 %558
    %v561 = vmul.f32 %v554, %v559
    %563 = vrot.lane.b32.xlu0 %v561, 96
    %v564 = vpop.permute.xlu0 %563
    %v566 = vadd.f32 %v556, %v564
    %567 = vmatprep.subr.mxu0 0.0
    %568 = vmatpush1.msra.mxu0 %v31
    %569 = vmatprep.subr.mxu0 0.0
    %570 = vmatpush1.msra.mxu0 %v32
    %571 = vmatprep.subr.mxu0 0.0
    %572 = vmatpush1.msra.mxu0 %v33
    %573 = vmatprep.subr.mxu0 0.0
    %574 = vmatpush1.msra.mxu0 %v34
    %575 = vmatprep.subr.mxu0 0.0
    %576 = vmatpush1.msra.mxu0 0.0
    %577 = vmatprep.subr.mxu0 0.0
    %578 = vmatpush1.msra.mxu0 0.0
    %579 = vmatprep.subr.mxu0 0.0
    %580 = vmatpush1.msra.mxu0 0.0
    %581 = vmatprep.subr.mxu0 0.0
    %582 = vmatpush1.msra.mxu0 0.0
    %583 = vmatprep.subr.mxu0 0.0
    %584 = vmatpush1.msra.mxu0 0.0
    %585 = vmatprep.subr.mxu0 0.0
    %586 = vmatpush1.msra.mxu0 0.0
    %587 = vmatprep.subr.mxu0 0.0
    %588 = vmatpush1.msra.mxu0 0.0
    %589 = vmatprep.subr.mxu0 0.0
    %590 = vmatpush1.msra.mxu0 0.0
    %591 = vmatprep.subr.mxu0 0.0
    %592 = vmatpush1.msra.mxu0 0.0
    %593 = vmatprep.subr.mxu0 0.0
    %594 = vmatpush1.msra.mxu0 0.0
    %595 = vmatprep.subr.mxu0 0.0
    %596 = vmatpush1.msra.mxu0 0.0
    %597 = vmatprep.subr.mxu0 0.0
    %598 = vmatpush1.msra.mxu0 0.0
    %599 = vmatprep.subr.mxu0 0.0
    %600 = vmatpush1.msra.mxu0 0.0
    %601 = vmatprep.subr.mxu0 0.0
    %602 = vmatpush1.msra.mxu0 0.0
    %603 = vmatprep.subr.mxu0 0.0
    %604 = vmatpush1.msra.mxu0 0.0
    %605 = vmatprep.subr.mxu0 0.0
    %606 = vmatpush1.msra.mxu0 0.0
    %607 = vmatprep.subr.mxu0 0.0
    %608 = vmatpush1.msra.mxu0 0.0
    %609 = vmatprep.subr.mxu0 0.0
    %610 = vmatpush1.msra.mxu0 0.0
    %611 = vmatprep.subr.mxu0 0.0
    %612 = vmatpush1.msra.mxu0 0.0
    %613 = vmatprep.subr.mxu0 0.0
    %614 = vmatpush1.msra.mxu0 0.0
    %615 = vmatprep.subr.mxu0 0.0
    %616 = vmatpush1.msra.mxu0 0.0
    %617 = vmatprep.subr.mxu0 0.0
    %618 = vmatpush1.msra.mxu0 0.0
    %619 = vmatprep.subr.mxu0 0.0
    %620 = vmatpush1.msra.mxu0 0.0
    %621 = vmatprep.subr.mxu0 0.0
    %622 = vmatpush1.msra.mxu0 0.0
    %623 = vmatprep.subr.mxu0 0.0
    %624 = vmatpush1.msra.mxu0 0.0
    %625 = vmatprep.subr.mxu0 0.0
    %626 = vmatpush1.msra.mxu0 0.0
    %627 = vmatprep.subr.mxu0 0.0
    %628 = vmatpush1.msra.mxu0 0.0
    %629 = vmatprep.subr.mxu0 0.0
    %630 = vmatpush1.msra.mxu0 0.0
    %631 = vmatprep.mubr.f32.mxu0 0.0
    %632 = vmatmul.mubr.f32.gmra.mrb[0].mxu0 %v326
    %v633 = vpop.f32.mrb[0].mxu0
    %v634 = vadd.f32 0.0, %v633
    %v635 = vpop.f32.mrb[0].mxu0
    %636 = vdwg.mxu0
    %v638 = vrot.slane %v634, 6
    %v640 = vadd.f32 %v142, %v638
    %v641 = vxor.u32 %v640, 2147483648
    %v642 = vmul.f32 %v641, 1.442695
    %v643 = vpow.pop %v642
    %v644 = vadd.f32 %v643, 1.0
    %v645 = vrcp.pop %v644
    %v646 = vmul.f32 1.0, %v645
    %v648 = vrot.slane %v646, 2
    %649 = vrot.lane.b32.xlu0 %v648, 32
    %v650 = vpop.permute.xlu0 %649
    %v652 = vmul.f32 %v322, %v650
    %654 = vrot.lane.b32.xlu0 %v652, 96
    %v655 = vpop.permute.xlu0 %654
    %v656 = vsel %vm150, %v655, 0
    %658 = vmatprep.subr.mxu0 0.0
    %659 = vmatpush1.msra.mxu0 %v39
    %660 = vmatprep.subr.mxu0 0.0
    %661 = vmatpush1.msra.mxu0 %v40
    %662 = vmatprep.subr.mxu0 0.0
    %663 = vmatpush1.msra.mxu0 %v41
    %664 = vmatprep.subr.mxu0 0.0
    %665 = vmatpush1.msra.mxu0 %v42
    %666 = vmatprep.subr.mxu0 0.0
    %667 = vmatpush1.msra.mxu0 0.0
    %668 = vmatprep.subr.mxu0 0.0
    %669 = vmatpush1.msra.mxu0 0.0
    %670 = vmatprep.subr.mxu0 0.0
    %671 = vmatpush1.msra.mxu0 0.0
    %672 = vmatprep.subr.mxu0 0.0
    %673 = vmatpush1.msra.mxu0 0.0
    %674 = vmatprep.subr.mxu0 0.0
    %675 = vmatpush1.msra.mxu0 0.0
    %676 = vmatprep.subr.mxu0 0.0
    %677 = vmatpush1.msra.mxu0 0.0
    %678 = vmatprep.subr.mxu0 0.0
    %679 = vmatpush1.msra.mxu0 0.0
    %680 = vmatprep.subr.mxu0 0.0
    %681 = vmatpush1.msra.mxu0 0.0
    %682 = vmatprep.subr.mxu0 0.0
    %683 = vmatpush1.msra.mxu0 0.0
    %684 = vmatprep.subr.mxu0 0.0
    %685 = vmatpush1.msra.mxu0 0.0
    %686 = vmatprep.subr.mxu0 0.0
    %687 = vmatpush1.msra.mxu0 0.0
    %688 = vmatprep.subr.mxu0 0.0
    %689 = vmatpush1.msra.mxu0 0.0
    %690 = vmatprep.subr.mxu0 0.0
    %691 = vmatpush1.msra.mxu0 0.0
    %692 = vmatprep.subr.mxu0 0.0
    %693 = vmatpush1.msra.mxu0 0.0
    %694 = vmatprep.subr.mxu0 0.0
    %695 = vmatpush1.msra.mxu0 0.0
    %696 = vmatprep.subr.mxu0 0.0
    %697 = vmatpush1.msra.mxu0 0.0
    %698 = vmatprep.subr.mxu0 0.0
    %699 = vmatpush1.msra.mxu0 0.0
    %700 = vmatprep.subr.mxu0 0.0
    %701 = vmatpush1.msra.mxu0 0.0
    %702 = vmatprep.subr.mxu0 0.0
    %703 = vmatpush1.msra.mxu0 0.0
    %704 = vmatprep.subr.mxu0 0.0
    %705 = vmatpush1.msra.mxu0 0.0
    %706 = vmatprep.subr.mxu0 0.0
    %707 = vmatpush1.msra.mxu0 0.0
    %708 = vmatprep.subr.mxu0 0.0
    %709 = vmatpush1.msra.mxu0 0.0
    %710 = vmatprep.subr.mxu0 0.0
    %711 = vmatpush1.msra.mxu0 0.0
    %712 = vmatprep.subr.mxu0 0.0
    %713 = vmatpush1.msra.mxu0 0.0
    %714 = vmatprep.subr.mxu0 0.0
    %715 = vmatpush1.msra.mxu0 0.0
    %716 = vmatprep.subr.mxu0 0.0
    %717 = vmatpush1.msra.mxu0 0.0
    %718 = vmatprep.subr.mxu0 0.0
    %719 = vmatpush1.msra.mxu0 0.0
    %720 = vmatprep.subr.mxu0 0.0
    %721 = vmatpush1.msra.mxu0 0.0
    %722 = vmatprep.mubr.f32.mxu0 0.0
    %723 = vmatmul.mubr.f32.gmra.mrb[0].mxu0 %v656
    %v724 = vpop.f32.mrb[0].mxu0
    %v725 = vadd.f32 0.0, %v724
    %v726 = vpop.f32.mrb[0].mxu0
    %727 = vdwg.mxu0
    %v729 = vrot.slane %v725, 6
    %730 = vrot.lane.b32.xlu0 %v729, 64
    %v731 = vpop.permute.xlu0 %730
    %v733 = vadd.f32 %v640, %v731
    %v734 = vtanh.pop %v733
    %v735 = vsub.f32 1.0, %v646
    %v737 = vrot.slane %v735, 2
    %v739 = vmul.f32 %v322, %v737
    %740 = vrot.lane.b32.xlu0 %v646, 32
    %v741 = vpop.permute.xlu0 %740
    %v743 = vmul.f32 %v734, %v741
    %v745 = vrot.slane %v743, 2
    %746 = vrot.lane.b32.xlu0 %v745, 96
    %v747 = vpop.permute.xlu0 %746
    %v749 = vadd.f32 %v739, %v747
    %751 = vrot.lane.b32.xlu0 %v749, 96
    %v752 = vpop.permute.xlu0 %751
    %v753 = vsel %vm150, %v752, 0
    %755 = vmatprep.subr.mxu0 0.0
    %756 = vmatpush1.msra.mxu0 %v27
    %757 = vmatprep.subr.mxu0 0.0
    %758 = vmatpush1.msra.mxu0 %v28
    %759 = vmatprep.subr.mxu0 0.0
    %760 = vmatpush1.msra.mxu0 %v29
    %761 = vmatprep.subr.mxu0 0.0
    %762 = vmatpush1.msra.mxu0 %v30
    %763 = vmatprep.subr.mxu0 0.0
    %764 = vmatpush1.msra.mxu0 0.0
    %765 = vmatprep.subr.mxu0 0.0
    %766 = vmatpush1.msra.mxu0 0.0
    %767 = vmatprep.subr.mxu0 0.0
    %768 = vmatpush1.msra.mxu0 0.0
    %769 = vmatprep.subr.mxu0 0.0
    %770 = vmatpush1.msra.mxu0 0.0
    %771 = vmatprep.subr.mxu0 0.0
    %772 = vmatpush1.msra.mxu0 0.0
    %773 = vmatprep.subr.mxu0 0.0
    %774 = vmatpush1.msra.mxu0 0.0
    %775 = vmatprep.subr.mxu0 0.0
    %776 = vmatpush1.msra.mxu0 0.0
    %777 = vmatprep.subr.mxu0 0.0
    %778 = vmatpush1.msra.mxu0 0.0
    %779 = vmatprep.subr.mxu0 0.0
    %780 = vmatpush1.msra.mxu0 0.0
    %781 = vmatprep.subr.mxu0 0.0
    %782 = vmatpush1.msra.mxu0 0.0
    %783 = vmatprep.subr.mxu0 0.0
    %784 = vmatpush1.msra.mxu0 0.0
    %785 = vmatprep.subr.mxu0 0.0
    %786 = vmatpush1.msra.mxu0 0.0
    %787 = vmatprep.subr.mxu0 0.0
    %788 = vmatpush1.msra.mxu0 0.0
    %789 = vmatprep.subr.mxu0 0.0
    %790 = vmatpush1.msra.mxu0 0.0
    %791 = vmatprep.subr.mxu0 0.0
    %792 = vmatpush1.msra.mxu0 0.0
    %793 = vmatprep.subr.mxu0 0.0
    %794 = vmatpush1.msra.mxu0 0.0
    %795 = vmatprep.subr.mxu0 0.0
    %796 = vmatpush1.msra.mxu0 0.0
    %797 = vmatprep.subr.mxu0 0.0
    %798 = vmatpush1.msra.mxu0 0.0
    %799 = vmatprep.subr.mxu0 0.0
    %800 = vmatpush1.msra.mxu0 0.0
    %801 = vmatprep.subr.mxu0 0.0
    %802 = vmatpush1.msra.mxu0 0.0
    %803 = vmatprep.subr.mxu0 0.0
    %804 = vmatpush1.msra.mxu0 0.0
    %805 = vmatprep.subr.mxu0 0.0
    %806 = vmatpush1.msra.mxu0 0.0
    %807 = vmatprep.subr.mxu0 0.0
    %808 = vmatpush1.msra.mxu0 0.0
    %809 = vmatprep.subr.mxu0 0.0
    %810 = vmatpush1.msra.mxu0 0.0
    %811 = vmatprep.subr.mxu0 0.0
    %812 = vmatpush1.msra.mxu0 0.0
    %813 = vmatprep.subr.mxu0 0.0
    %814 = vmatpush1.msra.mxu0 0.0
    %815 = vmatprep.subr.mxu0 0.0
    %816 = vmatpush1.msra.mxu0 0.0
    %817 = vmatprep.subr.mxu0 0.0
    %818 = vmatpush1.msra.mxu0 0.0
    %819 = vmatprep.mubr.f32.mxu0 0.0
    %820 = vmatmul.mubr.f32.gmra.mrb[0].mxu0 %v753
    %v821 = vpop.f32.mrb[0].mxu0
    %v822 = vadd.f32 %v52, %v821
    %v823 = vpop.f32.mrb[0].mxu0
    %824 = vdwg.mxu0
    %826 = vrot.lane.b32.xlu0 %v566, 96
    %v827 = vpop.permute.xlu0 %826
    %v828 = vsel %vm150, %v827, 0
    %830 = vmatprep.subr.mxu0 0.0
    %831 = vmatpush1.msra.mxu0 %v35
    %832 = vmatprep.subr.mxu0 0.0
    %833 = vmatpush1.msra.mxu0 %v36
    %834 = vmatprep.subr.mxu0 0.0
    %835 = vmatpush1.msra.mxu0 %v37
    %836 = vmatprep.subr.mxu0 0.0
    %837 = vmatpush1.msra.mxu0 %v38
    %838 = vmatprep.subr.mxu0 0.0
    %839 = vmatpush1.msra.mxu0 0.0
    %840 = vmatprep.subr.mxu0 0.0
    %841 = vmatpush1.msra.mxu0 0.0
    %842 = vmatprep.subr.mxu0 0.0
    %843 = vmatpush1.msra.mxu0 0.0
    %844 = vmatprep.subr.mxu0 0.0
    %845 = vmatpush1.msra.mxu0 0.0
    %846 = vmatprep.subr.mxu0 0.0
    %847 = vmatpush1.msra.mxu0 0.0
    %848 = vmatprep.subr.mxu0 0.0
    %849 = vmatpush1.msra.mxu0 0.0
    %850 = vmatprep.subr.mxu0 0.0
    %851 = vmatpush1.msra.mxu0 0.0
    %852 = vmatprep.subr.mxu0 0.0
    %853 = vmatpush1.msra.mxu0 0.0
    %854 = vmatprep.subr.mxu0 0.0
    %855 = vmatpush1.msra.mxu0 0.0
    %856 = vmatprep.subr.mxu0 0.0
    %857 = vmatpush1.msra.mxu0 0.0
    %858 = vmatprep.subr.mxu0 0.0
    %859 = vmatpush1.msra.mxu0 0.0
    %860 = vmatprep.subr.mxu0 0.0
    %861 = vmatpush1.msra.mxu0 0.0
    %862 = vmatprep.subr.mxu0 0.0
    %863 = vmatpush1.msra.mxu0 0.0
    %864 = vmatprep.subr.mxu0 0.0
    %865 = vmatpush1.msra.mxu0 0.0
    %866 = vmatprep.subr.mxu0 0.0
    %867 = vmatpush1.msra.mxu0 0.0
    %868 = vmatprep.subr.mxu0 0.0
    %869 = vmatpush1.msra.mxu0 0.0
    %870 = vmatprep.subr.mxu0 0.0
    %871 = vmatpush1.msra.mxu0 0.0
    %872 = vmatprep.subr.mxu0 0.0
    %873 = vmatpush1.msra.mxu0 0.0
    %874 = vmatprep.subr.mxu0 0.0
    %875 = vmatpush1.msra.mxu0 0.0
    %876 = vmatprep.subr.mxu0 0.0
    %877 = vmatpush1.msra.mxu0 0.0
    %878 = vmatprep.subr.mxu0 0.0
    %879 = vmatpush1.msra.mxu0 0.0
    %880 = vmatprep.subr.mxu0 0.0
    %881 = vmatpush1.msra.mxu0 0.0
    %882 = vmatprep.subr.mxu0 0.0
    %883 = vmatpush1.msra.mxu0 0.0
    %884 = vmatprep.subr.mxu0 0.0
    %885 = vmatpush1.msra.mxu0 0.0
    %886 = vmatprep.subr.mxu0 0.0
    %887 = vmatpush1.msra.mxu0 0.0
    %888 = vmatprep.subr.mxu0 0.0
    %889 = vmatpush1.msra.mxu0 0.0
    %890 = vmatprep.subr.mxu0 0.0
    %891 = vmatpush1.msra.mxu0 0.0
    %892 = vmatprep.subr.mxu0 0.0
    %893 = vmatpush1.msra.mxu0 0.0
    %894 = vmatprep.mubr.f32.mxu0 0.0
    %895 = vmatmul.mubr.f32.gmra.mrb[0].mxu0 %v828
    %v896 = vpop.f32.mrb[0].mxu0
    %v897 = vadd.f32 0.0, %v896
    %v898 = vpop.f32.mrb[0].mxu0
    %899 = vdwg.mxu0
    %v900 = vadd.f32 %v822, %v897
    %v901 = vxor.u32 %v900, 2147483648
    %v902 = vmul.f32 %v901, 1.442695
    %v903 = vpow.pop %v902
    %v904 = vadd.f32 %v903, 1.0
    %v905 = vrcp.pop %v904
    %v906 = vmul.f32 1.0, %v905
    %908 = vrot.lane.b32.xlu0 %v906, 32
    %v909 = vpop.permute.xlu0 %908
    %v911 = vmul.f32 %v566, %v909
    %913 = vrot.lane.b32.xlu0 %v911, 96
    %v914 = vpop.permute.xlu0 %913
    %v915 = vsel %vm150, %v914, 0
    %917 = vmatprep.subr.mxu0 0.0
    %918 = vmatpush1.msra.mxu0 %v43
    %919 = vmatprep.subr.mxu0 0.0
    %920 = vmatpush1.msra.mxu0 %v44
    %921 = vmatprep.subr.mxu0 0.0
    %922 = vmatpush1.msra.mxu0 %v45
    %923 = vmatprep.subr.mxu0 0.0
    %924 = vmatpush1.msra.mxu0 %v46
    %925 = vmatprep.subr.mxu0 0.0
    %926 = vmatpush1.msra.mxu0 0.0
    %927 = vmatprep.subr.mxu0 0.0
    %928 = vmatpush1.msra.mxu0 0.0
    %929 = vmatprep.subr.mxu0 0.0
    %930 = vmatpush1.msra.mxu0 0.0
    %931 = vmatprep.subr.mxu0 0.0
    %932 = vmatpush1.msra.mxu0 0.0
    %933 = vmatprep.subr.mxu0 0.0
    %934 = vmatpush1.msra.mxu0 0.0
    %935 = vmatprep.subr.mxu0 0.0
    %936 = vmatpush1.msra.mxu0 0.0
    %937 = vmatprep.subr.mxu0 0.0
    %938 = vmatpush1.msra.mxu0 0.0
    %939 = vmatprep.subr.mxu0 0.0
    %940 = vmatpush1.msra.mxu0 0.0
    %941 = vmatprep.subr.mxu0 0.0
    %942 = vmatpush1.msra.mxu0 0.0
    %943 = vmatprep.subr.mxu0 0.0
    %944 = vmatpush1.msra.mxu0 0.0
    %945 = vmatprep.subr.mxu0 0.0
    %946 = vmatpush1.msra.mxu0 0.0
    %947 = vmatprep.subr.mxu0 0.0
    %948 = vmatpush1.msra.mxu0 0.0
    %949 = vmatprep.subr.mxu0 0.0
    %950 = vmatpush1.msra.mxu0 0.0
    %951 = vmatprep.subr.mxu0 0.0
    %952 = vmatpush1.msra.mxu0 0.0
    %953 = vmatprep.subr.mxu0 0.0
    %954 = vmatpush1.msra.mxu0 0.0
    %955 = vmatprep.subr.mxu0 0.0
    %956 = vmatpush1.msra.mxu0 0.0
    %957 = vmatprep.subr.mxu0 0.0
    %958 = vmatpush1.msra.mxu0 0.0
    %959 = vmatprep.subr.mxu0 0.0
    %960 = vmatpush1.msra.mxu0 0.0
    %961 = vmatprep.subr.mxu0 0.0
    %962 = vmatpush1.msra.mxu0 0.0
    %963 = vmatprep.subr.mxu0 0.0
    %964 = vmatpush1.msra.mxu0 0.0
    %965 = vmatprep.subr.mxu0 0.0
    %966 = vmatpush1.msra.mxu0 0.0
    %967 = vmatprep.subr.mxu0 0.0
    %968 = vmatpush1.msra.mxu0 0.0
    %969 = vmatprep.subr.mxu0 0.0
    %970 = vmatpush1.msra.mxu0 0.0
    %971 = vmatprep.subr.mxu0 0.0
    %972 = vmatpush1.msra.mxu0 0.0
    %973 = vmatprep.subr.mxu0 0.0
    %974 = vmatpush1.msra.mxu0 0.0
    %975 = vmatprep.subr.mxu0 0.0
    %976 = vmatpush1.msra.mxu0 0.0
    %977 = vmatprep.subr.mxu0 0.0
    %978 = vmatpush1.msra.mxu0 0.0
    %979 = vmatprep.subr.mxu0 0.0
    %980 = vmatpush1.msra.mxu0 0.0
    %981 = vmatprep.mubr.f32.mxu0 0.0
    %982 = vmatmul.mubr.f32.gmra.mrb[0].mxu0 %v915
    %v983 = vpop.f32.mrb[0].mxu0
    %v984 = vadd.f32 0.0, %v983
    %v985 = vpop.f32.mrb[0].mxu0
    %986 = vdwg.mxu0
    %988 = vrot.lane.b32.xlu0 %v984, 64
    %v989 = vpop.permute.xlu0 %988
    %v991 = vadd.f32 %v900, %v989
    %v992 = vtanh.pop %v991
    %v993 = vsub.f32 1.0, %v906
    %v994 = vmul.f32 %v566, %v993
    %v995 = vmul.f32 %v992, %v909
    %997 = vrot.lane.b32.xlu0 %v995, 96
    %v998 = vpop.permute.xlu0 %997
    %v1000 = vadd.f32 %v994, %v998
    %1001 = vmatprep.subr.mxu0 0.0
    %1002 = vmatpush1.msra.mxu0 %v31
    %1003 = vmatprep.subr.mxu0 0.0
    %1004 = vmatpush1.msra.mxu0 %v32
    %1005 = vmatprep.subr.mxu0 0.0
    %1006 = vmatpush1.msra.mxu0 %v33
    %1007 = vmatprep.subr.mxu0 0.0
    %1008 = vmatpush1.msra.mxu0 %v34
    %1009 = vmatprep.subr.mxu0 0.0
    %1010 = vmatpush1.msra.mxu0 0.0
    %1011 = vmatprep.subr.mxu0 0.0
    %1012 = vmatpush1.msra.mxu0 0.0
    %1013 = vmatprep.subr.mxu0 0.0
    %1014 = vmatpush1.msra.mxu0 0.0
    %1015 = vmatprep.subr.mxu0 0.0
    %1016 = vmatpush1.msra.mxu0 0.0
    %1017 = vmatprep.subr.mxu0 0.0
    %1018 = vmatpush1.msra.mxu0 0.0
    %1019 = vmatprep.subr.mxu0 0.0
    %1020 = vmatpush1.msra.mxu0 0.0
    %1021 = vmatprep.subr.mxu0 0.0
    %1022 = vmatpush1.msra.mxu0 0.0
    %1023 = vmatprep.subr.mxu0 0.0
    %1024 = vmatpush1.msra.mxu0 0.0
    %1025 = vmatprep.subr.mxu0 0.0
    %1026 = vmatpush1.msra.mxu0 0.0
    %1027 = vmatprep.subr.mxu0 0.0
    %1028 = vmatpush1.msra.mxu0 0.0
    %1029 = vmatprep.subr.mxu0 0.0
    %1030 = vmatpush1.msra.mxu0 0.0
    %1031 = vmatprep.subr.mxu0 0.0
    %1032 = vmatpush1.msra.mxu0 0.0
    %1033 = vmatprep.subr.mxu0 0.0
    %1034 = vmatpush1.msra.mxu0 0.0
    %1035 = vmatprep.subr.mxu0 0.0
    %1036 = vmatpush1.msra.mxu0 0.0
    %1037 = vmatprep.subr.mxu0 0.0
    %1038 = vmatpush1.msra.mxu0 0.0
    %1039 = vmatprep.subr.mxu0 0.0
    %1040 = vmatpush1.msra.mxu0 0.0
    %1041 = vmatprep.subr.mxu0 0.0
    %1042 = vmatpush1.msra.mxu0 0.0
    %1043 = vmatprep.subr.mxu0 0.0
    %1044 = vmatpush1.msra.mxu0 0.0
    %1045 = vmatprep.subr.mxu0 0.0
    %1046 = vmatpush1.msra.mxu0 0.0
    %1047 = vmatprep.subr.mxu0 0.0
    %1048 = vmatpush1.msra.mxu0 0.0
    %1049 = vmatprep.subr.mxu0 0.0
    %1050 = vmatpush1.msra.mxu0 0.0
    %1051 = vmatprep.subr.mxu0 0.0
    %1052 = vmatpush1.msra.mxu0 0.0
    %1053 = vmatprep.subr.mxu0 0.0
    %1054 = vmatpush1.msra.mxu0 0.0
    %1055 = vmatprep.subr.mxu0 0.0
    %1056 = vmatpush1.msra.mxu0 0.0
    %1057 = vmatprep.subr.mxu0 0.0
    %1058 = vmatpush1.msra.mxu0 0.0
    %1059 = vmatprep.subr.mxu0 0.0
    %1060 = vmatpush1.msra.mxu0 0.0
    %1061 = vmatprep.subr.mxu0 0.0
    %1062 = vmatpush1.msra.mxu0 0.0
    %1063 = vmatprep.subr.mxu0 0.0
    %1064 = vmatpush1.msra.mxu0 0.0
    %1065 = vmatprep.mubr.f32.mxu0 0.0
    %1066 = vmatmul.mubr.f32.gmra.mrb[0].mxu0 %v753
    %v1067 = vpop.f32.mrb[0].mxu0
    %v1068 = vadd.f32 0.0, %v1067
    %v1069 = vpop.f32.mrb[0].mxu0
    %1070 = vdwg.mxu0
    %v1072 = vrot.slane %v1068, 4
    %v1074 = vadd.f32 %v142, %v1072
    %v1075 = vxor.u32 %v1074, 2147483648
    %v1076 = vmul.f32 %v1075, 1.442695
    %v1077 = vpow.pop %v1076
    %v1078 = vadd.f32 %v1077, 1.0
    %v1079 = vrcp.pop %v1078
    %v1080 = vmul.f32 1.0, %v1079
    %v1082 = vrot.slane %v1080, 4
    %1083 = vrot.lane.b32.xlu0 %v1082, 32
    %v1084 = vpop.permute.xlu0 %1083
    %v1086 = vmul.f32 %v749, %v1084
    %1088 = vrot.lane.b32.xlu0 %v1086, 96
    %v1089 = vpop.permute.xlu0 %1088
    %v1090 = vsel %vm150, %v1089, 0
    %1092 = vmatprep.subr.mxu0 0.0
    %1093 = vmatpush1.msra.mxu0 %v39
    %1094 = vmatprep.subr.mxu0 0.0
    %1095 = vmatpush1.msra.mxu0 %v40
    %1096 = vmatprep.subr.mxu0 0.0
    %1097 = vmatpush1.msra.mxu0 %v41
    %1098 = vmatprep.subr.mxu0 0.0
    %1099 = vmatpush1.msra.mxu0 %v42
    %1100 = vmatprep.subr.mxu0 0.0
    %1101 = vmatpush1.msra.mxu0 0.0
    %1102 = vmatprep.subr.mxu0 0.0
    %1103 = vmatpush1.msra.mxu0 0.0
    %1104 = vmatprep.subr.mxu0 0.0
    %1105 = vmatpush1.msra.mxu0 0.0
    %1106 = vmatprep.subr.mxu0 0.0
    %1107 = vmatpush1.msra.mxu0 0.0
    %1108 = vmatprep.subr.mxu0 0.0
    %1109 = vmatpush1.msra.mxu0 0.0
    %1110 = vmatprep.subr.mxu0 0.0
    %1111 = vmatpush1.msra.mxu0 0.0
    %1112 = vmatprep.subr.mxu0 0.0
    %1113 = vmatpush1.msra.mxu0 0.0
    %1114 = vmatprep.subr.mxu0 0.0
    %1115 = vmatpush1.msra.mxu0 0.0
    %1116 = vmatprep.subr.mxu0 0.0
    %1117 = vmatpush1.msra.mxu0 0.0
    %1118 = vmatprep.subr.mxu0 0.0
    %1119 = vmatpush1.msra.mxu0 0.0
    %1120 = vmatprep.subr.mxu0 0.0
    %1121 = vmatpush1.msra.mxu0 0.0
    %1122 = vmatprep.subr.mxu0 0.0
    %1123 = vmatpush1.msra.mxu0 0.0
    %1124 = vmatprep.subr.mxu0 0.0
    %1125 = vmatpush1.msra.mxu0 0.0
    %1126 = vmatprep.subr.mxu0 0.0
    %1127 = vmatpush1.msra.mxu0 0.0
    %1128 = vmatprep.subr.mxu0 0.0
    %1129 = vmatpush1.msra.mxu0 0.0
    %1130 = vmatprep.subr.mxu0 0.0
    %1131 = vmatpush1.msra.mxu0 0.0
    %1132 = vmatprep.subr.mxu0 0.0
    %1133 = vmatpush1.msra.mxu0 0.0
    %1134 = vmatprep.subr.mxu0 0.0
    %1135 = vmatpush1.msra.mxu0 0.0
    %1136 = vmatprep.subr.mxu0 0.0
    %1137 = vmatpush1.msra.mxu0 0.0
    %1138 = vmatprep.subr.mxu0 0.0
    %1139 = vmatpush1.msra.mxu0 0.0
    %1140 = vmatprep.subr.mxu0 0.0
    %1141 = vmatpush1.msra.mxu0 0.0
    %1142 = vmatprep.subr.mxu0 0.0
    %1143 = vmatpush1.msra.mxu0 0.0
    %1144 = vmatprep.subr.mxu0 0.0
    %1145 = vmatpush1.msra.mxu0 0.0
    %1146 = vmatprep.subr.mxu0 0.0
    %1147 = vmatpush1.msra.mxu0 0.0
    %1148 = vmatprep.subr.mxu0 0.0
    %1149 = vmatpush1.msra.mxu0 0.0
    %1150 = vmatprep.subr.mxu0 0.0
    %1151 = vmatpush1.msra.mxu0 0.0
    %1152 = vmatprep.subr.mxu0 0.0
    %1153 = vmatpush1.msra.mxu0 0.0
    %1154 = vmatprep.subr.mxu0 0.0
    %1155 = vmatpush1.msra.mxu0 0.0
    %1156 = vmatprep.mubr.f32.mxu0 0.0
    %1157 = vmatmul.mubr.f32.gmra.mrb[0].mxu0 %v1090
    %v1158 = vpop.f32.mrb[0].mxu0
    %v1159 = vadd.f32 0.0, %v1158
    %v1160 = vpop.f32.mrb[0].mxu0
    %1161 = vdwg.mxu0
    %v1163 = vrot.slane %v1159, 4
    %1164 = vrot.lane.b32.xlu0 %v1163, 64
    %v1165 = vpop.permute.xlu0 %1164
    %v1167 = vadd.f32 %v1074, %v1165
    %v1168 = vtanh.pop %v1167
    %v1169 = vsub.f32 1.0, %v1080
    %v1171 = vrot.slane %v1169, 4
    %v1173 = vmul.f32 %v749, %v1171
    %1174 = vrot.lane.b32.xlu0 %v1080, 32
    %v1175 = vpop.permute.xlu0 %1174
    %v1177 = vmul.f32 %v1168, %v1175
    %v1179 = vrot.slane %v1177, 4
    %1180 = vrot.lane.b32.xlu0 %v1179, 96
    %v1181 = vpop.permute.xlu0 %1180
    %v1183 = vadd.f32 %v1173, %v1181
    %1185 = vrot.lane.b32.xlu0 %v1183, 96
    %v1186 = vpop.permute.xlu0 %1185
    %v1187 = vsel %vm150, %v1186, 0
    %1189 = vmatprep.subr.mxu0 0.0
    %1190 = vmatpush1.msra.mxu0 %v27
    %1191 = vmatprep.subr.mxu0 0.0
    %1192 = vmatpush1.msra.mxu0 %v28
    %1193 = vmatprep.subr.mxu0 0.0
    %1194 = vmatpush1.msra.mxu0 %v29
    %1195 = vmatprep.subr.mxu0 0.0
    %1196 = vmatpush1.msra.mxu0 %v30
    %1197 = vmatprep.subr.mxu0 0.0
    %1198 = vmatpush1.msra.mxu0 0.0
    %1199 = vmatprep.subr.mxu0 0.0
    %1200 = vmatpush1.msra.mxu0 0.0
    %1201 = vmatprep.subr.mxu0 0.0
    %1202 = vmatpush1.msra.mxu0 0.0
    %1203 = vmatprep.subr.mxu0 0.0
    %1204 = vmatpush1.msra.mxu0 0.0
    %1205 = vmatprep.subr.mxu0 0.0
    %1206 = vmatpush1.msra.mxu0 0.0
    %1207 = vmatprep.subr.mxu0 0.0
    %1208 = vmatpush1.msra.mxu0 0.0
    %1209 = vmatprep.subr.mxu0 0.0
    %1210 = vmatpush1.msra.mxu0 0.0
    %1211 = vmatprep.subr.mxu0 0.0
    %1212 = vmatpush1.msra.mxu0 0.0
    %1213 = vmatprep.subr.mxu0 0.0
    %1214 = vmatpush1.msra.mxu0 0.0
    %1215 = vmatprep.subr.mxu0 0.0
    %1216 = vmatpush1.msra.mxu0 0.0
    %1217 = vmatprep.subr.mxu0 0.0
    %1218 = vmatpush1.msra.mxu0 0.0
    %1219 = vmatprep.subr.mxu0 0.0
    %1220 = vmatpush1.msra.mxu0 0.0
    %1221 = vmatprep.subr.mxu0 0.0
    %1222 = vmatpush1.msra.mxu0 0.0
    %1223 = vmatprep.subr.mxu0 0.0
    %1224 = vmatpush1.msra.mxu0 0.0
    %1225 = vmatprep.subr.mxu0 0.0
    %1226 = vmatpush1.msra.mxu0 0.0
    %1227 = vmatprep.subr.mxu0 0.0
    %1228 = vmatpush1.msra.mxu0 0.0
    %1229 = vmatprep.subr.mxu0 0.0
    %1230 = vmatpush1.msra.mxu0 0.0
    %1231 = vmatprep.subr.mxu0 0.0
    %1232 = vmatpush1.msra.mxu0 0.0
    %1233 = vmatprep.subr.mxu0 0.0
    %1234 = vmatpush1.msra.mxu0 0.0
    %1235 = vmatprep.subr.mxu0 0.0
    %1236 = vmatpush1.msra.mxu0 0.0
    %1237 = vmatprep.subr.mxu0 0.0
    %1238 = vmatpush1.msra.mxu0 0.0
    %1239 = vmatprep.subr.mxu0 0.0
    %1240 = vmatpush1.msra.mxu0 0.0
    %1241 = vmatprep.subr.mxu0 0.0
    %1242 = vmatpush1.msra.mxu0 0.0
    %1243 = vmatprep.subr.mxu0 0.0
    %1244 = vmatpush1.msra.mxu0 0.0
    %1245 = vmatprep.subr.mxu0 0.0
    %1246 = vmatpush1.msra.mxu0 0.0
    %1247 = vmatprep.subr.mxu0 0.0
    %1248 = vmatpush1.msra.mxu0 0.0
    %1249 = vmatprep.subr.mxu0 0.0
    %1250 = vmatpush1.msra.mxu0 0.0
    %1251 = vmatprep.subr.mxu0 0.0
    %1252 = vmatpush1.msra.mxu0 0.0
    %1253 = vmatprep.mubr.f32.mxu0 0.0
    %1254 = vmatmul.mubr.f32.gmra.mrb[0].mxu0 %v1187
    %v1255 = vpop.f32.mrb[0].mxu0
    %v1256 = vadd.f32 %v52, %v1255
    %v1257 = vpop.f32.mrb[0].mxu0
    %1258 = vdwg.mxu0
    %1260 = vrot.lane.b32.xlu0 %v1000, 96
    %v1261 = vpop.permute.xlu0 %1260
    %v1262 = vsel %vm150, %v1261, 0
    %1264 = vmatprep.subr.mxu0 0.0
    %1265 = vmatpush1.msra.mxu0 %v35
    %1266 = vmatprep.subr.mxu0 0.0
    %1267 = vmatpush1.msra.mxu0 %v36
    %1268 = vmatprep.subr.mxu0 0.0
    %1269 = vmatpush1.msra.mxu0 %v37
    %1270 = vmatprep.subr.mxu0 0.0
    %1271 = vmatpush1.msra.mxu0 %v38
    %1272 = vmatprep.subr.mxu0 0.0
    %1273 = vmatpush1.msra.mxu0 0.0
    %1274 = vmatprep.subr.mxu0 0.0
    %1275 = vmatpush1.msra.mxu0 0.0
    %1276 = vmatprep.subr.mxu0 0.0
    %1277 = vmatpush1.msra.mxu0 0.0
    %1278 = vmatprep.subr.mxu0 0.0
    %1279 = vmatpush1.msra.mxu0 0.0
    %1280 = vmatprep.subr.mxu0 0.0
    %1281 = vmatpush1.msra.mxu0 0.0
    %1282 = vmatprep.subr.mxu0 0.0
    %1283 = vmatpush1.msra.mxu0 0.0
    %1284 = vmatprep.subr.mxu0 0.0
    %1285 = vmatpush1.msra.mxu0 0.0
    %1286 = vmatprep.subr.mxu0 0.0
    %1287 = vmatpush1.msra.mxu0 0.0
    %1288 = vmatprep.subr.mxu0 0.0
    %1289 = vmatpush1.msra.mxu0 0.0
    %1290 = vmatprep.subr.mxu0 0.0
    %1291 = vmatpush1.msra.mxu0 0.0
    %1292 = vmatprep.subr.mxu0 0.0
    %1293 = vmatpush1.msra.mxu0 0.0
    %1294 = vmatprep.subr.mxu0 0.0
    %1295 = vmatpush1.msra.mxu0 0.0
    %1296 = vmatprep.subr.mxu0 0.0
    %1297 = vmatpush1.msra.mxu0 0.0
    %1298 = vmatprep.subr.mxu0 0.0
    %1299 = vmatpush1.msra.mxu0 0.0
    %1300 = vmatprep.subr.mxu0 0.0
    %1301 = vmatpush1.msra.mxu0 0.0
    %1302 = vmatprep.subr.mxu0 0.0
    %1303 = vmatpush1.msra.mxu0 0.0
    %1304 = vmatprep.subr.mxu0 0.0
    %1305 = vmatpush1.msra.mxu0 0.0
    %1306 = vmatprep.subr.mxu0 0.0
    %1307 = vmatpush1.msra.mxu0 0.0
    %1308 = vmatprep.subr.mxu0 0.0
    %1309 = vmatpush1.msra.mxu0 0.0
    %1310 = vmatprep.subr.mxu0 0.0
    %1311 = vmatpush1.msra.mxu0 0.0
    %1312 = vmatprep.subr.mxu0 0.0
    %1313 = vmatpush1.msra.mxu0 0.0
    %1314 = vmatprep.subr.mxu0 0.0
    %1315 = vmatpush1.msra.mxu0 0.0
    %1316 = vmatprep.subr.mxu0 0.0
    %1317 = vmatpush1.msra.mxu0 0.0
    %1318 = vmatprep.subr.mxu0 0.0
    %1319 = vmatpush1.msra.mxu0 0.0
    %1320 = vmatprep.subr.mxu0 0.0
    %1321 = vmatpush1.msra.mxu0 0.0
    %1322 = vmatprep.subr.mxu0 0.0
    %1323 = vmatpush1.msra.mxu0 0.0
    %1324 = vmatprep.subr.mxu0 0.0
    %1325 = vmatpush1.msra.mxu0 0.0
    %1326 = vmatprep.subr.mxu0 0.0
    %1327 = vmatpush1.msra.mxu0 0.0
    %1328 = vmatprep.mubr.f32.mxu0 0.0
    %1329 = vmatmul.mubr.f32.gmra.mrb[0].mxu0 %v1262
    %v1330 = vpop.f32.mrb[0].mxu0
    %v1331 = vadd.f32 0.0, %v1330
    %v1332 = vpop.f32.mrb[0].mxu0
    %1333 = vdwg.mxu0
    %v1334 = vadd.f32 %v1256, %v1331
    %v1335 = vxor.u32 %v1334, 2147483648
    %v1336 = vmul.f32 %v1335, 1.442695
    %v1337 = vpow.pop %v1336
    %v1338 = vadd.f32 %v1337, 1.0
    %v1339 = vrcp.pop %v1338
    %v1340 = vmul.f32 1.0, %v1339
    %1342 = vrot.lane.b32.xlu0 %v1340, 32
    %v1343 = vpop.permute.xlu0 %1342
    %v1345 = vmul.f32 %v1000, %v1343
    %1347 = vrot.lane.b32.xlu0 %v1345, 96
    %v1348 = vpop.permute.xlu0 %1347
    %v1349 = vsel %vm150, %v1348, 0
    %1351 = vmatprep.subr.mxu0 0.0
    %1352 = vmatpush1.msra.mxu0 %v43
    %1353 = vmatprep.subr.mxu0 0.0
    %1354 = vmatpush1.msra.mxu0 %v44
    %1355 = vmatprep.subr.mxu0 0.0
    %1356 = vmatpush1.msra.mxu0 %v45
    %1357 = vmatprep.subr.mxu0 0.0
    %1358 = vmatpush1.msra.mxu0 %v46
    %1359 = vmatprep.subr.mxu0 0.0
    %1360 = vmatpush1.msra.mxu0 0.0
    %1361 = vmatprep.subr.mxu0 0.0
    %1362 = vmatpush1.msra.mxu0 0.0
    %1363 = vmatprep.subr.mxu0 0.0
    %1364 = vmatpush1.msra.mxu0 0.0
    %1365 = vmatprep.subr.mxu0 0.0
    %1366 = vmatpush1.msra.mxu0 0.0
    %1367 = vmatprep.subr.mxu0 0.0
    %1368 = vmatpush1.msra.mxu0 0.0
    %1369 = vmatprep.subr.mxu0 0.0
    %1370 = vmatpush1.msra.mxu0 0.0
    %1371 = vmatprep.subr.mxu0 0.0
    %1372 = vmatpush1.msra.mxu0 0.0
    %1373 = vmatprep.subr.mxu0 0.0
    %1374 = vmatpush1.msra.mxu0 0.0
    %1375 = vmatprep.subr.mxu0 0.0
    %1376 = vmatpush1.msra.mxu0 0.0
    %1377 = vmatprep.subr.mxu0 0.0
    %1378 = vmatpush1.msra.mxu0 0.0
    %1379 = vmatprep.subr.mxu0 0.0
    %1380 = vmatpush1.msra.mxu0 0.0
    %1381 = vmatprep.subr.mxu0 0.0
    %1382 = vmatpush1.msra.mxu0 0.0
    %1383 = vmatprep.subr.mxu0 0.0
    %1384 = vmatpush1.msra.mxu0 0.0
    %1385 = vmatprep.subr.mxu0 0.0
    %1386 = vmatpush1.msra.mxu0 0.0
    %1387 = vmatprep.subr.mxu0 0.0
    %1388 = vmatpush1.msra.mxu0 0.0
    %1389 = vmatprep.subr.mxu0 0.0
    %1390 = vmatpush1.msra.mxu0 0.0
    %1391 = vmatprep.subr.mxu0 0.0
    %1392 = vmatpush1.msra.mxu0 0.0
    %1393 = vmatprep.subr.mxu0 0.0
    %1394 = vmatpush1.msra.mxu0 0.0
    %1395 = vmatprep.subr.mxu0 0.0
    %1396 = vmatpush1.msra.mxu0 0.0
    %1397 = vmatprep.subr.mxu0 0.0
    %1398 = vmatpush1.msra.mxu0 0.0
    %1399 = vmatprep.subr.mxu0 0.0
    %1400 = vmatpush1.msra.mxu0 0.0
    %1401 = vmatprep.subr.mxu0 0.0
    %1402 = vmatpush1.msra.mxu0 0.0
    %1403 = vmatprep.subr.mxu0 0.0
    %1404 = vmatpush1.msra.mxu0 0.0
    %1405 = vmatprep.subr.mxu0 0.0
    %1406 = vmatpush1.msra.mxu0 0.0
    %1407 = vmatprep.subr.mxu0 0.0
    %1408 = vmatpush1.msra.mxu0 0.0
    %1409 = vmatprep.subr.mxu0 0.0
    %1410 = vmatpush1.msra.mxu0 0.0
    %1411 = vmatprep.subr.mxu0 0.0
    %1412 = vmatpush1.msra.mxu0 0.0
    %1413 = vmatprep.subr.mxu0 0.0
    %1414 = vmatpush1.msra.mxu0 0.0
    %1415 = vmatprep.mubr.f32.mxu0 0.0
    %1416 = vmatmul.mubr.f32.gmra.mrb[0].mxu0 %v1349
    %v1417 = vpop.f32.mrb[0].mxu0
    %v1418 = vadd.f32 0.0, %v1417
    %v1419 = vpop.f32.mrb[0].mxu0
    %1420 = vdwg.mxu0
    %1422 = vrot.lane.b32.xlu0 %v1418, 64
    %v1423 = vpop.permute.xlu0 %1422
    %v1425 = vadd.f32 %v1334, %v1423
    %v1426 = vtanh.pop %v1425
    %v1427 = vsub.f32 1.0, %v1340
    %v1428 = vmul.f32 %v1000, %v1427
    %v1429 = vmul.f32 %v1426, %v1343
    %1431 = vrot.lane.b32.xlu0 %v1429, 96
    %v1432 = vpop.permute.xlu0 %1431
    %v1434 = vadd.f32 %v1428, %v1432
    %1435 = vmatprep.subr.mxu0 0.0
    %1436 = vmatpush1.msra.mxu0 %v31
    %1437 = vmatprep.subr.mxu0 0.0
    %1438 = vmatpush1.msra.mxu0 %v32
    %1439 = vmatprep.subr.mxu0 0.0
    %1440 = vmatpush1.msra.mxu0 %v33
    %1441 = vmatprep.subr.mxu0 0.0
    %1442 = vmatpush1.msra.mxu0 %v34
    %1443 = vmatprep.subr.mxu0 0.0
    %1444 = vmatpush1.msra.mxu0 0.0
    %1445 = vmatprep.subr.mxu0 0.0
    %1446 = vmatpush1.msra.mxu0 0.0
    %1447 = vmatprep.subr.mxu0 0.0
    %1448 = vmatpush1.msra.mxu0 0.0
    %1449 = vmatprep.subr.mxu0 0.0
    %1450 = vmatpush1.msra.mxu0 0.0
    %1451 = vmatprep.subr.mxu0 0.0
    %1452 = vmatpush1.msra.mxu0 0.0
    %1453 = vmatprep.subr.mxu0 0.0
    %1454 = vmatpush1.msra.mxu0 0.0
    %1455 = vmatprep.subr.mxu0 0.0
    %1456 = vmatpush1.msra.mxu0 0.0
    %1457 = vmatprep.subr.mxu0 0.0
    %1458 = vmatpush1.msra.mxu0 0.0
    %1459 = vmatprep.subr.mxu0 0.0
    %1460 = vmatpush1.msra.mxu0 0.0
    %1461 = vmatprep.subr.mxu0 0.0
    %1462 = vmatpush1.msra.mxu0 0.0
    %1463 = vmatprep.subr.mxu0 0.0
    %1464 = vmatpush1.msra.mxu0 0.0
    %1465 = vmatprep.subr.mxu0 0.0
    %1466 = vmatpush1.msra.mxu0 0.0
    %1467 = vmatprep.subr.mxu0 0.0
    %1468 = vmatpush1.msra.mxu0 0.0
    %1469 = vmatprep.subr.mxu0 0.0
    %1470 = vmatpush1.msra.mxu0 0.0
    %1471 = vmatprep.subr.mxu0 0.0
    %1472 = vmatpush1.msra.mxu0 0.0
    %1473 = vmatprep.subr.mxu0 0.0
    %1474 = vmatpush1.msra.mxu0 0.0
    %1475 = vmatprep.subr.mxu0 0.0
    %1476 = vmatpush1.msra.mxu0 0.0
    %1477 = vmatprep.subr.mxu0 0.0
    %1478 = vmatpush1.msra.mxu0 0.0
    %1479 = vmatprep.subr.mxu0 0.0
    %1480 = vmatpush1.msra.mxu0 0.0
    %1481 = vmatprep.subr.mxu0 0.0
    %1482 = vmatpush1.msra.mxu0 0.0
    %1483 = vmatprep.subr.mxu0 0.0
    %1484 = vmatpush1.msra.mxu0 0.0
    %1485 = vmatprep.subr.mxu0 0.0
    %1486 = vmatpush1.msra.mxu0 0.0
    %1487 = vmatprep.subr.mxu0 0.0
    %1488 = vmatpush1.msra.mxu0 0.0
    %1489 = vmatprep.subr.mxu0 0.0
    %1490 = vmatpush1.msra.mxu0 0.0
    %1491 = vmatprep.subr.mxu0 0.0
    %1492 = vmatpush1.msra.mxu0 0.0
    %1493 = vmatprep.subr.mxu0 0.0
    %1494 = vmatpush1.msra.mxu0 0.0
    %1495 = vmatprep.subr.mxu0 0.0
    %1496 = vmatpush1.msra.mxu0 0.0
    %1497 = vmatprep.subr.mxu0 0.0
    %1498 = vmatpush1.msra.mxu0 0.0
    %1499 = vmatprep.mubr.f32.mxu0 0.0
    %1500 = vmatmul.mubr.f32.gmra.mrb[0].mxu0 %v1187
    %v1501 = vpop.f32.mrb[0].mxu0
    %v1502 = vadd.f32 0.0, %v1501
    %v1503 = vpop.f32.mrb[0].mxu0
    %1504 = vdwg.mxu0
    %v1506 = vrot.slane %v1502, 2
    %v1508 = vadd.f32 %v142, %v1506
    %v1509 = vxor.u32 %v1508, 2147483648
    %v1510 = vmul.f32 %v1509, 1.442695
    %v1511 = vpow.pop %v1510
    %v1512 = vadd.f32 %v1511, 1.0
    %v1513 = vrcp.pop %v1512
    %v1514 = vmul.f32 1.0, %v1513
    %v1516 = vrot.slane %v1514, 6
    %1517 = vrot.lane.b32.xlu0 %v1516, 32
    %v1518 = vpop.permute.xlu0 %1517
    %v1520 = vmul.f32 %v1183, %v1518
    %1522 = vrot.lane.b32.xlu0 %v1520, 96
    %v1523 = vpop.permute.xlu0 %1522
    %v1524 = vsel %vm150, %v1523, 0
    %1526 = vmatprep.subr.mxu0 0.0
    %1527 = vmatpush1.msra.mxu0 %v39
    %1528 = vmatprep.subr.mxu0 0.0
    %1529 = vmatpush1.msra.mxu0 %v40
    %1530 = vmatprep.subr.mxu0 0.0
    %1531 = vmatpush1.msra.mxu0 %v41
    %1532 = vmatprep.subr.mxu0 0.0
    %1533 = vmatpush1.msra.mxu0 %v42
    %1534 = vmatprep.subr.mxu0 0.0
    %1535 = vmatpush1.msra.mxu0 0.0
    %1536 = vmatprep.subr.mxu0 0.0
    %1537 = vmatpush1.msra.mxu0 0.0
    %1538 = vmatprep.subr.mxu0 0.0
    %1539 = vmatpush1.msra.mxu0 0.0
    %1540 = vmatprep.subr.mxu0 0.0
    %1541 = vmatpush1.msra.mxu0 0.0
    %1542 = vmatprep.subr.mxu0 0.0
    %1543 = vmatpush1.msra.mxu0 0.0
    %1544 = vmatprep.subr.mxu0 0.0
    %1545 = vmatpush1.msra.mxu0 0.0
    %1546 = vmatprep.subr.mxu0 0.0
    %1547 = vmatpush1.msra.mxu0 0.0
    %1548 = vmatprep.subr.mxu0 0.0
    %1549 = vmatpush1.msra.mxu0 0.0
    %1550 = vmatprep.subr.mxu0 0.0
    %1551 = vmatpush1.msra.mxu0 0.0
    %1552 = vmatprep.subr.mxu0 0.0
    %1553 = vmatpush1.msra.mxu0 0.0
    %1554 = vmatprep.subr.mxu0 0.0
    %1555 = vmatpush1.msra.mxu0 0.0
    %1556 = vmatprep.subr.mxu0 0.0
    %1557 = vmatpush1.msra.mxu0 0.0
    %1558 = vmatprep.subr.mxu0 0.0
    %1559 = vmatpush1.msra.mxu0 0.0
    %1560 = vmatprep.subr.mxu0 0.0
    %1561 = vmatpush1.msra.mxu0 0.0
    %1562 = vmatprep.subr.mxu0 0.0
    %1563 = vmatpush1.msra.mxu0 0.0
    %1564 = vmatprep.subr.mxu0 0.0
    %1565 = vmatpush1.msra.mxu0 0.0
    %1566 = vmatprep.subr.mxu0 0.0
    %1567 = vmatpush1.msra.mxu0 0.0
    %1568 = vmatprep.subr.mxu0 0.0
    %1569 = vmatpush1.msra.mxu0 0.0
    %1570 = vmatprep.subr.mxu0 0.0
    %1571 = vmatpush1.msra.mxu0 0.0
    %1572 = vmatprep.subr.mxu0 0.0
    %1573 = vmatpush1.msra.mxu0 0.0
    %1574 = vmatprep.subr.mxu0 0.0
    %1575 = vmatpush1.msra.mxu0 0.0
    %1576 = vmatprep.subr.mxu0 0.0
    %1577 = vmatpush1.msra.mxu0 0.0
    %1578 = vmatprep.subr.mxu0 0.0
    %1579 = vmatpush1.msra.mxu0 0.0
    %1580 = vmatprep.subr.mxu0 0.0
    %1581 = vmatpush1.msra.mxu0 0.0
    %1582 = vmatprep.subr.mxu0 0.0
    %1583 = vmatpush1.msra.mxu0 0.0
    %1584 = vmatprep.subr.mxu0 0.0
    %1585 = vmatpush1.msra.mxu0 0.0
    %1586 = vmatprep.subr.mxu0 0.0
    %1587 = vmatpush1.msra.mxu0 0.0
    %1588 = vmatprep.subr.mxu0 0.0
    %1589 = vmatpush1.msra.mxu0 0.0
    %1590 = vmatprep.mubr.f32.mxu0 0.0
    %1591 = vmatmul.mubr.f32.gmra.mrb[0].mxu0 %v1524
    %v1592 = vpop.f32.mrb[0].mxu0
    %v1593 = vadd.f32 0.0, %v1592
    %v1594 = vpop.f32.mrb[0].mxu0
    %1595 = vdwg.mxu0
    %v1597 = vrot.slane %v1593, 2
    %1598 = vrot.lane.b32.xlu0 %v1597, 64
    %v1599 = vpop.permute.xlu0 %1598
    %v1601 = vadd.f32 %v1508, %v1599
    %v1602 = vtanh.pop %v1601
    %v1603 = vsub.f32 1.0, %v1514
    %v1605 = vrot.slane %v1603, 6
    %v1607 = vmul.f32 %v1183, %v1605
    %1608 = vrot.lane.b32.xlu0 %v1514, 32
    %v1609 = vpop.permute.xlu0 %1608
    %v1611 = vmul.f32 %v1602, %v1609
    %v1613 = vrot.slane %v1611, 6
    %1614 = vrot.lane.b32.xlu0 %v1613, 96
    %v1615 = vpop.permute.xlu0 %1614
    %v1617 = vadd.f32 %v1607, %v1615
    %1619 = vrot.lane.b32.xlu0 %v1617, 96
    %v1620 = vpop.permute.xlu0 %1619
    %v1621 = vsel %vm150, %v1620, 0
    %1623 = vmatprep.subr.mxu0 0.0
    %1624 = vmatpush1.msra.mxu0 %v27
    %1625 = vmatprep.subr.mxu0 0.0
    %1626 = vmatpush1.msra.mxu0 %v28
    %1627 = vmatprep.subr.mxu0 0.0
    %1628 = vmatpush1.msra.mxu0 %v29
    %1629 = vmatprep.subr.mxu0 0.0
    %1630 = vmatpush1.msra.mxu0 %v30
    %1631 = vmatprep.subr.mxu0 0.0
    %1632 = vmatpush1.msra.mxu0 0.0
    %1633 = vmatprep.subr.mxu0 0.0
    %1634 = vmatpush1.msra.mxu0 0.0
    %1635 = vmatprep.subr.mxu0 0.0
    %1636 = vmatpush1.msra.mxu0 0.0
    %1637 = vmatprep.subr.mxu0 0.0
    %1638 = vmatpush1.msra.mxu0 0.0
    %1639 = vmatprep.subr.mxu0 0.0
    %1640 = vmatpush1.msra.mxu0 0.0
    %1641 = vmatprep.subr.mxu0 0.0
    %1642 = vmatpush1.msra.mxu0 0.0
    %1643 = vmatprep.subr.mxu0 0.0
    %1644 = vmatpush1.msra.mxu0 0.0
    %1645 = vmatprep.subr.mxu0 0.0
    %1646 = vmatpush1.msra.mxu0 0.0
    %1647 = vmatprep.subr.mxu0 0.0
    %1648 = vmatpush1.msra.mxu0 0.0
    %1649 = vmatprep.subr.mxu0 0.0
    %1650 = vmatpush1.msra.mxu0 0.0
    %1651 = vmatprep.subr.mxu0 0.0
    %1652 = vmatpush1.msra.mxu0 0.0
    %1653 = vmatprep.subr.mxu0 0.0
    %1654 = vmatpush1.msra.mxu0 0.0
    %1655 = vmatprep.subr.mxu0 0.0
    %1656 = vmatpush1.msra.mxu0 0.0
    %1657 = vmatprep.subr.mxu0 0.0
    %1658 = vmatpush1.msra.mxu0 0.0
    %1659 = vmatprep.subr.mxu0 0.0
    %1660 = vmatpush1.msra.mxu0 0.0
    %1661 = vmatprep.subr.mxu0 0.0
    %1662 = vmatpush1.msra.mxu0 0.0
    %1663 = vmatprep.subr.mxu0 0.0
    %1664 = vmatpush1.msra.mxu0 0.0
    %1665 = vmatprep.subr.mxu0 0.0
    %1666 = vmatpush1.msra.mxu0 0.0
    %1667 = vmatprep.subr.mxu0 0.0
    %1668 = vmatpush1.msra.mxu0 0.0
    %1669 = vmatprep.subr.mxu0 0.0
    %1670 = vmatpush1.msra.mxu0 0.0
    %1671 = vmatprep.subr.mxu0 0.0
    %1672 = vmatpush1.msra.mxu0 0.0
    %1673 = vmatprep.subr.mxu0 0.0
    %1674 = vmatpush1.msra.mxu0 0.0
    %1675 = vmatprep.subr.mxu0 0.0
    %1676 = vmatpush1.msra.mxu0 0.0
    %1677 = vmatprep.subr.mxu0 0.0
    %1678 = vmatpush1.msra.mxu0 0.0
    %1679 = vmatprep.subr.mxu0 0.0
    %1680 = vmatpush1.msra.mxu0 0.0
    %1681 = vmatprep.subr.mxu0 0.0
    %1682 = vmatpush1.msra.mxu0 0.0
    %1683 = vmatprep.subr.mxu0 0.0
    %1684 = vmatpush1.msra.mxu0 0.0
    %1685 = vmatprep.subr.mxu0 0.0
    %1686 = vmatpush1.msra.mxu0 0.0
    %1687 = vmatprep.mubr.f32.mxu0 0.0
    %1688 = vmatmul.mubr.f32.gmra.mrb[0].mxu0 %v1621
    %v1689 = vpop.f32.mrb[0].mxu0
    %v1690 = vadd.f32 %v52, %v1689
    %v1691 = vpop.f32.mrb[0].mxu0
    %1692 = vdwg.mxu0
    %1694 = vrot.lane.b32.xlu0 %v1434, 96
    %v1695 = vpop.permute.xlu0 %1694
    %v1696 = vsel %vm150, %v1695, 0
    %1698 = vmatprep.subr.mxu0 0.0
    %1699 = vmatpush1.msra.mxu0 %v35
    %1700 = vmatprep.subr.mxu0 0.0
    %1701 = vmatpush1.msra.mxu0 %v36
    %1702 = vmatprep.subr.mxu0 0.0
    %1703 = vmatpush1.msra.mxu0 %v37
    %1704 = vmatprep.subr.mxu0 0.0
    %1705 = vmatpush1.msra.mxu0 %v38
    %1706 = vmatprep.subr.mxu0 0.0
    %1707 = vmatpush1.msra.mxu0 0.0
    %1708 = vmatprep.subr.mxu0 0.0
    %1709 = vmatpush1.msra.mxu0 0.0
    %1710 = vmatprep.subr.mxu0 0.0
    %1711 = vmatpush1.msra.mxu0 0.0
    %1712 = vmatprep.subr.mxu0 0.0
    %1713 = vmatpush1.msra.mxu0 0.0
    %1714 = vmatprep.subr.mxu0 0.0
    %1715 = vmatpush1.msra.mxu0 0.0
    %1716 = vmatprep.subr.mxu0 0.0
    %1717 = vmatpush1.msra.mxu0 0.0
    %1718 = vmatprep.subr.mxu0 0.0
    %1719 = vmatpush1.msra.mxu0 0.0
    %1720 = vmatprep.subr.mxu0 0.0
    %1721 = vmatpush1.msra.mxu0 0.0
    %1722 = vmatprep.subr.mxu0 0.0
    %1723 = vmatpush1.msra.mxu0 0.0
    %1724 = vmatprep.subr.mxu0 0.0
    %1725 = vmatpush1.msra.mxu0 0.0
    %1726 = vmatprep.subr.mxu0 0.0
    %1727 = vmatpush1.msra.mxu0 0.0
    %1728 = vmatprep.subr.mxu0 0.0
    %1729 = vmatpush1.msra.mxu0 0.0
    %1730 = vmatprep.subr.mxu0 0.0
    %1731 = vmatpush1.msra.mxu0 0.0
    %1732 = vmatprep.subr.mxu0 0.0
    %1733 = vmatpush1.msra.mxu0 0.0
    %1734 = vmatprep.subr.mxu0 0.0
    %1735 = vmatpush1.msra.mxu0 0.0
    %1736 = vmatprep.subr.mxu0 0.0
    %1737 = vmatpush1.msra.mxu0 0.0
    %1738 = vmatprep.subr.mxu0 0.0
    %1739 = vmatpush1.msra.mxu0 0.0
    %1740 = vmatprep.subr.mxu0 0.0
    %1741 = vmatpush1.msra.mxu0 0.0
    %1742 = vmatprep.subr.mxu0 0.0
    %1743 = vmatpush1.msra.mxu0 0.0
    %1744 = vmatprep.subr.mxu0 0.0
    %1745 = vmatpush1.msra.mxu0 0.0
    %1746 = vmatprep.subr.mxu0 0.0
    %1747 = vmatpush1.msra.mxu0 0.0
    %1748 = vmatprep.subr.mxu0 0.0
    %1749 = vmatpush1.msra.mxu0 0.0
    %1750 = vmatprep.subr.mxu0 0.0
    %1751 = vmatpush1.msra.mxu0 0.0
    %1752 = vmatprep.subr.mxu0 0.0
    %1753 = vmatpush1.msra.mxu0 0.0
    %1754 = vmatprep.subr.mxu0 0.0
    %1755 = vmatpush1.msra.mxu0 0.0
    %1756 = vmatprep.subr.mxu0 0.0
    %1757 = vmatpush1.msra.mxu0 0.0
    %1758 = vmatprep.subr.mxu0 0.0
    %1759 = vmatpush1.msra.mxu0 0.0
    %1760 = vmatprep.subr.mxu0 0.0
    %1761 = vmatpush1.msra.mxu0 0.0
    %1762 = vmatprep.mubr.f32.mxu0 0.0
    %1763 = vmatmul.mubr.f32.gmra.mrb[0].mxu0 %v1696
    %v1764 = vpop.f32.mrb[0].mxu0
    %v1765 = vadd.f32 0.0, %v1764
    %v1766 = vpop.f32.mrb[0].mxu0
    %1767 = vdwg.mxu0
    %v1768 = vadd.f32 %v1690, %v1765
    %v1769 = vxor.u32 %v1768, 2147483648
    %v1770 = vmul.f32 %v1769, 1.442695
    %v1771 = vpow.pop %v1770
    %v1772 = vadd.f32 %v1771, 1.0
    %v1773 = vrcp.pop %v1772
    %v1774 = vmul.f32 1.0, %v1773
    %1776 = vrot.lane.b32.xlu0 %v1774, 32
    %v1777 = vpop.permute.xlu0 %1776
    %v1779 = vmul.f32 %v1434, %v1777
    %1781 = vrot.lane.b32.xlu0 %v1779, 96
    %v1782 = vpop.permute.xlu0 %1781
    %v1783 = vsel %vm150, %v1782, 0
    %1785 = vmatprep.subr.mxu0 0.0
    %1786 = vmatpush1.msra.mxu0 %v43
    %1787 = vmatprep.subr.mxu0 0.0
    %1788 = vmatpush1.msra.mxu0 %v44
    %1789 = vmatprep.subr.mxu0 0.0
    %1790 = vmatpush1.msra.mxu0 %v45
    %1791 = vmatprep.subr.mxu0 0.0
    %1792 = vmatpush1.msra.mxu0 %v46
    %1793 = vmatprep.subr.mxu0 0.0
    %1794 = vmatpush1.msra.mxu0 0.0
    %1795 = vmatprep.subr.mxu0 0.0
    %1796 = vmatpush1.msra.mxu0 0.0
    %1797 = vmatprep.subr.mxu0 0.0
    %1798 = vmatpush1.msra.mxu0 0.0
    %1799 = vmatprep.subr.mxu0 0.0
    %1800 = vmatpush1.msra.mxu0 0.0
    %1801 = vmatprep.subr.mxu0 0.0
    %1802 = vmatpush1.msra.mxu0 0.0
    %1803 = vmatprep.subr.mxu0 0.0
    %1804 = vmatpush1.msra.mxu0 0.0
    %1805 = vmatprep.subr.mxu0 0.0
    %1806 = vmatpush1.msra.mxu0 0.0
    %1807 = vmatprep.subr.mxu0 0.0
    %1808 = vmatpush1.msra.mxu0 0.0
    %1809 = vmatprep.subr.mxu0 0.0
    %1810 = vmatpush1.msra.mxu0 0.0
    %1811 = vmatprep.subr.mxu0 0.0
    %1812 = vmatpush1.msra.mxu0 0.0
    %1813 = vmatprep.subr.mxu0 0.0
    %1814 = vmatpush1.msra.mxu0 0.0
    %1815 = vmatprep.subr.mxu0 0.0
    %1816 = vmatpush1.msra.mxu0 0.0
    %1817 = vmatprep.subr.mxu0 0.0
    %1818 = vmatpush1.msra.mxu0 0.0
    %1819 = vmatprep.subr.mxu0 0.0
    %1820 = vmatpush1.msra.mxu0 0.0
    %1821 = vmatprep.subr.mxu0 0.0
    %1822 = vmatpush1.msra.mxu0 0.0
    %1823 = vmatprep.subr.mxu0 0.0
    %1824 = vmatpush1.msra.mxu0 0.0
    %1825 = vmatprep.subr.mxu0 0.0
    %1826 = vmatpush1.msra.mxu0 0.0
    %1827 = vmatprep.subr.mxu0 0.0
    %1828 = vmatpush1.msra.mxu0 0.0
    %1829 = vmatprep.subr.mxu0 0.0
    %1830 = vmatpush1.msra.mxu0 0.0
    %1831 = vmatprep.subr.mxu0 0.0
    %1832 = vmatpush1.msra.mxu0 0.0
    %1833 = vmatprep.subr.mxu0 0.0
    %1834 = vmatpush1.msra.mxu0 0.0
    %1835 = vmatprep.subr.mxu0 0.0
    %1836 = vmatpush1.msra.mxu0 0.0
    %1837 = vmatprep.subr.mxu0 0.0
    %1838 = vmatpush1.msra.mxu0 0.0
    %1839 = vmatprep.subr.mxu0 0.0
    %1840 = vmatpush1.msra.mxu0 0.0
    %1841 = vmatprep.subr.mxu0 0.0
    %1842 = vmatpush1.msra.mxu0 0.0
    %1843 = vmatprep.subr.mxu0 0.0
    %1844 = vmatpush1.msra.mxu0 0.0
    %1845 = vmatprep.subr.mxu0 0.0
    %1846 = vmatpush1.msra.mxu0 0.0
    %1847 = vmatprep.subr.mxu0 0.0
    %1848 = vmatpush1.msra.mxu0 0.0
    %1849 = vmatprep.mubr.f32.mxu0 0.0
    %1850 = vmatmul.mubr.f32.gmra.mrb[0].mxu0 %v1783
    %v1851 = vpop.f32.mrb[0].mxu0
    %v1852 = vadd.f32 0.0, %v1851
    %v1853 = vpop.f32.mrb[0].mxu0
    %1854 = vdwg.mxu0
    %1856 = vrot.lane.b32.xlu0 %v1852, 64
    %v1857 = vpop.permute.xlu0 %1856
    %v1859 = vadd.f32 %v1768, %v1857
    %v1860 = vtanh.pop %v1859
    %v1861 = vsub.f32 1.0, %v1774
    %v1862 = vmul.f32 %v1434, %v1861
    %v1863 = vmul.f32 %v1860, %v1777
    %1865 = vrot.lane.b32.xlu0 %v1863, 96
    %v1866 = vpop.permute.xlu0 %1865
    %v1868 = vadd.f32 %v1862, %v1866
    %1869 = vmatprep.subr.mxu0 0.0
    %1870 = vmatpush1.msra.mxu0 %v31
    %1871 = vmatprep.subr.mxu0 0.0
    %1872 = vmatpush1.msra.mxu0 %v32
    %1873 = vmatprep.subr.mxu0 0.0
    %1874 = vmatpush1.msra.mxu0 %v33
    %1875 = vmatprep.subr.mxu0 0.0
    %1876 = vmatpush1.msra.mxu0 %v34
    %1877 = vmatprep.subr.mxu0 0.0
    %1878 = vmatpush1.msra.mxu0 0.0
    %1879 = vmatprep.subr.mxu0 0.0
    %1880 = vmatpush1.msra.mxu0 0.0
    %1881 = vmatprep.subr.mxu0 0.0
    %1882 = vmatpush1.msra.mxu0 0.0
    %1883 = vmatprep.subr.mxu0 0.0
    %1884 = vmatpush1.msra.mxu0 0.0
    %1885 = vmatprep.subr.mxu0 0.0
    %1886 = vmatpush1.msra.mxu0 0.0
    %1887 = vmatprep.subr.mxu0 0.0
    %1888 = vmatpush1.msra.mxu0 0.0
    %1889 = vmatprep.subr.mxu0 0.0
    %1890 = vmatpush1.msra.mxu0 0.0
    %1891 = vmatprep.subr.mxu0 0.0
    %1892 = vmatpush1.msra.mxu0 0.0
    %1893 = vmatprep.subr.mxu0 0.0
    %1894 = vmatpush1.msra.mxu0 0.0
    %1895 = vmatprep.subr.mxu0 0.0
    %1896 = vmatpush1.msra.mxu0 0.0
    %1897 = vmatprep.subr.mxu0 0.0
    %1898 = vmatpush1.msra.mxu0 0.0
    %1899 = vmatprep.subr.mxu0 0.0
    %1900 = vmatpush1.msra.mxu0 0.0
    %1901 = vmatprep.subr.mxu0 0.0
    %1902 = vmatpush1.msra.mxu0 0.0
    %1903 = vmatprep.subr.mxu0 0.0
    %1904 = vmatpush1.msra.mxu0 0.0
    %1905 = vmatprep.subr.mxu0 0.0
    %1906 = vmatpush1.msra.mxu0 0.0
    %1907 = vmatprep.subr.mxu0 0.0
    %1908 = vmatpush1.msra.mxu0 0.0
    %1909 = vmatprep.subr.mxu0 0.0
    %1910 = vmatpush1.msra.mxu0 0.0
    %1911 = vmatprep.subr.mxu0 0.0
    %1912 = vmatpush1.msra.mxu0 0.0
    %1913 = vmatprep.subr.mxu0 0.0
    %1914 = vmatpush1.msra.mxu0 0.0
    %1915 = vmatprep.subr.mxu0 0.0
    %1916 = vmatpush1.msra.mxu0 0.0
    %1917 = vmatprep.subr.mxu0 0.0
    %1918 = vmatpush1.msra.mxu0 0.0
    %1919 = vmatprep.subr.mxu0 0.0
    %1920 = vmatpush1.msra.mxu0 0.0
    %1921 = vmatprep.subr.mxu0 0.0
    %1922 = vmatpush1.msra.mxu0 0.0
    %1923 = vmatprep.subr.mxu0 0.0
    %1924 = vmatpush1.msra.mxu0 0.0
    %1925 = vmatprep.subr.mxu0 0.0
    %1926 = vmatpush1.msra.mxu0 0.0
    %1927 = vmatprep.subr.mxu0 0.0
    %1928 = vmatpush1.msra.mxu0 0.0
    %1929 = vmatprep.subr.mxu0 0.0
    %1930 = vmatpush1.msra.mxu0 0.0
    %1931 = vmatprep.subr.mxu0 0.0
    %1932 = vmatpush1.msra.mxu0 0.0
    %1933 = vmatprep.mubr.f32.mxu0 0.0
    %1934 = vmatmul.mubr.f32.gmra.mrb[0].mxu0 %v1621
    %v1935 = vpop.f32.mrb[0].mxu0
    %v1936 = vadd.f32 0.0, %v1935
    %v1937 = vpop.f32.mrb[0].mxu0
    %1938 = vdwg.mxu0
    %v1939 = vadd.f32 %v147, %v1936
    %v1940 = vxor.u32 %v1939, 2147483648
    %v1941 = vmul.f32 %v1940, 1.442695
    %v1942 = vpow.pop %v1941
    %v1943 = vadd.f32 %v1942, 1.0
    %v1944 = vrcp.pop %v1943
    %v1945 = vmul.f32 1.0, %v1944
    %1947 = vrot.lane.b32.xlu0 %v1945, 32
    %v1948 = vpop.permute.xlu0 %1947
    %v1950 = vmul.f32 %v1617, %v1948
    %1952 = vrot.lane.b32.xlu0 %v1950, 96
    %v1953 = vpop.permute.xlu0 %1952
    %v1954 = vsel %vm150, %v1953, 0
    %1956 = vmatprep.subr.mxu0 0.0
    %1957 = vmatpush1.msra.mxu0 %v39
    %1958 = vmatprep.subr.mxu0 0.0
    %1959 = vmatpush1.msra.mxu0 %v40
    %1960 = vmatprep.subr.mxu0 0.0
    %1961 = vmatpush1.msra.mxu0 %v41
    %1962 = vmatprep.subr.mxu0 0.0
    %1963 = vmatpush1.msra.mxu0 %v42
    %1964 = vmatprep.subr.mxu0 0.0
    %1965 = vmatpush1.msra.mxu0 0.0
    %1966 = vmatprep.subr.mxu0 0.0
    %1967 = vmatpush1.msra.mxu0 0.0
    %1968 = vmatprep.subr.mxu0 0.0
    %1969 = vmatpush1.msra.mxu0 0.0
    %1970 = vmatprep.subr.mxu0 0.0
    %1971 = vmatpush1.msra.mxu0 0.0
    %1972 = vmatprep.subr.mxu0 0.0
    %1973 = vmatpush1.msra.mxu0 0.0
    %1974 = vmatprep.subr.mxu0 0.0
    %1975 = vmatpush1.msra.mxu0 0.0
    %1976 = vmatprep.subr.mxu0 0.0
    %1977 = vmatpush1.msra.mxu0 0.0
    %1978 = vmatprep.subr.mxu0 0.0
    %1979 = vmatpush1.msra.mxu0 0.0
    %1980 = vmatprep.subr.mxu0 0.0
    %1981 = vmatpush1.msra.mxu0 0.0
    %1982 = vmatprep.subr.mxu0 0.0
    %1983 = vmatpush1.msra.mxu0 0.0
    %1984 = vmatprep.subr.mxu0 0.0
    %1985 = vmatpush1.msra.mxu0 0.0
    %1986 = vmatprep.subr.mxu0 0.0
    %1987 = vmatpush1.msra.mxu0 0.0
    %1988 = vmatprep.subr.mxu0 0.0
    %1989 = vmatpush1.msra.mxu0 0.0
    %1990 = vmatprep.subr.mxu0 0.0
    %1991 = vmatpush1.msra.mxu0 0.0
    %1992 = vmatprep.subr.mxu0 0.0
    %1993 = vmatpush1.msra.mxu0 0.0
    %1994 = vmatprep.subr.mxu0 0.0
    %1995 = vmatpush1.msra.mxu0 0.0
    %1996 = vmatprep.subr.mxu0 0.0
    %1997 = vmatpush1.msra.mxu0 0.0
    %1998 = vmatprep.subr.mxu0 0.0
    %1999 = vmatpush1.msra.mxu0 0.0
    %2000 = vmatprep.subr.mxu0 0.0
    %2001 = vmatpush1.msra.mxu0 0.0
    %2002 = vmatprep.subr.mxu0 0.0
    %2003 = vmatpush1.msra.mxu0 0.0
    %2004 = vmatprep.subr.mxu0 0.0
    %2005 = vmatpush1.msra.mxu0 0.0
    %2006 = vmatprep.subr.mxu0 0.0
    %2007 = vmatpush1.msra.mxu0 0.0
    %2008 = vmatprep.subr.mxu0 0.0
    %2009 = vmatpush1.msra.mxu0 0.0
    %2010 = vmatprep.subr.mxu0 0.0
    %2011 = vmatpush1.msra.mxu0 0.0
    %2012 = vmatprep.subr.mxu0 0.0
    %2013 = vmatpush1.msra.mxu0 0.0
    %2014 = vmatprep.subr.mxu0 0.0
    %2015 = vmatpush1.msra.mxu0 0.0
    %2016 = vmatprep.subr.mxu0 0.0
    %2017 = vmatpush1.msra.mxu0 0.0
    %2018 = vmatprep.subr.mxu0 0.0
    %2019 = vmatpush1.msra.mxu0 0.0
    %2020 = vmatprep.mubr.f32.mxu0 0.0
    %2021 = vmatmul.mubr.f32.gmra.mrb[0].mxu0 %v1954
    %v2022 = vpop.f32.mrb[0].mxu0
    %v2023 = vadd.f32 0.0, %v2022
    %v2024 = vpop.f32.mrb[0].mxu0
    %2025 = vdwg.mxu0
    %2027 = vrot.lane.b32.xlu0 %v2023, 64
    %v2028 = vpop.permute.xlu0 %2027
    %v2030 = vadd.f32 %v1939, %v2028
    %v2031 = vtanh.pop %v2030
    %v2032 = vsub.f32 1.0, %v1945
    %v2033 = vmul.f32 %v1617, %v2032
    %v2034 = vmul.f32 %v2031, %v1948
    %2036 = vrot.lane.b32.xlu0 %v2034, 96
    %v2037 = vpop.permute.xlu0 %2036
    %v2039 = vadd.f32 %v2033, %v2037
    %2041 = vrot.lane.b32.xlu0 %v2039, 96
    %v2042 = vpop.permute.xlu0 %2041
    %v2043 = vsel %vm150, %v2042, 0
    %2045 = vmatprep.subr.mxu0 0.0
    %2046 = vmatpush1.msra.mxu0 %v27
    %2047 = vmatprep.subr.mxu0 0.0
    %2048 = vmatpush1.msra.mxu0 %v28
    %2049 = vmatprep.subr.mxu0 0.0
    %2050 = vmatpush1.msra.mxu0 %v29
    %2051 = vmatprep.subr.mxu0 0.0
    %2052 = vmatpush1.msra.mxu0 %v30
    %2053 = vmatprep.subr.mxu0 0.0
    %2054 = vmatpush1.msra.mxu0 0.0
    %2055 = vmatprep.subr.mxu0 0.0
    %2056 = vmatpush1.msra.mxu0 0.0
    %2057 = vmatprep.subr.mxu0 0.0
    %2058 = vmatpush1.msra.mxu0 0.0
    %2059 = vmatprep.subr.mxu0 0.0
    %2060 = vmatpush1.msra.mxu0 0.0
    %2061 = vmatprep.subr.mxu0 0.0
    %2062 = vmatpush1.msra.mxu0 0.0
    %2063 = vmatprep.subr.mxu0 0.0
    %2064 = vmatpush1.msra.mxu0 0.0
    %2065 = vmatprep.subr.mxu0 0.0
    %2066 = vmatpush1.msra.mxu0 0.0
    %2067 = vmatprep.subr.mxu0 0.0
    %2068 = vmatpush1.msra.mxu0 0.0
    %2069 = vmatprep.subr.mxu0 0.0
    %2070 = vmatpush1.msra.mxu0 0.0
    %2071 = vmatprep.subr.mxu0 0.0
    %2072 = vmatpush1.msra.mxu0 0.0
    %2073 = vmatprep.subr.mxu0 0.0
    %2074 = vmatpush1.msra.mxu0 0.0
    %2075 = vmatprep.subr.mxu0 0.0
    %2076 = vmatpush1.msra.mxu0 0.0
    %2077 = vmatprep.subr.mxu0 0.0
    %2078 = vmatpush1.msra.mxu0 0.0
    %2079 = vmatprep.subr.mxu0 0.0
    %2080 = vmatpush1.msra.mxu0 0.0
    %2081 = vmatprep.subr.mxu0 0.0
    %2082 = vmatpush1.msra.mxu0 0.0
    %2083 = vmatprep.subr.mxu0 0.0
    %2084 = vmatpush1.msra.mxu0 0.0
    %2085 = vmatprep.subr.mxu0 0.0
    %2086 = vmatpush1.msra.mxu0 0.0
    %2087 = vmatprep.subr.mxu0 0.0
    %2088 = vmatpush1.msra.mxu0 0.0
    %2089 = vmatprep.subr.mxu0 0.0
    %2090 = vmatpush1.msra.mxu0 0.0
    %2091 = vmatprep.subr.mxu0 0.0
    %2092 = vmatpush1.msra.mxu0 0.0
    %2093 = vmatprep.subr.mxu0 0.0
    %2094 = vmatpush1.msra.mxu0 0.0
    %2095 = vmatprep.subr.mxu0 0.0
    %2096 = vmatpush1.msra.mxu0 0.0
    %2097 = vmatprep.subr.mxu0 0.0
    %2098 = vmatpush1.msra.mxu0 0.0
    %2099 = vmatprep.subr.mxu0 0.0
    %2100 = vmatpush1.msra.mxu0 0.0
    %2101 = vmatprep.subr.mxu0 0.0
    %2102 = vmatpush1.msra.mxu0 0.0
    %2103 = vmatprep.subr.mxu0 0.0
    %2104 = vmatpush1.msra.mxu0 0.0
    %2105 = vmatprep.subr.mxu0 0.0
    %2106 = vmatpush1.msra.mxu0 0.0
    %2107 = vmatprep.subr.mxu0 0.0
    %2108 = vmatpush1.msra.mxu0 0.0
    %2109 = vmatprep.mubr.f32.mxu0 0.0
    %2110 = vmatmul.mubr.f32.gmra.mrb[0].mxu0 %v2043
    %v2111 = vpop.f32.mrb[0].mxu0
    %v2112 = vadd.f32 %v52, %v2111
    %v2113 = vpop.f32.mrb[0].mxu0
    %2114 = vdwg.mxu0
    %2116 = vrot.lane.b32.xlu0 %v1868, 96
    %v2117 = vpop.permute.xlu0 %2116
    %v2118 = vsel %vm150, %v2117, 0
    %2120 = vmatprep.subr.mxu0 0.0
    %2121 = vmatpush1.msra.mxu0 %v35
    %2122 = vmatprep.subr.mxu0 0.0
    %2123 = vmatpush1.msra.mxu0 %v36
    %2124 = vmatprep.subr.mxu0 0.0
    %2125 = vmatpush1.msra.mxu0 %v37
    %2126 = vmatprep.subr.mxu0 0.0
    %2127 = vmatpush1.msra.mxu0 %v38
    %2128 = vmatprep.subr.mxu0 0.0
    %2129 = vmatpush1.msra.mxu0 0.0
    %2130 = vmatprep.subr.mxu0 0.0
    %2131 = vmatpush1.msra.mxu0 0.0
    %2132 = vmatprep.subr.mxu0 0.0
    %2133 = vmatpush1.msra.mxu0 0.0
    %2134 = vmatprep.subr.mxu0 0.0
    %2135 = vmatpush1.msra.mxu0 0.0
    %2136 = vmatprep.subr.mxu0 0.0
    %2137 = vmatpush1.msra.mxu0 0.0
    %2138 = vmatprep.subr.mxu0 0.0
    %2139 = vmatpush1.msra.mxu0 0.0
    %2140 = vmatprep.subr.mxu0 0.0
    %2141 = vmatpush1.msra.mxu0 0.0
    %2142 = vmatprep.subr.mxu0 0.0
    %2143 = vmatpush1.msra.mxu0 0.0
    %2144 = vmatprep.subr.mxu0 0.0
    %2145 = vmatpush1.msra.mxu0 0.0
    %2146 = vmatprep.subr.mxu0 0.0
    %2147 = vmatpush1.msra.mxu0 0.0
    %2148 = vmatprep.subr.mxu0 0.0
    %2149 = vmatpush1.msra.mxu0 0.0
    %2150 = vmatprep.subr.mxu0 0.0
    %2151 = vmatpush1.msra.mxu0 0.0
    %2152 = vmatprep.subr.mxu0 0.0
    %2153 = vmatpush1.msra.mxu0 0.0
    %2154 = vmatprep.subr.mxu0 0.0
    %2155 = vmatpush1.msra.mxu0 0.0
    %2156 = vmatprep.subr.mxu0 0.0
    %2157 = vmatpush1.msra.mxu0 0.0
    %2158 = vmatprep.subr.mxu0 0.0
    %2159 = vmatpush1.msra.mxu0 0.0
    %2160 = vmatprep.subr.mxu0 0.0
    %2161 = vmatpush1.msra.mxu0 0.0
    %2162 = vmatprep.subr.mxu0 0.0
    %2163 = vmatpush1.msra.mxu0 0.0
    %2164 = vmatprep.subr.mxu0 0.0
    %2165 = vmatpush1.msra.mxu0 0.0
    %2166 = vmatprep.subr.mxu0 0.0
    %2167 = vmatpush1.msra.mxu0 0.0
    %2168 = vmatprep.subr.mxu0 0.0
    %2169 = vmatpush1.msra.mxu0 0.0
    %2170 = vmatprep.subr.mxu0 0.0
    %2171 = vmatpush1.msra.mxu0 0.0
    %2172 = vmatprep.subr.mxu0 0.0
    %2173 = vmatpush1.msra.mxu0 0.0
    %2174 = vmatprep.subr.mxu0 0.0
    %2175 = vmatpush1.msra.mxu0 0.0
    %2176 = vmatprep.subr.mxu0 0.0
    %2177 = vmatpush1.msra.mxu0 0.0
    %2178 = vmatprep.subr.mxu0 0.0
    %2179 = vmatpush1.msra.mxu0 0.0
    %2180 = vmatprep.subr.mxu0 0.0
    %2181 = vmatpush1.msra.mxu0 0.0
    %2182 = vmatprep.subr.mxu0 0.0
    %2183 = vmatpush1.msra.mxu0 0.0
    %2184 = vmatprep.mubr.f32.mxu0 0.0
    %2185 = vmatmul.mubr.f32.gmra.mrb[0].mxu0 %v2118
    %v2186 = vpop.f32.mrb[0].mxu0
    %v2187 = vadd.f32 0.0, %v2186
    %v2188 = vpop.f32.mrb[0].mxu0
    %2189 = vdwg.mxu0
    %v2190 = vadd.f32 %v2112, %v2187
    %v2191 = vxor.u32 %v2190, 2147483648
    %v2192 = vmul.f32 %v2191, 1.442695
    %v2193 = vpow.pop %v2192
    %v2194 = vadd.f32 %v2193, 1.0
    %v2195 = vrcp.pop %v2194
    %v2196 = vmul.f32 1.0, %v2195
    %2198 = vrot.lane.b32.xlu0 %v2196, 32
    %v2199 = vpop.permute.xlu0 %2198
    %v2201 = vmul.f32 %v1868, %v2199
    %2203 = vrot.lane.b32.xlu0 %v2201, 96
    %v2204 = vpop.permute.xlu0 %2203
    %v2205 = vsel %vm150, %v2204, 0
    %2207 = vmatprep.subr.mxu0 0.0
    %2208 = vmatpush1.msra.mxu0 %v43
    %2209 = vmatprep.subr.mxu0 0.0
    %2210 = vmatpush1.msra.mxu0 %v44
    %2211 = vmatprep.subr.mxu0 0.0
    %2212 = vmatpush1.msra.mxu0 %v45
    %2213 = vmatprep.subr.mxu0 0.0
    %2214 = vmatpush1.msra.mxu0 %v46
    %2215 = vmatprep.subr.mxu0 0.0
    %2216 = vmatpush1.msra.mxu0 0.0
    %2217 = vmatprep.subr.mxu0 0.0
    %2218 = vmatpush1.msra.mxu0 0.0
    %2219 = vmatprep.subr.mxu0 0.0
    %2220 = vmatpush1.msra.mxu0 0.0
    %2221 = vmatprep.subr.mxu0 0.0
    %2222 = vmatpush1.msra.mxu0 0.0
    %2223 = vmatprep.subr.mxu0 0.0
    %2224 = vmatpush1.msra.mxu0 0.0
    %2225 = vmatprep.subr.mxu0 0.0
    %2226 = vmatpush1.msra.mxu0 0.0
    %2227 = vmatprep.subr.mxu0 0.0
    %2228 = vmatpush1.msra.mxu0 0.0
    %2229 = vmatprep.subr.mxu0 0.0
    %2230 = vmatpush1.msra.mxu0 0.0
    %2231 = vmatprep.subr.mxu0 0.0
    %2232 = vmatpush1.msra.mxu0 0.0
    %2233 = vmatprep.subr.mxu0 0.0
    %2234 = vmatpush1.msra.mxu0 0.0
    %2235 = vmatprep.subr.mxu0 0.0
    %2236 = vmatpush1.msra.mxu0 0.0
    %2237 = vmatprep.subr.mxu0 0.0
    %2238 = vmatpush1.msra.mxu0 0.0
    %2239 = vmatprep.subr.mxu0 0.0
    %2240 = vmatpush1.msra.mxu0 0.0
    %2241 = vmatprep.subr.mxu0 0.0
    %2242 = vmatpush1.msra.mxu0 0.0
    %2243 = vmatprep.subr.mxu0 0.0
    %2244 = vmatpush1.msra.mxu0 0.0
    %2245 = vmatprep.subr.mxu0 0.0
    %2246 = vmatpush1.msra.mxu0 0.0
    %2247 = vmatprep.subr.mxu0 0.0
    %2248 = vmatpush1.msra.mxu0 0.0
    %2249 = vmatprep.subr.mxu0 0.0
    %2250 = vmatpush1.msra.mxu0 0.0
    %2251 = vmatprep.subr.mxu0 0.0
    %2252 = vmatpush1.msra.mxu0 0.0
    %2253 = vmatprep.subr.mxu0 0.0
    %2254 = vmatpush1.msra.mxu0 0.0
    %2255 = vmatprep.subr.mxu0 0.0
    %2256 = vmatpush1.msra.mxu0 0.0
    %2257 = vmatprep.subr.mxu0 0.0
    %2258 = vmatpush1.msra.mxu0 0.0
    %2259 = vmatprep.subr.mxu0 0.0
    %2260 = vmatpush1.msra.mxu0 0.0
    %2261 = vmatprep.subr.mxu0 0.0
    %2262 = vmatpush1.msra.mxu0 0.0
    %2263 = vmatprep.subr.mxu0 0.0
    %2264 = vmatpush1.msra.mxu0 0.0
    %2265 = vmatprep.subr.mxu0 0.0
    %2266 = vmatpush1.msra.mxu0 0.0
    %2267 = vmatprep.subr.mxu0 0.0
    %2268 = vmatpush1.msra.mxu0 0.0
    %2269 = vmatprep.subr.mxu0 0.0
    %2270 = vmatpush1.msra.mxu0 0.0
    %2271 = vmatprep.mubr.f32.mxu0 0.0
    %2272 = vmatmul.mubr.f32.gmra.mrb[0].mxu0 %v2205
    %v2273 = vpop.f32.mrb[0].mxu0
    %v2274 = vadd.f32 0.0, %v2273
    %v2275 = vpop.f32.mrb[0].mxu0
    %2276 = vdwg.mxu0
    %2278 = vrot.lane.b32.xlu0 %v2274, 64
    %v2279 = vpop.permute.xlu0 %2278
    %v2281 = vadd.f32 %v2190, %v2279
    %v2282 = vtanh.pop %v2281
    %v2283 = vsub.f32 1.0, %v2196
    %v2284 = vmul.f32 %v1868, %v2283
    %v2285 = vmul.f32 %v2282, %v2199
    %2287 = vrot.lane.b32.xlu0 %v2285, 96
    %v2288 = vpop.permute.xlu0 %2287
    %v2290 = vadd.f32 %v2284, %v2288
    %2291 = vmatprep.subr.mxu0 0.0
    %2292 = vmatpush1.msra.mxu0 %v31
    %2293 = vmatprep.subr.mxu0 0.0
    %2294 = vmatpush1.msra.mxu0 %v32
    %2295 = vmatprep.subr.mxu0 0.0
    %2296 = vmatpush1.msra.mxu0 %v33
    %2297 = vmatprep.subr.mxu0 0.0
    %2298 = vmatpush1.msra.mxu0 %v34
    %2299 = vmatprep.subr.mxu0 0.0
    %2300 = vmatpush1.msra.mxu0 0.0
    %2301 = vmatprep.subr.mxu0 0.0
    %2302 = vmatpush1.msra.mxu0 0.0
    %2303 = vmatprep.subr.mxu0 0.0
    %2304 = vmatpush1.msra.mxu0 0.0
    %2305 = vmatprep.subr.mxu0 0.0
    %2306 = vmatpush1.msra.mxu0 0.0
    %2307 = vmatprep.subr.mxu0 0.0
    %2308 = vmatpush1.msra.mxu0 0.0
    %2309 = vmatprep.subr.mxu0 0.0
    %2310 = vmatpush1.msra.mxu0 0.0
    %2311 = vmatprep.subr.mxu0 0.0
    %2312 = vmatpush1.msra.mxu0 0.0
    %2313 = vmatprep.subr.mxu0 0.0
    %2314 = vmatpush1.msra.mxu0 0.0
    %2315 = vmatprep.subr.mxu0 0.0
    %2316 = vmatpush1.msra.mxu0 0.0
    %2317 = vmatprep.subr.mxu0 0.0
    %2318 = vmatpush1.msra.mxu0 0.0
    %2319 = vmatprep.subr.mxu0 0.0
    %2320 = vmatpush1.msra.mxu0 0.0
    %2321 = vmatprep.subr.mxu0 0.0
    %2322 = vmatpush1.msra.mxu0 0.0
    %2323 = vmatprep.subr.mxu0 0.0
    %2324 = vmatpush1.msra.mxu0 0.0
    %2325 = vmatprep.subr.mxu0 0.0
    %2326 = vmatpush1.msra.mxu0 0.0
    %2327 = vmatprep.subr.mxu0 0.0
    %2328 = vmatpush1.msra.mxu0 0.0
    %2329 = vmatprep.subr.mxu0 0.0
    %2330 = vmatpush1.msra.mxu0 0.0
    %2331 = vmatprep.subr.mxu0 0.0
    %2332 = vmatpush1.msra.mxu0 0.0
    %2333 = vmatprep.subr.mxu0 0.0
    %2334 = vmatpush1.msra.mxu0 0.0
    %2335 = vmatprep.subr.mxu0 0.0
    %2336 = vmatpush1.msra.mxu0 0.0
    %2337 = vmatprep.subr.mxu0 0.0
    %2338 = vmatpush1.msra.mxu0 0.0
    %2339 = vmatprep.subr.mxu0 0.0
    %2340 = vmatpush1.msra.mxu0 0.0
    %2341 = vmatprep.subr.mxu0 0.0
    %2342 = vmatpush1.msra.mxu0 0.0
    %2343 = vmatprep.subr.mxu0 0.0
    %2344 = vmatpush1.msra.mxu0 0.0
    %2345 = vmatprep.subr.mxu0 0.0
    %2346 = vmatpush1.msra.mxu0 0.0
    %2347 = vmatprep.subr.mxu0 0.0
    %2348 = vmatpush1.msra.mxu0 0.0
    %2349 = vmatprep.subr.mxu0 0.0
    %2350 = vmatpush1.msra.mxu0 0.0
    %2351 = vmatprep.subr.mxu0 0.0
    %2352 = vmatpush1.msra.mxu0 0.0
    %2353 = vmatprep.subr.mxu0 0.0
    %2354 = vmatpush1.msra.mxu0 0.0
    %2355 = vmatprep.mubr.f32.mxu0 0.0
    %2356 = vmatmul.mubr.f32.gmra.mrb[0].mxu0 %v2043
    %v2357 = vpop.f32.mrb[0].mxu0
    %v2358 = vadd.f32 0.0, %v2357
    %v2359 = vpop.f32.mrb[0].mxu0
    %2360 = vdwg.mxu0
    %v2362 = vrot.slane %v2358, 6
    %v2364 = vadd.f32 %v147, %v2362
    %v2365 = vxor.u32 %v2364, 2147483648
    %v2366 = vmul.f32 %v2365, 1.442695
    %v2367 = vpow.pop %v2366
    %v2368 = vadd.f32 %v2367, 1.0
    %v2369 = vrcp.pop %v2368
    %v2370 = vmul.f32 1.0, %v2369
    %v2372 = vrot.slane %v2370, 2
    %2373 = vrot.lane.b32.xlu0 %v2372, 32
    %v2374 = vpop.permute.xlu0 %2373
    %v2376 = vmul.f32 %v2039, %v2374
    %2378 = vrot.lane.b32.xlu0 %v2376, 96
    %v2379 = vpop.permute.xlu0 %2378
    %v2380 = vsel %vm150, %v2379, 0
    %2382 = vmatprep.subr.mxu0 0.0
    %2383 = vmatpush1.msra.mxu0 %v39
    %2384 = vmatprep.subr.mxu0 0.0
    %2385 = vmatpush1.msra.mxu0 %v40
    %2386 = vmatprep.subr.mxu0 0.0
    %2387 = vmatpush1.msra.mxu0 %v41
    %2388 = vmatprep.subr.mxu0 0.0
    %2389 = vmatpush1.msra.mxu0 %v42
    %2390 = vmatprep.subr.mxu0 0.0
    %2391 = vmatpush1.msra.mxu0 0.0
    %2392 = vmatprep.subr.mxu0 0.0
    %2393 = vmatpush1.msra.mxu0 0.0
    %2394 = vmatprep.subr.mxu0 0.0
    %2395 = vmatpush1.msra.mxu0 0.0
    %2396 = vmatprep.subr.mxu0 0.0
    %2397 = vmatpush1.msra.mxu0 0.0
    %2398 = vmatprep.subr.mxu0 0.0
    %2399 = vmatpush1.msra.mxu0 0.0
    %2400 = vmatprep.subr.mxu0 0.0
    %2401 = vmatpush1.msra.mxu0 0.0
    %2402 = vmatprep.subr.mxu0 0.0
    %2403 = vmatpush1.msra.mxu0 0.0
    %2404 = vmatprep.subr.mxu0 0.0
    %2405 = vmatpush1.msra.mxu0 0.0
    %2406 = vmatprep.subr.mxu0 0.0
    %2407 = vmatpush1.msra.mxu0 0.0
    %2408 = vmatprep.subr.mxu0 0.0
    %2409 = vmatpush1.msra.mxu0 0.0
    %2410 = vmatprep.subr.mxu0 0.0
    %2411 = vmatpush1.msra.mxu0 0.0
    %2412 = vmatprep.subr.mxu0 0.0
    %2413 = vmatpush1.msra.mxu0 0.0
    %2414 = vmatprep.subr.mxu0 0.0
    %2415 = vmatpush1.msra.mxu0 0.0
    %2416 = vmatprep.subr.mxu0 0.0
    %2417 = vmatpush1.msra.mxu0 0.0
    %2418 = vmatprep.subr.mxu0 0.0
    %2419 = vmatpush1.msra.mxu0 0.0
    %2420 = vmatprep.subr.mxu0 0.0
    %2421 = vmatpush1.msra.mxu0 0.0
    %2422 = vmatprep.subr.mxu0 0.0
    %2423 = vmatpush1.msra.mxu0 0.0
    %2424 = vmatprep.subr.mxu0 0.0
    %2425 = vmatpush1.msra.mxu0 0.0
    %2426 = vmatprep.subr.mxu0 0.0
    %2427 = vmatpush1.msra.mxu0 0.0
    %2428 = vmatprep.subr.mxu0 0.0
    %2429 = vmatpush1.msra.mxu0 0.0
    %2430 = vmatprep.subr.mxu0 0.0
    %2431 = vmatpush1.msra.mxu0 0.0
    %2432 = vmatprep.subr.mxu0 0.0
    %2433 = vmatpush1.msra.mxu0 0.0
    %2434 = vmatprep.subr.mxu0 0.0
    %2435 = vmatpush1.msra.mxu0 0.0
    %2436 = vmatprep.subr.mxu0 0.0
    %2437 = vmatpush1.msra.mxu0 0.0
    %2438 = vmatprep.subr.mxu0 0.0
    %2439 = vmatpush1.msra.mxu0 0.0
    %2440 = vmatprep.subr.mxu0 0.0
    %2441 = vmatpush1.msra.mxu0 0.0
    %2442 = vmatprep.subr.mxu0 0.0
    %2443 = vmatpush1.msra.mxu0 0.0
    %2444 = vmatprep.subr.mxu0 0.0
    %2445 = vmatpush1.msra.mxu0 0.0
    %2446 = vmatprep.mubr.f32.mxu0 0.0
    %2447 = vmatmul.mubr.f32.gmra.mrb[0].mxu0 %v2380
    %v2448 = vpop.f32.mrb[0].mxu0
    %v2449 = vadd.f32 0.0, %v2448
    %v2450 = vpop.f32.mrb[0].mxu0
    %2451 = vdwg.mxu0
    %v2453 = vrot.slane %v2449, 6
    %2454 = vrot.lane.b32.xlu0 %v2453, 64
    %v2455 = vpop.permute.xlu0 %2454
    %v2457 = vadd.f32 %v2364, %v2455
    %v2458 = vtanh.pop %v2457
    %v2459 = vsub.f32 1.0, %v2370
    %v2461 = vrot.slane %v2459, 2
    %v2463 = vmul.f32 %v2039, %v2461
    %2464 = vrot.lane.b32.xlu0 %v2370, 32
    %v2465 = vpop.permute.xlu0 %2464
    %v2467 = vmul.f32 %v2458, %v2465
    %v2469 = vrot.slane %v2467, 2
    %2470 = vrot.lane.b32.xlu0 %v2469, 96
    %v2471 = vpop.permute.xlu0 %2470
    %v2473 = vadd.f32 %v2463, %v2471
    %2475 = vrot.lane.b32.xlu0 %v2473, 96
    %v2476 = vpop.permute.xlu0 %2475
    %v2477 = vsel %vm150, %v2476, 0
    %2479 = vmatprep.subr.mxu0 0.0
    %2480 = vmatpush1.msra.mxu0 %v27
    %2481 = vmatprep.subr.mxu0 0.0
    %2482 = vmatpush1.msra.mxu0 %v28
    %2483 = vmatprep.subr.mxu0 0.0
    %2484 = vmatpush1.msra.mxu0 %v29
    %2485 = vmatprep.subr.mxu0 0.0
    %2486 = vmatpush1.msra.mxu0 %v30
    %2487 = vmatprep.subr.mxu0 0.0
    %2488 = vmatpush1.msra.mxu0 0.0
    %2489 = vmatprep.subr.mxu0 0.0
    %2490 = vmatpush1.msra.mxu0 0.0
    %2491 = vmatprep.subr.mxu0 0.0
    %2492 = vmatpush1.msra.mxu0 0.0
    %2493 = vmatprep.subr.mxu0 0.0
    %2494 = vmatpush1.msra.mxu0 0.0
    %2495 = vmatprep.subr.mxu0 0.0
    %2496 = vmatpush1.msra.mxu0 0.0
    %2497 = vmatprep.subr.mxu0 0.0
    %2498 = vmatpush1.msra.mxu0 0.0
    %2499 = vmatprep.subr.mxu0 0.0
    %2500 = vmatpush1.msra.mxu0 0.0
    %2501 = vmatprep.subr.mxu0 0.0
    %2502 = vmatpush1.msra.mxu0 0.0
    %2503 = vmatprep.subr.mxu0 0.0
    %2504 = vmatpush1.msra.mxu0 0.0
    %2505 = vmatprep.subr.mxu0 0.0
    %2506 = vmatpush1.msra.mxu0 0.0
    %2507 = vmatprep.subr.mxu0 0.0
    %2508 = vmatpush1.msra.mxu0 0.0
    %2509 = vmatprep.subr.mxu0 0.0
    %2510 = vmatpush1.msra.mxu0 0.0
    %2511 = vmatprep.subr.mxu0 0.0
    %2512 = vmatpush1.msra.mxu0 0.0
    %2513 = vmatprep.subr.mxu0 0.0
    %2514 = vmatpush1.msra.mxu0 0.0
    %2515 = vmatprep.subr.mxu0 0.0
    %2516 = vmatpush1.msra.mxu0 0.0
    %2517 = vmatprep.subr.mxu0 0.0
    %2518 = vmatpush1.msra.mxu0 0.0
    %2519 = vmatprep.subr.mxu0 0.0
    %2520 = vmatpush1.msra.mxu0 0.0
    %2521 = vmatprep.subr.mxu0 0.0
    %2522 = vmatpush1.msra.mxu0 0.0
    %2523 = vmatprep.subr.mxu0 0.0
    %2524 = vmatpush1.msra.mxu0 0.0
    %2525 = vmatprep.subr.mxu0 0.0
    %2526 = vmatpush1.msra.mxu0 0.0
    %2527 = vmatprep.subr.mxu0 0.0
    %2528 = vmatpush1.msra.mxu0 0.0
    %2529 = vmatprep.subr.mxu0 0.0
    %2530 = vmatpush1.msra.mxu0 0.0
    %2531 = vmatprep.subr.mxu0 0.0
    %2532 = vmatpush1.msra.mxu0 0.0
    %2533 = vmatprep.subr.mxu0 0.0
    %2534 = vmatpush1.msra.mxu0 0.0
    %2535 = vmatprep.subr.mxu0 0.0
    %2536 = vmatpush1.msra.mxu0 0.0
    %2537 = vmatprep.subr.mxu0 0.0
    %2538 = vmatpush1.msra.mxu0 0.0
    %2539 = vmatprep.subr.mxu0 0.0
    %2540 = vmatpush1.msra.mxu0 0.0
    %2541 = vmatprep.subr.mxu0 0.0
    %2542 = vmatpush1.msra.mxu0 0.0
    %2543 = vmatprep.mubr.f32.mxu0 0.0
    %2544 = vmatmul.mubr.f32.gmra.mrb[0].mxu0 %v2477
    %v2545 = vpop.f32.mrb[0].mxu0
    %v2546 = vadd.f32 %v52, %v2545
    %v2547 = vpop.f32.mrb[0].mxu0
    %2548 = vdwg.mxu0
    %2550 = vrot.lane.b32.xlu0 %v2290, 96
    %v2551 = vpop.permute.xlu0 %2550
    %v2552 = vsel %vm150, %v2551, 0
    %2554 = vmatprep.subr.mxu0 0.0
    %2555 = vmatpush1.msra.mxu0 %v35
    %2556 = vmatprep.subr.mxu0 0.0
    %2557 = vmatpush1.msra.mxu0 %v36
    %2558 = vmatprep.subr.mxu0 0.0
    %2559 = vmatpush1.msra.mxu0 %v37
    %2560 = vmatprep.subr.mxu0 0.0
    %2561 = vmatpush1.msra.mxu0 %v38
    %2562 = vmatprep.subr.mxu0 0.0
    %2563 = vmatpush1.msra.mxu0 0.0
    %2564 = vmatprep.subr.mxu0 0.0
    %2565 = vmatpush1.msra.mxu0 0.0
    %2566 = vmatprep.subr.mxu0 0.0
    %2567 = vmatpush1.msra.mxu0 0.0
    %2568 = vmatprep.subr.mxu0 0.0
    %2569 = vmatpush1.msra.mxu0 0.0
    %2570 = vmatprep.subr.mxu0 0.0
    %2571 = vmatpush1.msra.mxu0 0.0
    %2572 = vmatprep.subr.mxu0 0.0
    %2573 = vmatpush1.msra.mxu0 0.0
    %2574 = vmatprep.subr.mxu0 0.0
    %2575 = vmatpush1.msra.mxu0 0.0
    %2576 = vmatprep.subr.mxu0 0.0
    %2577 = vmatpush1.msra.mxu0 0.0
    %2578 = vmatprep.subr.mxu0 0.0
    %2579 = vmatpush1.msra.mxu0 0.0
    %2580 = vmatprep.subr.mxu0 0.0
    %2581 = vmatpush1.msra.mxu0 0.0
    %2582 = vmatprep.subr.mxu0 0.0
    %2583 = vmatpush1.msra.mxu0 0.0
    %2584 = vmatprep.subr.mxu0 0.0
    %2585 = vmatpush1.msra.mxu0 0.0
    %2586 = vmatprep.subr.mxu0 0.0
    %2587 = vmatpush1.msra.mxu0 0.0
    %2588 = vmatprep.subr.mxu0 0.0
    %2589 = vmatpush1.msra.mxu0 0.0
    %2590 = vmatprep.subr.mxu0 0.0
    %2591 = vmatpush1.msra.mxu0 0.0
    %2592 = vmatprep.subr.mxu0 0.0
    %2593 = vmatpush1.msra.mxu0 0.0
    %2594 = vmatprep.subr.mxu0 0.0
    %2595 = vmatpush1.msra.mxu0 0.0
    %2596 = vmatprep.subr.mxu0 0.0
    %2597 = vmatpush1.msra.mxu0 0.0
    %2598 = vmatprep.subr.mxu0 0.0
    %2599 = vmatpush1.msra.mxu0 0.0
    %2600 = vmatprep.subr.mxu0 0.0
    %2601 = vmatpush1.msra.mxu0 0.0
    %2602 = vmatprep.subr.mxu0 0.0
    %2603 = vmatpush1.msra.mxu0 0.0
    %2604 = vmatprep.subr.mxu0 0.0
    %2605 = vmatpush1.msra.mxu0 0.0
    %2606 = vmatprep.subr.mxu0 0.0
    %2607 = vmatpush1.msra.mxu0 0.0
    %2608 = vmatprep.subr.mxu0 0.0
    %2609 = vmatpush1.msra.mxu0 0.0
    %2610 = vmatprep.subr.mxu0 0.0
    %2611 = vmatpush1.msra.mxu0 0.0
    %2612 = vmatprep.subr.mxu0 0.0
    %2613 = vmatpush1.msra.mxu0 0.0
    %2614 = vmatprep.subr.mxu0 0.0
    %2615 = vmatpush1.msra.mxu0 0.0
    %2616 = vmatprep.subr.mxu0 0.0
    %2617 = vmatpush1.msra.mxu0 0.0
    %2618 = vmatprep.mubr.f32.mxu0 0.0
    %2619 = vmatmul.mubr.f32.gmra.mrb[0].mxu0 %v2552
    %v2620 = vpop.f32.mrb[0].mxu0
    %v2621 = vadd.f32 0.0, %v2620
    %v2622 = vpop.f32.mrb[0].mxu0
    %2623 = vdwg.mxu0
    %v2624 = vadd.f32 %v2546, %v2621
    %v2625 = vxor.u32 %v2624, 2147483648
    %v2626 = vmul.f32 %v2625, 1.442695
    %v2627 = vpow.pop %v2626
    %v2628 = vadd.f32 %v2627, 1.0
    %v2629 = vrcp.pop %v2628
    %v2630 = vmul.f32 1.0, %v2629
    %2632 = vrot.lane.b32.xlu0 %v2630, 32
    %v2633 = vpop.permute.xlu0 %2632
    %v2635 = vmul.f32 %v2290, %v2633
    %2637 = vrot.lane.b32.xlu0 %v2635, 96
    %v2638 = vpop.permute.xlu0 %2637
    %v2639 = vsel %vm150, %v2638, 0
    %2641 = vmatprep.subr.mxu0 0.0
    %2642 = vmatpush1.msra.mxu0 %v43
    %2643 = vmatprep.subr.mxu0 0.0
    %2644 = vmatpush1.msra.mxu0 %v44
    %2645 = vmatprep.subr.mxu0 0.0
    %2646 = vmatpush1.msra.mxu0 %v45
    %2647 = vmatprep.subr.mxu0 0.0
    %2648 = vmatpush1.msra.mxu0 %v46
    %2649 = vmatprep.subr.mxu0 0.0
    %2650 = vmatpush1.msra.mxu0 0.0
    %2651 = vmatprep.subr.mxu0 0.0
    %2652 = vmatpush1.msra.mxu0 0.0
    %2653 = vmatprep.subr.mxu0 0.0
    %2654 = vmatpush1.msra.mxu0 0.0
    %2655 = vmatprep.subr.mxu0 0.0
    %2656 = vmatpush1.msra.mxu0 0.0
    %2657 = vmatprep.subr.mxu0 0.0
    %2658 = vmatpush1.msra.mxu0 0.0
    %2659 = vmatprep.subr.mxu0 0.0
    %2660 = vmatpush1.msra.mxu0 0.0
    %2661 = vmatprep.subr.mxu0 0.0
    %2662 = vmatpush1.msra.mxu0 0.0
    %2663 = vmatprep.subr.mxu0 0.0
    %2664 = vmatpush1.msra.mxu0 0.0
    %2665 = vmatprep.subr.mxu0 0.0
    %2666 = vmatpush1.msra.mxu0 0.0
    %2667 = vmatprep.subr.mxu0 0.0
    %2668 = vmatpush1.msra.mxu0 0.0
    %2669 = vmatprep.subr.mxu0 0.0
    %2670 = vmatpush1.msra.mxu0 0.0
    %2671 = vmatprep.subr.mxu0 0.0
    %2672 = vmatpush1.msra.mxu0 0.0
    %2673 = vmatprep.subr.mxu0 0.0
    %2674 = vmatpush1.msra.mxu0 0.0
    %2675 = vmatprep.subr.mxu0 0.0
    %2676 = vmatpush1.msra.mxu0 0.0
    %2677 = vmatprep.subr.mxu0 0.0
    %2678 = vmatpush1.msra.mxu0 0.0
    %2679 = vmatprep.subr.mxu0 0.0
    %2680 = vmatpush1.msra.mxu0 0.0
    %2681 = vmatprep.subr.mxu0 0.0
    %2682 = vmatpush1.msra.mxu0 0.0
    %2683 = vmatprep.subr.mxu0 0.0
    %2684 = vmatpush1.msra.mxu0 0.0
    %2685 = vmatprep.subr.mxu0 0.0
    %2686 = vmatpush1.msra.mxu0 0.0
    %2687 = vmatprep.subr.mxu0 0.0
    %2688 = vmatpush1.msra.mxu0 0.0
    %2689 = vmatprep.subr.mxu0 0.0
    %2690 = vmatpush1.msra.mxu0 0.0
    %2691 = vmatprep.subr.mxu0 0.0
    %2692 = vmatpush1.msra.mxu0 0.0
    %2693 = vmatprep.subr.mxu0 0.0
    %2694 = vmatpush1.msra.mxu0 0.0
    %2695 = vmatprep.subr.mxu0 0.0
    %2696 = vmatpush1.msra.mxu0 0.0
    %2697 = vmatprep.subr.mxu0 0.0
    %2698 = vmatpush1.msra.mxu0 0.0
    %2699 = vmatprep.subr.mxu0 0.0
    %2700 = vmatpush1.msra.mxu0 0.0
    %2701 = vmatprep.subr.mxu0 0.0
    %2702 = vmatpush1.msra.mxu0 0.0
    %2703 = vmatprep.subr.mxu0 0.0
    %2704 = vmatpush1.msra.mxu0 0.0
    %2705 = vmatprep.mubr.f32.mxu0 0.0
    %2706 = vmatmul.mubr.f32.gmra.mrb[0].mxu0 %v2639
    %v2707 = vpop.f32.mrb[0].mxu0
    %v2708 = vadd.f32 0.0, %v2707
    %v2709 = vpop.f32.mrb[0].mxu0
    %2710 = vdwg.mxu0
    %2712 = vrot.lane.b32.xlu0 %v2708, 64
    %v2713 = vpop.permute.xlu0 %2712
    %v2715 = vadd.f32 %v2624, %v2713
    %v2716 = vtanh.pop %v2715
    %v2717 = vsub.f32 1.0, %v2630
    %v2718 = vmul.f32 %v2290, %v2717
    %v2719 = vmul.f32 %v2716, %v2633
    %2721 = vrot.lane.b32.xlu0 %v2719, 96
    %v2722 = vpop.permute.xlu0 %2721
    %v2724 = vadd.f32 %v2718, %v2722
    %2725 = vmatprep.subr.mxu0 0.0
    %2726 = vmatpush1.msra.mxu0 %v31
    %2727 = vmatprep.subr.mxu0 0.0
    %2728 = vmatpush1.msra.mxu0 %v32
    %2729 = vmatprep.subr.mxu0 0.0
    %2730 = vmatpush1.msra.mxu0 %v33
    %2731 = vmatprep.subr.mxu0 0.0
    %2732 = vmatpush1.msra.mxu0 %v34
    %2733 = vmatprep.subr.mxu0 0.0
    %2734 = vmatpush1.msra.mxu0 0.0
    %2735 = vmatprep.subr.mxu0 0.0
    %2736 = vmatpush1.msra.mxu0 0.0
    %2737 = vmatprep.subr.mxu0 0.0
    %2738 = vmatpush1.msra.mxu0 0.0
    %2739 = vmatprep.subr.mxu0 0.0
    %2740 = vmatpush1.msra.mxu0 0.0
    %2741 = vmatprep.subr.mxu0 0.0
    %2742 = vmatpush1.msra.mxu0 0.0
    %2743 = vmatprep.subr.mxu0 0.0
    %2744 = vmatpush1.msra.mxu0 0.0
    %2745 = vmatprep.subr.mxu0 0.0
    %2746 = vmatpush1.msra.mxu0 0.0
    %2747 = vmatprep.subr.mxu0 0.0
    %2748 = vmatpush1.msra.mxu0 0.0
    %2749 = vmatprep.subr.mxu0 0.0
    %2750 = vmatpush1.msra.mxu0 0.0
    %2751 = vmatprep.subr.mxu0 0.0
    %2752 = vmatpush1.msra.mxu0 0.0
    %2753 = vmatprep.subr.mxu0 0.0
    %2754 = vmatpush1.msra.mxu0 0.0
    %2755 = vmatprep.subr.mxu0 0.0
    %2756 = vmatpush1.msra.mxu0 0.0
    %2757 = vmatprep.subr.mxu0 0.0
    %2758 = vmatpush1.msra.mxu0 0.0
    %2759 = vmatprep.subr.mxu0 0.0
    %2760 = vmatpush1.msra.mxu0 0.0
    %2761 = vmatprep.subr.mxu0 0.0
    %2762 = vmatpush1.msra.mxu0 0.0
    %2763 = vmatprep.subr.mxu0 0.0
    %2764 = vmatpush1.msra.mxu0 0.0
    %2765 = vmatprep.subr.mxu0 0.0
    %2766 = vmatpush1.msra.mxu0 0.0
    %2767 = vmatprep.subr.mxu0 0.0
    %2768 = vmatpush1.msra.mxu0 0.0
    %2769 = vmatprep.subr.mxu0 0.0
    %2770 = vmatpush1.msra.mxu0 0.0
    %2771 = vmatprep.subr.mxu0 0.0
    %2772 = vmatpush1.msra.mxu0 0.0
    %2773 = vmatprep.subr.mxu0 0.0
    %2774 = vmatpush1.msra.mxu0 0.0
    %2775 = vmatprep.subr.mxu0 0.0
    %2776 = vmatpush1.msra.mxu0 0.0
    %2777 = vmatprep.subr.mxu0 0.0
    %2778 = vmatpush1.msra.mxu0 0.0
    %2779 = vmatprep.subr.mxu0 0.0
    %2780 = vmatpush1.msra.mxu0 0.0
    %2781 = vmatprep.subr.mxu0 0.0
    %2782 = vmatpush1.msra.mxu0 0.0
    %2783 = vmatprep.subr.mxu0 0.0
    %2784 = vmatpush1.msra.mxu0 0.0
    %2785 = vmatprep.subr.mxu0 0.0
    %2786 = vmatpush1.msra.mxu0 0.0
    %2787 = vmatprep.subr.mxu0 0.0
    %2788 = vmatpush1.msra.mxu0 0.0
    %2789 = vmatprep.mubr.f32.mxu0 0.0
    %2790 = vmatmul.mubr.f32.gmra.mrb[0].mxu0 %v2477
    %v2791 = vpop.f32.mrb[0].mxu0
    %v2792 = vadd.f32 0.0, %v2791
    %v2793 = vpop.f32.mrb[0].mxu0
    %2794 = vdwg.mxu0
    %v2796 = vrot.slane %v2792, 4
    %v2798 = vadd.f32 %v147, %v2796
    %v2799 = vxor.u32 %v2798, 2147483648
    %v2800 = vmul.f32 %v2799, 1.442695
    %v2801 = vpow.pop %v2800
    %v2802 = vadd.f32 %v2801, 1.0
    %v2803 = vrcp.pop %v2802
    %v2804 = vmul.f32 1.0, %v2803
    %v2806 = vrot.slane %v2804, 4
    %2807 = vrot.lane.b32.xlu0 %v2806, 32
    %v2808 = vpop.permute.xlu0 %2807
    %v2810 = vmul.f32 %v2473, %v2808
    %2812 = vrot.lane.b32.xlu0 %v2810, 96
    %v2813 = vpop.permute.xlu0 %2812
    %v2814 = vsel %vm150, %v2813, 0
    %2816 = vmatprep.subr.mxu0 0.0
    %2817 = vmatpush1.msra.mxu0 %v39
    %2818 = vmatprep.subr.mxu0 0.0
    %2819 = vmatpush1.msra.mxu0 %v40
    %2820 = vmatprep.subr.mxu0 0.0
    %2821 = vmatpush1.msra.mxu0 %v41
    %2822 = vmatprep.subr.mxu0 0.0
    %2823 = vmatpush1.msra.mxu0 %v42
    %2824 = vmatprep.subr.mxu0 0.0
    %2825 = vmatpush1.msra.mxu0 0.0
    %2826 = vmatprep.subr.mxu0 0.0
    %2827 = vmatpush1.msra.mxu0 0.0
    %2828 = vmatprep.subr.mxu0 0.0
    %2829 = vmatpush1.msra.mxu0 0.0
    %2830 = vmatprep.subr.mxu0 0.0
    %2831 = vmatpush1.msra.mxu0 0.0
    %2832 = vmatprep.subr.mxu0 0.0
    %2833 = vmatpush1.msra.mxu0 0.0
    %2834 = vmatprep.subr.mxu0 0.0
    %2835 = vmatpush1.msra.mxu0 0.0
    %2836 = vmatprep.subr.mxu0 0.0
    %2837 = vmatpush1.msra.mxu0 0.0
    %2838 = vmatprep.subr.mxu0 0.0
    %2839 = vmatpush1.msra.mxu0 0.0
    %2840 = vmatprep.subr.mxu0 0.0
    %2841 = vmatpush1.msra.mxu0 0.0
    %2842 = vmatprep.subr.mxu0 0.0
    %2843 = vmatpush1.msra.mxu0 0.0
    %2844 = vmatprep.subr.mxu0 0.0
    %2845 = vmatpush1.msra.mxu0 0.0
    %2846 = vmatprep.subr.mxu0 0.0
    %2847 = vmatpush1.msra.mxu0 0.0
    %2848 = vmatprep.subr.mxu0 0.0
    %2849 = vmatpush1.msra.mxu0 0.0
    %2850 = vmatprep.subr.mxu0 0.0
    %2851 = vmatpush1.msra.mxu0 0.0
    %2852 = vmatprep.subr.mxu0 0.0
    %2853 = vmatpush1.msra.mxu0 0.0
    %2854 = vmatprep.subr.mxu0 0.0
    %2855 = vmatpush1.msra.mxu0 0.0
    %2856 = vmatprep.subr.mxu0 0.0
    %2857 = vmatpush1.msra.mxu0 0.0
    %2858 = vmatprep.subr.mxu0 0.0
    %2859 = vmatpush1.msra.mxu0 0.0
    %2860 = vmatprep.subr.mxu0 0.0
    %2861 = vmatpush1.msra.mxu0 0.0
    %2862 = vmatprep.subr.mxu0 0.0
    %2863 = vmatpush1.msra.mxu0 0.0
    %2864 = vmatprep.subr.mxu0 0.0
    %2865 = vmatpush1.msra.mxu0 0.0
    %2866 = vmatprep.subr.mxu0 0.0
    %2867 = vmatpush1.msra.mxu0 0.0
    %2868 = vmatprep.subr.mxu0 0.0
    %2869 = vmatpush1.msra.mxu0 0.0
    %2870 = vmatprep.subr.mxu0 0.0
    %2871 = vmatpush1.msra.mxu0 0.0
    %2872 = vmatprep.subr.mxu0 0.0
    %2873 = vmatpush1.msra.mxu0 0.0
    %2874 = vmatprep.subr.mxu0 0.0
    %2875 = vmatpush1.msra.mxu0 0.0
    %2876 = vmatprep.subr.mxu0 0.0
    %2877 = vmatpush1.msra.mxu0 0.0
    %2878 = vmatprep.subr.mxu0 0.0
    %2879 = vmatpush1.msra.mxu0 0.0
    %2880 = vmatprep.mubr.f32.mxu0 0.0
    %2881 = vmatmul.mubr.f32.gmra.mrb[0].mxu0 %v2814
    %v2882 = vpop.f32.mrb[0].mxu0
    %v2883 = vadd.f32 0.0, %v2882
    %v2884 = vpop.f32.mrb[0].mxu0
    %2885 = vdwg.mxu0
    %v2887 = vrot.slane %v2883, 4
    %2888 = vrot.lane.b32.xlu0 %v2887, 64
    %v2889 = vpop.permute.xlu0 %2888
    %v2891 = vadd.f32 %v2798, %v2889
    %v2892 = vtanh.pop %v2891
    %v2893 = vsub.f32 1.0, %v2804
    %v2895 = vrot.slane %v2893, 4
    %v2897 = vmul.f32 %v2473, %v2895
    %2898 = vrot.lane.b32.xlu0 %v2804, 32
    %v2899 = vpop.permute.xlu0 %2898
    %v2901 = vmul.f32 %v2892, %v2899
    %v2903 = vrot.slane %v2901, 4
    %2904 = vrot.lane.b32.xlu0 %v2903, 96
    %v2905 = vpop.permute.xlu0 %2904
    %v2907 = vadd.f32 %v2897, %v2905
    %2909 = vrot.lane.b32.xlu0 %v2907, 96
    %v2910 = vpop.permute.xlu0 %2909
    %v2911 = vsel %vm150, %v2910, 0
    %2913 = vmatprep.subr.mxu0 0.0
    %2914 = vmatpush1.msra.mxu0 %v27
    %2915 = vmatprep.subr.mxu0 0.0
    %2916 = vmatpush1.msra.mxu0 %v28
    %2917 = vmatprep.subr.mxu0 0.0
    %2918 = vmatpush1.msra.mxu0 %v29
    %2919 = vmatprep.subr.mxu0 0.0
    %2920 = vmatpush1.msra.mxu0 %v30
    %2921 = vmatprep.subr.mxu0 0.0
    %2922 = vmatpush1.msra.mxu0 0.0
    %2923 = vmatprep.subr.mxu0 0.0
    %2924 = vmatpush1.msra.mxu0 0.0
    %2925 = vmatprep.subr.mxu0 0.0
    %2926 = vmatpush1.msra.mxu0 0.0
    %2927 = vmatprep.subr.mxu0 0.0
    %2928 = vmatpush1.msra.mxu0 0.0
    %2929 = vmatprep.subr.mxu0 0.0
    %2930 = vmatpush1.msra.mxu0 0.0
    %2931 = vmatprep.subr.mxu0 0.0
    %2932 = vmatpush1.msra.mxu0 0.0
    %2933 = vmatprep.subr.mxu0 0.0
    %2934 = vmatpush1.msra.mxu0 0.0
    %2935 = vmatprep.subr.mxu0 0.0
    %2936 = vmatpush1.msra.mxu0 0.0
    %2937 = vmatprep.subr.mxu0 0.0
    %2938 = vmatpush1.msra.mxu0 0.0
    %2939 = vmatprep.subr.mxu0 0.0
    %2940 = vmatpush1.msra.mxu0 0.0
    %2941 = vmatprep.subr.mxu0 0.0
    %2942 = vmatpush1.msra.mxu0 0.0
    %2943 = vmatprep.subr.mxu0 0.0
    %2944 = vmatpush1.msra.mxu0 0.0
    %2945 = vmatprep.subr.mxu0 0.0
    %2946 = vmatpush1.msra.mxu0 0.0
    %2947 = vmatprep.subr.mxu0 0.0
    %2948 = vmatpush1.msra.mxu0 0.0
    %2949 = vmatprep.subr.mxu0 0.0
    %2950 = vmatpush1.msra.mxu0 0.0
    %2951 = vmatprep.subr.mxu0 0.0
    %2952 = vmatpush1.msra.mxu0 0.0
    %2953 = vmatprep.subr.mxu0 0.0
    %2954 = vmatpush1.msra.mxu0 0.0
    %2955 = vmatprep.subr.mxu0 0.0
    %2956 = vmatpush1.msra.mxu0 0.0
    %2957 = vmatprep.subr.mxu0 0.0
    %2958 = vmatpush1.msra.mxu0 0.0
    %2959 = vmatprep.subr.mxu0 0.0
    %2960 = vmatpush1.msra.mxu0 0.0
    %2961 = vmatprep.subr.mxu0 0.0
    %2962 = vmatpush1.msra.mxu0 0.0
    %2963 = vmatprep.subr.mxu0 0.0
    %2964 = vmatpush1.msra.mxu0 0.0
    %2965 = vmatprep.subr.mxu0 0.0
    %2966 = vmatpush1.msra.mxu0 0.0
    %2967 = vmatprep.subr.mxu0 0.0
    %2968 = vmatpush1.msra.mxu0 0.0
    %2969 = vmatprep.subr.mxu0 0.0
    %2970 = vmatpush1.msra.mxu0 0.0
    %2971 = vmatprep.subr.mxu0 0.0
    %2972 = vmatpush1.msra.mxu0 0.0
    %2973 = vmatprep.subr.mxu0 0.0
    %2974 = vmatpush1.msra.mxu0 0.0
    %2975 = vmatprep.subr.mxu0 0.0
    %2976 = vmatpush1.msra.mxu0 0.0
    %2977 = vmatprep.mubr.f32.mxu0 0.0
    %2978 = vmatmul.mubr.f32.gmra.mrb[0].mxu0 %v2911
    %v2979 = vpop.f32.mrb[0].mxu0
    %v2980 = vadd.f32 %v52, %v2979
    %v2981 = vpop.f32.mrb[0].mxu0
    %2982 = vdwg.mxu0
    %2984 = vrot.lane.b32.xlu0 %v2724, 96
    %v2985 = vpop.permute.xlu0 %2984
    %v2986 = vsel %vm150, %v2985, 0
    %2988 = vmatprep.subr.mxu0 0.0
    %2989 = vmatpush1.msra.mxu0 %v35
    %2990 = vmatprep.subr.mxu0 0.0
    %2991 = vmatpush1.msra.mxu0 %v36
    %2992 = vmatprep.subr.mxu0 0.0
    %2993 = vmatpush1.msra.mxu0 %v37
    %2994 = vmatprep.subr.mxu0 0.0
    %2995 = vmatpush1.msra.mxu0 %v38
    %2996 = vmatprep.subr.mxu0 0.0
    %2997 = vmatpush1.msra.mxu0 0.0
    %2998 = vmatprep.subr.mxu0 0.0
    %2999 = vmatpush1.msra.mxu0 0.0
    %3000 = vmatprep.subr.mxu0 0.0
    %3001 = vmatpush1.msra.mxu0 0.0
    %3002 = vmatprep.subr.mxu0 0.0
    %3003 = vmatpush1.msra.mxu0 0.0
    %3004 = vmatprep.subr.mxu0 0.0
    %3005 = vmatpush1.msra.mxu0 0.0
    %3006 = vmatprep.subr.mxu0 0.0
    %3007 = vmatpush1.msra.mxu0 0.0
    %3008 = vmatprep.subr.mxu0 0.0
    %3009 = vmatpush1.msra.mxu0 0.0
    %3010 = vmatprep.subr.mxu0 0.0
    %3011 = vmatpush1.msra.mxu0 0.0
    %3012 = vmatprep.subr.mxu0 0.0
    %3013 = vmatpush1.msra.mxu0 0.0
    %3014 = vmatprep.subr.mxu0 0.0
    %3015 = vmatpush1.msra.mxu0 0.0
    %3016 = vmatprep.subr.mxu0 0.0
    %3017 = vmatpush1.msra.mxu0 0.0
    %3018 = vmatprep.subr.mxu0 0.0
    %3019 = vmatpush1.msra.mxu0 0.0
    %3020 = vmatprep.subr.mxu0 0.0
    %3021 = vmatpush1.msra.mxu0 0.0
    %3022 = vmatprep.subr.mxu0 0.0
    %3023 = vmatpush1.msra.mxu0 0.0
    %3024 = vmatprep.subr.mxu0 0.0
    %3025 = vmatpush1.msra.mxu0 0.0
    %3026 = vmatprep.subr.mxu0 0.0
    %3027 = vmatpush1.msra.mxu0 0.0
    %3028 = vmatprep.subr.mxu0 0.0
    %3029 = vmatpush1.msra.mxu0 0.0
    %3030 = vmatprep.subr.mxu0 0.0
    %3031 = vmatpush1.msra.mxu0 0.0
    %3032 = vmatprep.subr.mxu0 0.0
    %3033 = vmatpush1.msra.mxu0 0.0
    %3034 = vmatprep.subr.mxu0 0.0
    %3035 = vmatpush1.msra.mxu0 0.0
    %3036 = vmatprep.subr.mxu0 0.0
    %3037 = vmatpush1.msra.mxu0 0.0
    %3038 = vmatprep.subr.mxu0 0.0
    %3039 = vmatpush1.msra.mxu0 0.0
    %3040 = vmatprep.subr.mxu0 0.0
    %3041 = vmatpush1.msra.mxu0 0.0
    %3042 = vmatprep.subr.mxu0 0.0
    %3043 = vmatpush1.msra.mxu0 0.0
    %3044 = vmatprep.subr.mxu0 0.0
    %3045 = vmatpush1.msra.mxu0 0.0
    %3046 = vmatprep.subr.mxu0 0.0
    %3047 = vmatpush1.msra.mxu0 0.0
    %3048 = vmatprep.subr.mxu0 0.0
    %3049 = vmatpush1.msra.mxu0 0.0
    %3050 = vmatprep.subr.mxu0 0.0
    %3051 = vmatpush1.msra.mxu0 0.0
    %3052 = vmatprep.mubr.f32.mxu0 0.0
    %3053 = vmatmul.mubr.f32.gmra.mrb[0].mxu0 %v2986
    %v3054 = vpop.f32.mrb[0].mxu0
    %v3055 = vadd.f32 0.0, %v3054
    %v3056 = vpop.f32.mrb[0].mxu0
    %3057 = vdwg.mxu0
    %v3058 = vadd.f32 %v2980, %v3055
    %v3059 = vxor.u32 %v3058, 2147483648
    %v3060 = vmul.f32 %v3059, 1.442695
    %v3061 = vpow.pop %v3060
    %v3062 = vadd.f32 %v3061, 1.0
    %v3063 = vrcp.pop %v3062
    %v3064 = vmul.f32 1.0, %v3063
    %3066 = vrot.lane.b32.xlu0 %v3064, 32
    %v3067 = vpop.permute.xlu0 %3066
    %v3069 = vmul.f32 %v2724, %v3067
    %3071 = vrot.lane.b32.xlu0 %v3069, 96
    %v3072 = vpop.permute.xlu0 %3071
    %v3073 = vsel %vm150, %v3072, 0
    %3075 = vmatprep.subr.mxu0 0.0
    %3076 = vmatpush1.msra.mxu0 %v43
    %3077 = vmatprep.subr.mxu0 0.0
    %3078 = vmatpush1.msra.mxu0 %v44
    %3079 = vmatprep.subr.mxu0 0.0
    %3080 = vmatpush1.msra.mxu0 %v45
    %3081 = vmatprep.subr.mxu0 0.0
    %3082 = vmatpush1.msra.mxu0 %v46
    %3083 = vmatprep.subr.mxu0 0.0
    %3084 = vmatpush1.msra.mxu0 0.0
    %3085 = vmatprep.subr.mxu0 0.0
    %3086 = vmatpush1.msra.mxu0 0.0
    %3087 = vmatprep.subr.mxu0 0.0
    %3088 = vmatpush1.msra.mxu0 0.0
    %3089 = vmatprep.subr.mxu0 0.0
    %3090 = vmatpush1.msra.mxu0 0.0
    %3091 = vmatprep.subr.mxu0 0.0
    %3092 = vmatpush1.msra.mxu0 0.0
    %3093 = vmatprep.subr.mxu0 0.0
    %3094 = vmatpush1.msra.mxu0 0.0
    %3095 = vmatprep.subr.mxu0 0.0
    %3096 = vmatpush1.msra.mxu0 0.0
    %3097 = vmatprep.subr.mxu0 0.0
    %3098 = vmatpush1.msra.mxu0 0.0
    %3099 = vmatprep.subr.mxu0 0.0
    %3100 = vmatpush1.msra.mxu0 0.0
    %3101 = vmatprep.subr.mxu0 0.0
    %3102 = vmatpush1.msra.mxu0 0.0
    %3103 = vmatprep.subr.mxu0 0.0
    %3104 = vmatpush1.msra.mxu0 0.0
    %3105 = vmatprep.subr.mxu0 0.0
    %3106 = vmatpush1.msra.mxu0 0.0
    %3107 = vmatprep.subr.mxu0 0.0
    %3108 = vmatpush1.msra.mxu0 0.0
    %3109 = vmatprep.subr.mxu0 0.0
    %3110 = vmatpush1.msra.mxu0 0.0
    %3111 = vmatprep.subr.mxu0 0.0
    %3112 = vmatpush1.msra.mxu0 0.0
    %3113 = vmatprep.subr.mxu0 0.0
    %3114 = vmatpush1.msra.mxu0 0.0
    %3115 = vmatprep.subr.mxu0 0.0
    %3116 = vmatpush1.msra.mxu0 0.0
    %3117 = vmatprep.subr.mxu0 0.0
    %3118 = vmatpush1.msra.mxu0 0.0
    %3119 = vmatprep.subr.mxu0 0.0
    %3120 = vmatpush1.msra.mxu0 0.0
    %3121 = vmatprep.subr.mxu0 0.0
    %3122 = vmatpush1.msra.mxu0 0.0
    %3123 = vmatprep.subr.mxu0 0.0
    %3124 = vmatpush1.msra.mxu0 0.0
    %3125 = vmatprep.subr.mxu0 0.0
    %3126 = vmatpush1.msra.mxu0 0.0
    %3127 = vmatprep.subr.mxu0 0.0
    %3128 = vmatpush1.msra.mxu0 0.0
    %3129 = vmatprep.subr.mxu0 0.0
    %3130 = vmatpush1.msra.mxu0 0.0
    %3131 = vmatprep.subr.mxu0 0.0
    %3132 = vmatpush1.msra.mxu0 0.0
    %3133 = vmatprep.subr.mxu0 0.0
    %3134 = vmatpush1.msra.mxu0 0.0
    %3135 = vmatprep.subr.mxu0 0.0
    %3136 = vmatpush1.msra.mxu0 0.0
    %3137 = vmatprep.subr.mxu0 0.0
    %3138 = vmatpush1.msra.mxu0 0.0
    %3139 = vmatprep.mubr.f32.mxu0 0.0
    %3140 = vmatmul.mubr.f32.gmra.mrb[0].mxu0 %v3073
    %v3141 = vpop.f32.mrb[0].mxu0
    %v3142 = vadd.f32 0.0, %v3141
    %v3143 = vpop.f32.mrb[0].mxu0
    %3144 = vdwg.mxu0
    %3146 = vrot.lane.b32.xlu0 %v3142, 64
    %v3147 = vpop.permute.xlu0 %3146
    %v3149 = vadd.f32 %v3058, %v3147
    %v3150 = vtanh.pop %v3149
    %v3151 = vsub.f32 1.0, %v3064
    %v3152 = vmul.f32 %v2724, %v3151
    %v3153 = vmul.f32 %v3150, %v3067
    %3155 = vrot.lane.b32.xlu0 %v3153, 96
    %v3156 = vpop.permute.xlu0 %3155
    %v3158 = vadd.f32 %v3152, %v3156
    %3159 = vmatprep.subr.mxu0 0.0
    %3160 = vmatpush1.msra.mxu0 %v31
    %3161 = vmatprep.subr.mxu0 0.0
    %3162 = vmatpush1.msra.mxu0 %v32
    %3163 = vmatprep.subr.mxu0 0.0
    %3164 = vmatpush1.msra.mxu0 %v33
    %3165 = vmatprep.subr.mxu0 0.0
    %3166 = vmatpush1.msra.mxu0 %v34
    %3167 = vmatprep.subr.mxu0 0.0
    %3168 = vmatpush1.msra.mxu0 0.0
    %3169 = vmatprep.subr.mxu0 0.0
    %3170 = vmatpush1.msra.mxu0 0.0
    %3171 = vmatprep.subr.mxu0 0.0
    %3172 = vmatpush1.msra.mxu0 0.0
    %3173 = vmatprep.subr.mxu0 0.0
    %3174 = vmatpush1.msra.mxu0 0.0
    %3175 = vmatprep.subr.mxu0 0.0
    %3176 = vmatpush1.msra.mxu0 0.0
    %3177 = vmatprep.subr.mxu0 0.0
    %3178 = vmatpush1.msra.mxu0 0.0
    %3179 = vmatprep.subr.mxu0 0.0
    %3180 = vmatpush1.msra.mxu0 0.0
    %3181 = vmatprep.subr.mxu0 0.0
    %3182 = vmatpush1.msra.mxu0 0.0
    %3183 = vmatprep.subr.mxu0 0.0
    %3184 = vmatpush1.msra.mxu0 0.0
    %3185 = vmatprep.subr.mxu0 0.0
    %3186 = vmatpush1.msra.mxu0 0.0
    %3187 = vmatprep.subr.mxu0 0.0
    %3188 = vmatpush1.msra.mxu0 0.0
    %3189 = vmatprep.subr.mxu0 0.0
    %3190 = vmatpush1.msra.mxu0 0.0
    %3191 = vmatprep.subr.mxu0 0.0
    %3192 = vmatpush1.msra.mxu0 0.0
    %3193 = vmatprep.subr.mxu0 0.0
    %3194 = vmatpush1.msra.mxu0 0.0
    %3195 = vmatprep.subr.mxu0 0.0
    %3196 = vmatpush1.msra.mxu0 0.0
    %3197 = vmatprep.subr.mxu0 0.0
    %3198 = vmatpush1.msra.mxu0 0.0
    %3199 = vmatprep.subr.mxu0 0.0
    %3200 = vmatpush1.msra.mxu0 0.0
    %3201 = vmatprep.subr.mxu0 0.0
    %3202 = vmatpush1.msra.mxu0 0.0
    %3203 = vmatprep.subr.mxu0 0.0
    %3204 = vmatpush1.msra.mxu0 0.0
    %3205 = vmatprep.subr.mxu0 0.0
    %3206 = vmatpush1.msra.mxu0 0.0
    %3207 = vmatprep.subr.mxu0 0.0
    %3208 = vmatpush1.msra.mxu0 0.0
    %3209 = vmatprep.subr.mxu0 0.0
    %3210 = vmatpush1.msra.mxu0 0.0
    %3211 = vmatprep.subr.mxu0 0.0
    %3212 = vmatpush1.msra.mxu0 0.0
    %3213 = vmatprep.subr.mxu0 0.0
    %3214 = vmatpush1.msra.mxu0 0.0
    %3215 = vmatprep.subr.mxu0 0.0
    %3216 = vmatpush1.msra.mxu0 0.0
    %3217 = vmatprep.subr.mxu0 0.0
    %3218 = vmatpush1.msra.mxu0 0.0
    %3219 = vmatprep.subr.mxu0 0.0
    %3220 = vmatpush1.msra.mxu0 0.0
    %3221 = vmatprep.subr.mxu0 0.0
    %3222 = vmatpush1.msra.mxu0 0.0
    %3223 = vmatprep.mubr.f32.mxu0 0.0
    %3224 = vmatmul.mubr.f32.gmra.mrb[0].mxu0 %v2911
    %v3225 = vpop.f32.mrb[0].mxu0
    %v3226 = vadd.f32 0.0, %v3225
    %v3227 = vpop.f32.mrb[0].mxu0
    %3228 = vdwg.mxu0
    %v3230 = vrot.slane %v3226, 2
    %v3232 = vadd.f32 %v147, %v3230
    %v3233 = vxor.u32 %v3232, 2147483648
    %v3234 = vmul.f32 %v3233, 1.442695
    %v3235 = vpow.pop %v3234
    %v3236 = vadd.f32 %v3235, 1.0
    %v3237 = vrcp.pop %v3236
    %v3238 = vmul.f32 1.0, %v3237
    %v3240 = vrot.slane %v3238, 6
    %3241 = vrot.lane.b32.xlu0 %v3240, 32
    %v3242 = vpop.permute.xlu0 %3241
    %v3244 = vmul.f32 %v2907, %v3242
    %3246 = vrot.lane.b32.xlu0 %v3244, 96
    %v3247 = vpop.permute.xlu0 %3246
    %v3248 = vsel %vm150, %v3247, 0
    %3250 = vmatprep.subr.mxu0 0.0
    %3251 = vmatpush1.msra.mxu0 %v39
    %3252 = vmatprep.subr.mxu0 0.0
    %3253 = vmatpush1.msra.mxu0 %v40
    %3254 = vmatprep.subr.mxu0 0.0
    %3255 = vmatpush1.msra.mxu0 %v41
    %3256 = vmatprep.subr.mxu0 0.0
    %3257 = vmatpush1.msra.mxu0 %v42
    %3258 = vmatprep.subr.mxu0 0.0
    %3259 = vmatpush1.msra.mxu0 0.0
    %3260 = vmatprep.subr.mxu0 0.0
    %3261 = vmatpush1.msra.mxu0 0.0
    %3262 = vmatprep.subr.mxu0 0.0
    %3263 = vmatpush1.msra.mxu0 0.0
    %3264 = vmatprep.subr.mxu0 0.0
    %3265 = vmatpush1.msra.mxu0 0.0
    %3266 = vmatprep.subr.mxu0 0.0
    %3267 = vmatpush1.msra.mxu0 0.0
    %3268 = vmatprep.subr.mxu0 0.0
    %3269 = vmatpush1.msra.mxu0 0.0
    %3270 = vmatprep.subr.mxu0 0.0
    %3271 = vmatpush1.msra.mxu0 0.0
    %3272 = vmatprep.subr.mxu0 0.0
    %3273 = vmatpush1.msra.mxu0 0.0
    %3274 = vmatprep.subr.mxu0 0.0
    %3275 = vmatpush1.msra.mxu0 0.0
    %3276 = vmatprep.subr.mxu0 0.0
    %3277 = vmatpush1.msra.mxu0 0.0
    %3278 = vmatprep.subr.mxu0 0.0
    %3279 = vmatpush1.msra.mxu0 0.0
    %3280 = vmatprep.subr.mxu0 0.0
    %3281 = vmatpush1.msra.mxu0 0.0
    %3282 = vmatprep.subr.mxu0 0.0
    %3283 = vmatpush1.msra.mxu0 0.0
    %3284 = vmatprep.subr.mxu0 0.0
    %3285 = vmatpush1.msra.mxu0 0.0
    %3286 = vmatprep.subr.mxu0 0.0
    %3287 = vmatpush1.msra.mxu0 0.0
    %3288 = vmatprep.subr.mxu0 0.0
    %3289 = vmatpush1.msra.mxu0 0.0
    %3290 = vmatprep.subr.mxu0 0.0
    %3291 = vmatpush1.msra.mxu0 0.0
    %3292 = vmatprep.subr.mxu0 0.0
    %3293 = vmatpush1.msra.mxu0 0.0
    %3294 = vmatprep.subr.mxu0 0.0
    %3295 = vmatpush1.msra.mxu0 0.0
    %3296 = vmatprep.subr.mxu0 0.0
    %3297 = vmatpush1.msra.mxu0 0.0
    %3298 = vmatprep.subr.mxu0 0.0
    %3299 = vmatpush1.msra.mxu0 0.0
    %3300 = vmatprep.subr.mxu0 0.0
    %3301 = vmatpush1.msra.mxu0 0.0
    %3302 = vmatprep.subr.mxu0 0.0
    %3303 = vmatpush1.msra.mxu0 0.0
    %3304 = vmatprep.subr.mxu0 0.0
    %3305 = vmatpush1.msra.mxu0 0.0
    %3306 = vmatprep.subr.mxu0 0.0
    %3307 = vmatpush1.msra.mxu0 0.0
    %3308 = vmatprep.subr.mxu0 0.0
    %3309 = vmatpush1.msra.mxu0 0.0
    %3310 = vmatprep.subr.mxu0 0.0
    %3311 = vmatpush1.msra.mxu0 0.0
    %3312 = vmatprep.subr.mxu0 0.0
    %3313 = vmatpush1.msra.mxu0 0.0
    %3314 = vmatprep.mubr.f32.mxu0 0.0
    %3315 = vmatmul.mubr.f32.gmra.mrb[0].mxu0 %v3248
    %v3316 = vpop.f32.mrb[0].mxu0
    %v3317 = vadd.f32 0.0, %v3316
    %v3318 = vpop.f32.mrb[0].mxu0
    %3319 = vdwg.mxu0
    %v3321 = vrot.slane %v3317, 2
    %3322 = vrot.lane.b32.xlu0 %v3321, 64
    %v3323 = vpop.permute.xlu0 %3322
    %v3325 = vadd.f32 %v3232, %v3323
    %v3326 = vtanh.pop %v3325
    %v3327 = vsub.f32 1.0, %v3238
    %v3329 = vrot.slane %v3327, 6
    %v3331 = vmul.f32 %v2907, %v3329
    %3332 = vrot.lane.b32.xlu0 %v3238, 32
    %v3333 = vpop.permute.xlu0 %3332
    %v3335 = vmul.f32 %v3326, %v3333
    %v3337 = vrot.slane %v3335, 6
    %3338 = vrot.lane.b32.xlu0 %v3337, 96
    %v3339 = vpop.permute.xlu0 %3338
    %v3341 = vadd.f32 %v3331, %v3339
    %3343 = vrot.lane.b32.xlu0 %v3341, 96
    %v3344 = vpop.permute.xlu0 %3343
    %v3345 = vsel %vm150, %v3344, 0
    %3347 = vmatprep.subr.mxu0 0.0
    %3348 = vmatpush1.msra.mxu0 %v27
    %3349 = vmatprep.subr.mxu0 0.0
    %3350 = vmatpush1.msra.mxu0 %v28
    %3351 = vmatprep.subr.mxu0 0.0
    %3352 = vmatpush1.msra.mxu0 %v29
    %3353 = vmatprep.subr.mxu0 0.0
    %3354 = vmatpush1.msra.mxu0 %v30
    %3355 = vmatprep.subr.mxu0 0.0
    %3356 = vmatpush1.msra.mxu0 0.0
    %3357 = vmatprep.subr.mxu0 0.0
    %3358 = vmatpush1.msra.mxu0 0.0
    %3359 = vmatprep.subr.mxu0 0.0
    %3360 = vmatpush1.msra.mxu0 0.0
    %3361 = vmatprep.subr.mxu0 0.0
    %3362 = vmatpush1.msra.mxu0 0.0
    %3363 = vmatprep.subr.mxu0 0.0
    %3364 = vmatpush1.msra.mxu0 0.0
    %3365 = vmatprep.subr.mxu0 0.0
    %3366 = vmatpush1.msra.mxu0 0.0
    %3367 = vmatprep.subr.mxu0 0.0
    %3368 = vmatpush1.msra.mxu0 0.0
    %3369 = vmatprep.subr.mxu0 0.0
    %3370 = vmatpush1.msra.mxu0 0.0
    %3371 = vmatprep.subr.mxu0 0.0
    %3372 = vmatpush1.msra.mxu0 0.0
    %3373 = vmatprep.subr.mxu0 0.0
    %3374 = vmatpush1.msra.mxu0 0.0
    %3375 = vmatprep.subr.mxu0 0.0
    %3376 = vmatpush1.msra.mxu0 0.0
    %3377 = vmatprep.subr.mxu0 0.0
    %3378 = vmatpush1.msra.mxu0 0.0
    %3379 = vmatprep.subr.mxu0 0.0
    %3380 = vmatpush1.msra.mxu0 0.0
    %3381 = vmatprep.subr.mxu0 0.0
    %3382 = vmatpush1.msra.mxu0 0.0
    %3383 = vmatprep.subr.mxu0 0.0
    %3384 = vmatpush1.msra.mxu0 0.0
    %3385 = vmatprep.subr.mxu0 0.0
    %3386 = vmatpush1.msra.mxu0 0.0
    %3387 = vmatprep.subr.mxu0 0.0
    %3388 = vmatpush1.msra.mxu0 0.0
    %3389 = vmatprep.subr.mxu0 0.0
    %3390 = vmatpush1.msra.mxu0 0.0
    %3391 = vmatprep.subr.mxu0 0.0
    %3392 = vmatpush1.msra.mxu0 0.0
    %3393 = vmatprep.subr.mxu0 0.0
    %3394 = vmatpush1.msra.mxu0 0.0
    %3395 = vmatprep.subr.mxu0 0.0
    %3396 = vmatpush1.msra.mxu0 0.0
    %3397 = vmatprep.subr.mxu0 0.0
    %3398 = vmatpush1.msra.mxu0 0.0
    %3399 = vmatprep.subr.mxu0 0.0
    %3400 = vmatpush1.msra.mxu0 0.0
    %3401 = vmatprep.subr.mxu0 0.0
    %3402 = vmatpush1.msra.mxu0 0.0
    %3403 = vmatprep.subr.mxu0 0.0
    %3404 = vmatpush1.msra.mxu0 0.0
    %3405 = vmatprep.subr.mxu0 0.0
    %3406 = vmatpush1.msra.mxu0 0.0
    %3407 = vmatprep.subr.mxu0 0.0
    %3408 = vmatpush1.msra.mxu0 0.0
    %3409 = vmatprep.subr.mxu0 0.0
    %3410 = vmatpush1.msra.mxu0 0.0
    %3411 = vmatprep.mubr.f32.mxu0 0.0
    %3412 = vmatmul.mubr.f32.gmra.mrb[0].mxu0 %v3345
    %v3413 = vpop.f32.mrb[0].mxu0
    %v3414 = vadd.f32 %v52, %v3413
    %v3415 = vpop.f32.mrb[0].mxu0
    %3416 = vdwg.mxu0
    %3418 = vrot.lane.b32.xlu0 %v3158, 96
    %v3419 = vpop.permute.xlu0 %3418
    %v3420 = vsel %vm150, %v3419, 0
    %3422 = vmatprep.subr.mxu0 0.0
    %3423 = vmatpush1.msra.mxu0 %v35
    %3424 = vmatprep.subr.mxu0 0.0
    %3425 = vmatpush1.msra.mxu0 %v36
    %3426 = vmatprep.subr.mxu0 0.0
    %3427 = vmatpush1.msra.mxu0 %v37
    %3428 = vmatprep.subr.mxu0 0.0
    %3429 = vmatpush1.msra.mxu0 %v38
    %3430 = vmatprep.subr.mxu0 0.0
    %3431 = vmatpush1.msra.mxu0 0.0
    %3432 = vmatprep.subr.mxu0 0.0
    %3433 = vmatpush1.msra.mxu0 0.0
    %3434 = vmatprep.subr.mxu0 0.0
    %3435 = vmatpush1.msra.mxu0 0.0
    %3436 = vmatprep.subr.mxu0 0.0
    %3437 = vmatpush1.msra.mxu0 0.0
    %3438 = vmatprep.subr.mxu0 0.0
    %3439 = vmatpush1.msra.mxu0 0.0
    %3440 = vmatprep.subr.mxu0 0.0
    %3441 = vmatpush1.msra.mxu0 0.0
    %3442 = vmatprep.subr.mxu0 0.0
    %3443 = vmatpush1.msra.mxu0 0.0
    %3444 = vmatprep.subr.mxu0 0.0
    %3445 = vmatpush1.msra.mxu0 0.0
    %3446 = vmatprep.subr.mxu0 0.0
    %3447 = vmatpush1.msra.mxu0 0.0
    %3448 = vmatprep.subr.mxu0 0.0
    %3449 = vmatpush1.msra.mxu0 0.0
    %3450 = vmatprep.subr.mxu0 0.0
    %3451 = vmatpush1.msra.mxu0 0.0
    %3452 = vmatprep.subr.mxu0 0.0
    %3453 = vmatpush1.msra.mxu0 0.0
    %3454 = vmatprep.subr.mxu0 0.0
    %3455 = vmatpush1.msra.mxu0 0.0
    %3456 = vmatprep.subr.mxu0 0.0
    %3457 = vmatpush1.msra.mxu0 0.0
    %3458 = vmatprep.subr.mxu0 0.0
    %3459 = vmatpush1.msra.mxu0 0.0
    %3460 = vmatprep.subr.mxu0 0.0
    %3461 = vmatpush1.msra.mxu0 0.0
    %3462 = vmatprep.subr.mxu0 0.0
    %3463 = vmatpush1.msra.mxu0 0.0
    %3464 = vmatprep.subr.mxu0 0.0
    %3465 = vmatpush1.msra.mxu0 0.0
    %3466 = vmatprep.subr.mxu0 0.0
    %3467 = vmatpush1.msra.mxu0 0.0
    %3468 = vmatprep.subr.mxu0 0.0
    %3469 = vmatpush1.msra.mxu0 0.0
    %3470 = vmatprep.subr.mxu0 0.0
    %3471 = vmatpush1.msra.mxu0 0.0
    %3472 = vmatprep.subr.mxu0 0.0
    %3473 = vmatpush1.msra.mxu0 0.0
    %3474 = vmatprep.subr.mxu0 0.0
    %3475 = vmatpush1.msra.mxu0 0.0
    %3476 = vmatprep.subr.mxu0 0.0
    %3477 = vmatpush1.msra.mxu0 0.0
    %3478 = vmatprep.subr.mxu0 0.0
    %3479 = vmatpush1.msra.mxu0 0.0
    %3480 = vmatprep.subr.mxu0 0.0
    %3481 = vmatpush1.msra.mxu0 0.0
    %3482 = vmatprep.subr.mxu0 0.0
    %3483 = vmatpush1.msra.mxu0 0.0
    %3484 = vmatprep.subr.mxu0 0.0
    %3485 = vmatpush1.msra.mxu0 0.0
    %3486 = vmatprep.mubr.f32.mxu0 0.0
    %3487 = vmatmul.mubr.f32.gmra.mrb[0].mxu0 %v3420
    %v3488 = vpop.f32.mrb[0].mxu0
    %v3489 = vadd.f32 0.0, %v3488
    %v3490 = vpop.f32.mrb[0].mxu0
    %3491 = vdwg.mxu0
    %v3492 = vadd.f32 %v3414, %v3489
    %v3493 = vxor.u32 %v3492, 2147483648
    %v3494 = vmul.f32 %v3493, 1.442695
    %v3495 = vpow.pop %v3494
    %v3496 = vadd.f32 %v3495, 1.0
    %v3497 = vrcp.pop %v3496
    %v3498 = vmul.f32 1.0, %v3497
    %3500 = vrot.lane.b32.xlu0 %v3498, 32
    %v3501 = vpop.permute.xlu0 %3500
    %v3503 = vmul.f32 %v3158, %v3501
    %3505 = vrot.lane.b32.xlu0 %v3503, 96
    %v3506 = vpop.permute.xlu0 %3505
    %v3507 = vsel %vm150, %v3506, 0
    %3509 = vmatprep.subr.mxu0 0.0
    %3510 = vmatpush1.msra.mxu0 %v43
    %3511 = vmatprep.subr.mxu0 0.0
    %3512 = vmatpush1.msra.mxu0 %v44
    %3513 = vmatprep.subr.mxu0 0.0
    %3514 = vmatpush1.msra.mxu0 %v45
    %3515 = vmatprep.subr.mxu0 0.0
    %3516 = vmatpush1.msra.mxu0 %v46
    %3517 = vmatprep.subr.mxu0 0.0
    %3518 = vmatpush1.msra.mxu0 0.0
    %3519 = vmatprep.subr.mxu0 0.0
    %3520 = vmatpush1.msra.mxu0 0.0
    %3521 = vmatprep.subr.mxu0 0.0
    %3522 = vmatpush1.msra.mxu0 0.0
    %3523 = vmatprep.subr.mxu0 0.0
    %3524 = vmatpush1.msra.mxu0 0.0
    %3525 = vmatprep.subr.mxu0 0.0
    %3526 = vmatpush1.msra.mxu0 0.0
    %3527 = vmatprep.subr.mxu0 0.0
    %3528 = vmatpush1.msra.mxu0 0.0
    %3529 = vmatprep.subr.mxu0 0.0
    %3530 = vmatpush1.msra.mxu0 0.0
    %3531 = vmatprep.subr.mxu0 0.0
    %3532 = vmatpush1.msra.mxu0 0.0
    %3533 = vmatprep.subr.mxu0 0.0
    %3534 = vmatpush1.msra.mxu0 0.0
    %3535 = vmatprep.subr.mxu0 0.0
    %3536 = vmatpush1.msra.mxu0 0.0
    %3537 = vmatprep.subr.mxu0 0.0
    %3538 = vmatpush1.msra.mxu0 0.0
    %3539 = vmatprep.subr.mxu0 0.0
    %3540 = vmatpush1.msra.mxu0 0.0
    %3541 = vmatprep.subr.mxu0 0.0
    %3542 = vmatpush1.msra.mxu0 0.0
    %3543 = vmatprep.subr.mxu0 0.0
    %3544 = vmatpush1.msra.mxu0 0.0
    %3545 = vmatprep.subr.mxu0 0.0
    %3546 = vmatpush1.msra.mxu0 0.0
    %3547 = vmatprep.subr.mxu0 0.0
    %3548 = vmatpush1.msra.mxu0 0.0
    %3549 = vmatprep.subr.mxu0 0.0
    %3550 = vmatpush1.msra.mxu0 0.0
    %3551 = vmatprep.subr.mxu0 0.0
    %3552 = vmatpush1.msra.mxu0 0.0
    %3553 = vmatprep.subr.mxu0 0.0
    %3554 = vmatpush1.msra.mxu0 0.0
    %3555 = vmatprep.subr.mxu0 0.0
    %3556 = vmatpush1.msra.mxu0 0.0
    %3557 = vmatprep.subr.mxu0 0.0
    %3558 = vmatpush1.msra.mxu0 0.0
    %3559 = vmatprep.subr.mxu0 0.0
    %3560 = vmatpush1.msra.mxu0 0.0
    %3561 = vmatprep.subr.mxu0 0.0
    %3562 = vmatpush1.msra.mxu0 0.0
    %3563 = vmatprep.subr.mxu0 0.0
    %3564 = vmatpush1.msra.mxu0 0.0
    %3565 = vmatprep.subr.mxu0 0.0
    %3566 = vmatpush1.msra.mxu0 0.0
    %3567 = vmatprep.subr.mxu0 0.0
    %3568 = vmatpush1.msra.mxu0 0.0
    %3569 = vmatprep.subr.mxu0 0.0
    %3570 = vmatpush1.msra.mxu0 0.0
    %3571 = vmatprep.subr.mxu0 0.0
    %3572 = vmatpush1.msra.mxu0 0.0
    %3573 = vmatprep.mubr.f32.mxu0 0.0
    %3574 = vmatmul.mubr.f32.gmra.mrb[0].mxu0 %v3507
    %v3575 = vpop.f32.mrb[0].mxu0
    %v3576 = vadd.f32 0.0, %v3575
    %v3577 = vpop.f32.mrb[0].mxu0
    %3578 = vdwg.mxu0
    %3580 = vrot.lane.b32.xlu0 %v3576, 64
    %v3581 = vpop.permute.xlu0 %3580
    %v3583 = vadd.f32 %v3492, %v3581
    %v3584 = vtanh.pop %v3583
    %v3585 = vsub.f32 1.0, %v3498
    %v3586 = vmul.f32 %v3158, %v3585
    %v3587 = vmul.f32 %v3584, %v3501
    %3589 = vrot.lane.b32.xlu0 %v3587, 96
    %v3590 = vpop.permute.xlu0 %3589
    %v3592 = vadd.f32 %v3586, %v3590
    %v3593 = vlaneseq
    %v3594 = vshrl.u32 %v3593, 7
    %v3595 = vsub.s32 0, %v3594
    %v3596 = vrot.slane %v57, %v3595
    %3598 = vrot.lane.b32.xlu0 %v3592, 96
    %v3599 = vpop.permute.xlu0 %3598
    %v3600 = vsel %vm150, %v3599, 0
    %3602 = vmatprep.subr.mxu0 0.0
    %3603 = vmatpush1.msra.mxu0 %v53
    %3604 = vmatprep.subr.mxu0 0.0
    %3605 = vmatpush1.msra.mxu0 %v54
    %3606 = vmatprep.subr.mxu0 0.0
    %3607 = vmatpush1.msra.mxu0 %v55
    %3608 = vmatprep.subr.mxu0 0.0
    %3609 = vmatpush1.msra.mxu0 %v56
    %3610 = vmatprep.subr.mxu0 0.0
    %3611 = vmatpush1.msra.mxu0 0.0
    %3612 = vmatprep.subr.mxu0 0.0
    %3613 = vmatpush1.msra.mxu0 0.0
    %3614 = vmatprep.subr.mxu0 0.0
    %3615 = vmatpush1.msra.mxu0 0.0
    %3616 = vmatprep.subr.mxu0 0.0
    %3617 = vmatpush1.msra.mxu0 0.0
    %3618 = vmatprep.subr.mxu0 0.0
    %3619 = vmatpush1.msra.mxu0 0.0
    %3620 = vmatprep.subr.mxu0 0.0
    %3621 = vmatpush1.msra.mxu0 0.0
    %3622 = vmatprep.subr.mxu0 0.0
    %3623 = vmatpush1.msra.mxu0 0.0
    %3624 = vmatprep.subr.mxu0 0.0
    %3625 = vmatpush1.msra.mxu0 0.0
    %3626 = vmatprep.subr.mxu0 0.0
    %3627 = vmatpush1.msra.mxu0 0.0
    %3628 = vmatprep.subr.mxu0 0.0
    %3629 = vmatpush1.msra.mxu0 0.0
    %3630 = vmatprep.subr.mxu0 0.0
    %3631 = vmatpush1.msra.mxu0 0.0
    %3632 = vmatprep.subr.mxu0 0.0
    %3633 = vmatpush1.msra.mxu0 0.0
    %3634 = vmatprep.subr.mxu0 0.0
    %3635 = vmatpush1.msra.mxu0 0.0
    %3636 = vmatprep.subr.mxu0 0.0
    %3637 = vmatpush1.msra.mxu0 0.0
    %3638 = vmatprep.subr.mxu0 0.0
    %3639 = vmatpush1.msra.mxu0 0.0
    %3640 = vmatprep.subr.mxu0 0.0
    %3641 = vmatpush1.msra.mxu0 0.0
    %3642 = vmatprep.subr.mxu0 0.0
    %3643 = vmatpush1.msra.mxu0 0.0
    %3644 = vmatprep.subr.mxu0 0.0
    %3645 = vmatpush1.msra.mxu0 0.0
    %3646 = vmatprep.subr.mxu0 0.0
    %3647 = vmatpush1.msra.mxu0 0.0
    %3648 = vmatprep.subr.mxu0 0.0
    %3649 = vmatpush1.msra.mxu0 0.0
    %3650 = vmatprep.subr.mxu0 0.0
    %3651 = vmatpush1.msra.mxu0 0.0
    %3652 = vmatprep.subr.mxu0 0.0
    %3653 = vmatpush1.msra.mxu0 0.0
    %3654 = vmatprep.subr.mxu0 0.0
    %3655 = vmatpush1.msra.mxu0 0.0
    %3656 = vmatprep.subr.mxu0 0.0
    %3657 = vmatpush1.msra.mxu0 0.0
    %3658 = vmatprep.subr.mxu0 0.0
    %3659 = vmatpush1.msra.mxu0 0.0
    %3660 = vmatprep.subr.mxu0 0.0
    %3661 = vmatpush1.msra.mxu0 0.0
    %3662 = vmatprep.subr.mxu0 0.0
    %3663 = vmatpush1.msra.mxu0 0.0
    %3664 = vmatprep.subr.mxu0 0.0
    %3665 = vmatpush1.msra.mxu0 0.0
    %3666 = vmatprep.mubr.f32.mxu0 0.0
    %3667 = vmatmul.mubr.f32.gmra.mrb[0].mxu0 %v3600
    %v3668 = vpop.f32.mrb[0].mxu0
    %v3669 = vadd.f32 %v3596, %v3668
    %v3670 = vpop.f32.mrb[0].mxu0
    %3671 = vdwg.mxu0
    %3672 = vst [vmem:[#allocation5] sm:$0x3] %v3669
    // Predicated region
    $region14: #{tpu_custom_call.1} parent=1 // pred_check
      _
    $region15: #{tpu_custom_call.1} parent=1 // pred_check_branch
      %3674 = sbr.rel (0) target = $region17
    $region16: #{tpu_custom_call.1} parent=1 // pred_region
      %s3676 = ssub.s32 32, 32
      %3677 = vsyncadd [#allocation4], %s3676
      %s3679 = sshll.u32 [#allocation5], 4
      %s3680 = int_to_ptr.vmem [resolvable:$true] %s3679
      %3682 = dma.vmem_to_hbm [thread:$0]  %s3680, 32, %s2, [#allocation4]
    $region17: #{tpu_custom_call.1} parent=1 // pred_fallthru
      _
    // Predicated region
    $region18: #{tpu_custom_call.1} parent=1 // pred_check
      _
    $region19: #{tpu_custom_call.1} parent=1 // pred_check_branch
      %3684 = sbr.rel (0) target = $region21
    $region20: #{tpu_custom_call.1} parent=1 // pred_region
      %3685 = dma.done [#allocation4], 32
    $region21: #{tpu_custom_call.1} parent=1 // pred_fallthru
      _
    %3686 = vsyncpa [#allocation3], 1
    %3687 = vsyncpa [#allocation4], 1

</llo_original>
